<compile_context>
chip_gen: v7x
topology: tpu7x:2x2x1
jax: 0.10.0
libtpu: 0.0.40
codegen_flags: <defaults>
</compile_context>

<pallas_src>
import functools
import math

import jax
import jax.numpy as jnp
from jax import lax
from jax.experimental import pallas as pl
from jax.experimental.pallas import tpu as pltpu


# ---------------------------------------------------------------------------
# In-kernel helpers
# ---------------------------------------------------------------------------
def _mm(a, w):
    """MXU matmul with f32 accumulation.  If the weights were pre-cast to
    bf16 host-side, cast the activations to match (valid on v5e/v6e/v7x)."""
    if w.dtype == jnp.bfloat16:
        a = a.astype(jnp.bfloat16)
    return jnp.dot(a, w, preferred_element_type=jnp.float32)


_ERF_P = 0.3275911
_ERF_A = (0.254829592, -0.284496736, 1.421413741, -1.453152027, 1.061405429)
_INV_SQRT2 = 0.7071067811865476


def _gelu_exact(x):
    """Exact (erf) GELU matching PyTorch nn.GELU(), built only from exp / VPU
    ops (Abramowitz-Stegun 7.1.26 rational erf approx, |abs err| <= 1.5e-7)."""
    z = x * _INV_SQRT2
    a = jnp.abs(z)
    t = 1.0 / (1.0 + _ERF_P * a)
    poly = t * (_ERF_A[0] + t * (_ERF_A[1] + t * (_ERF_A[2]
               + t * (_ERF_A[3] + t * _ERF_A[4]))))
    erf_abs = 1.0 - poly * jnp.exp(-a * a)
    erf_z = jnp.where(z < 0.0, -erf_abs, erf_abs)
    return 0.5 * x * (1.0 + erf_z)


def _layer_norm(x, gamma, beta, eps=1e-5):
    """Plain LayerNorm over the (natural-width) last axis, f32 statistics."""
    mu = jnp.mean(x, axis=-1, keepdims=True)
    c = x - mu
    var = jnp.mean(c * c, axis=-1, keepdims=True)
    return c * lax.rsqrt(var + eps) * gamma + beta


# ---------------------------------------------------------------------------
# Fused kernel
# ---------------------------------------------------------------------------
def _lime_kernel(edge_ref, x_ref, enc_ref,
                 w1_ref, b1_ref, w2_ref, b2_ref, w3_ref, b3_ref,
                 gh_ref, bh_ref, ge_ref, be_ref,
                 wq_ref, bq_ref, wk_ref, bk_ref, wv_ref, bv_ref,
                 wo_ref, bo_ref,
                 out_ref, attn_ref,
                 pad_scr, q_scr, k_scr, v_scr, o_scr,
                 *, seq, width, tb, margin):
    rows = tb * seq
    d = out_ref.shape[-1]
    f32 = jnp.float32

    # ---- conv1: 1x1 conv (+folded BN) + GELU -> padded VMEM scratch --------
    y1 = _gelu_exact(_mm(x_ref[...], w1_ref[...]) + b1_ref[...])
    pad_scr[pl.ds(0, margin), :] = jnp.zeros((margin, d), f32)
    pad_scr[pl.ds(margin + rows, margin), :] = jnp.zeros((margin, d), f32)
    pad_scr[pl.ds(margin, rows), :] = y1

    # ---- per-row "neighbour is inside the image" bits (precomputed host-side)
    eb = edge_ref[...]                       # (rows, 1) int32
    has_l = (eb & 1) > 0                     # j-1 valid
    has_r = (eb & 2) > 0                     # j+1 valid
    has_t = (eb & 4) > 0                     # i-1 valid
    has_b = (eb & 8) > 0                     # i+1 valid

    def shifted(s):                          # y1[r + s] for in-range rows
        return pad_scr[pl.ds(margin + s, rows), :]

    # ---- conv2: 3x3 conv, replicate padding, as 9 shifted matmuls ----------
    acc = None
    tap_idx = 0
    for dy in (-1, 0, 1):
        yv = has_t if dy < 0 else has_b
        for dx in (-1, 0, 1):
            xv = has_l if dx < 0 else has_r
            if dy == 0 and dx == 0:
                tap = shifted(0)
            elif dy == 0:
                tap = jnp.where(xv, shifted(dx), shifted(0))
            elif dx == 0:
                tap = jnp.where(yv, shifted(dy * width), shifted(0))
            else:
                tap = jnp.where(
                    yv,
                    jnp.where(xv, shifted(dy * width + dx), shifted(dy * width)),
                    jnp.where(xv, shifted(dx), shifted(0)))
            contrib = _mm(tap, w2_ref[tap_idx])
            acc = contrib if acc is None else acc + contrib
            tap_idx += 1
    h = _gelu_exact(acc + b2_ref[...])

    # ---- conv3: 1x1 conv (+folded BN) + LimeConvBlock residual -------------
    hidden = _mm(h, w3_ref[...]) + b3_ref[...] + x_ref[...]
    pad_scr[pl.ds(margin, rows), :] = hidden          # stash for final residual

    # ---- cross attention ----------------------------------------------------
    xn = _layer_norm(hidden, gh_ref[...], bh_ref[...])
    en = _layer_norm(enc_ref[...], ge_ref[...], be_ref[...])
    q_scr[...] = _mm(xn, wq_ref[...]) + bq_ref[...]   # sqrt(1/S) pre-folded
    k_scr[...] = _mm(en, wk_ref[...]) + bk_ref[...]
    v_scr[...] = _mm(en, wv_ref[...]) + bv_ref[...]

    def attn_body(b, carry):
        r0 = b * seq
        kb = k_scr[pl.ds(r0, seq), :]
        qb = q_scr[pl.ds(r0, seq), :]
        # attn = k^T q: contract the seq axis directly (no XLU transpose).
        a = lax.dot_general(kb, qb, (((0,), (0,)), ((), ())),
                            preferred_element_type=jnp.float32)   # (D, D)
        m = jnp.max(a, axis=0, keepdims=True)
        p = jnp.exp(a - m)
        a_sm = p * pl.reciprocal(jnp.sum(p, axis=0, keepdims=True), approx=True)
        attn_ref[b] = a_sm                                         # softmax(dim=-2)
        # TODO(synk): attn_drop / drop are nn.Dropout -> identity in eval mode.
        o_scr[pl.ds(r0, seq), :] = jnp.dot(v_scr[pl.ds(r0, seq), :], a_sm,
                                           preferred_element_type=jnp.float32)
        return carry

    lax.fori_loop(0, tb, attn_body, 0, unroll=True)

    out_ref[...] = (_mm(o_scr[...], wo_ref[...]) + bo_ref[...]
                    + pad_scr[pl.ds(margin, rows), :])             # + hidden


# ---------------------------------------------------------------------------
# Host-side wrapper
# ---------------------------------------------------------------------------
def _round_up(x, m):
    return (x + m - 1) // m * m


def _vmem_limit_bytes():
    """~3/4 of physical VMEM (48 MiB on v7x, 96 MiB on v5e/v6e)."""
    try:
        cap = pltpu.get_tpu_info().vmem_capacity_bytes
    except Exception:                      # conservative fallback (v7x-safe)
        cap = 64 * 1024 * 1024
    return int(cap * 3 // 4)


def _estimate_vmem(rows, tb, d, e, margin, w_bytes):
    f = 4
    io = 2 * rows * (d + e + 1) * f               # x, enc, edge   (double-buffered)
    io += 2 * (rows * d + tb * d * d) * f         # out, attn      (double-buffered)
    wts = (12 * d * d + 2 * e * d) * w_bytes      # w1, w2(9), w3, wq, wo, wk, wv
    wts += (8 * d + 2 * e) * f                    # biases / LN params
    scr = ((rows + 2 * margin) + 4 * rows) * d * f
    return io + wts + scr


def _choose_tb(batch, seq, d, e, margin, w_bytes, vmem_budget, target_rows=512):
    """Batch-tile size: fill the 256-wide MXU (target ~512 rows/step) while
    fitting the fused VMEM footprint, requiring batch % tb == 0 and keeping
    >= 2 grid steps (two v7x TensorCores) when the batch allows it."""
    tb = min(batch, max(1, -(-target_rows // seq)))
    while tb > 1 and (batch % tb != 0 or batch // tb < 2 or
                      _estimate_vmem(tb * seq, tb, d, e, margin, w_bytes)
                      > vmem_budget):
        tb -= 1
    return tb


def lime_layer(hidden_nchw, enc, params, *, use_bf16=False):
    """Forward pass of LimeLayer (eval mode).  Returns (hidden_out NCHW, attn)."""
    B, C, H, W = hidden_nchw.shape
    S = H * W
    Be, Se, E = enc.shape
    assert Be == B and Se == S
    D = C

    f32 = jnp.float32
    w_dtype = jnp.bfloat16 if use_bf16 else f32     # MXU weight operand dtype
    margin = _round_up(W + 1, 8)
    vmem_limit = _vmem_limit_bytes()
    TB = _choose_tb(B, S, D, E, margin, 2 if use_bf16 else 4,
                    int(vmem_limit * 0.6))
    rows = TB * S
    assert rows % 8 == 0, "TB * H * W must be a multiple of 8 (sublane tiling)"
    grid = (B // TB,)

    eps_bn = 1e-5

    # ---- fold eval-mode BatchNorms + the sqrt(1/S) softmax scale host-side --
    def bn_fold(p):
        s = p["gamma"] * lax.rsqrt(p["var"] + eps_bn)
        return s, p["beta"] - p["mean"] * s

    def row_vec(v):
        return v.reshape(1, -1).astype(f32)

    s1, t1 = bn_fold(params["bn1"])
    s2, t2 = bn_fold(params["bn2"])
    s3, t3 = bn_fold(params["bn3"])
    w1 = (params["w1"] * s1[None, :]).astype(w_dtype)                       # (D, D)
    w2 = (params["w2"] * s2[None, None, None, :]).reshape(9, D, D).astype(w_dtype)
    w3 = (params["w3"] * s3[None, :]).astype(w_dtype)
    b1, b2, b3 = row_vec(t1), row_vec(t2), row_vec(t3)

    scale = math.sqrt(1.0 / S)
    wq = (params["wq"] * scale).astype(w_dtype)
    bq = row_vec(params["bq"] * scale)
    wk, bk = params["wk"].astype(w_dtype), row_vec(params["bk"])
    wv, bv = params["wv"].astype(w_dtype), row_vec(params["bv"])
    wo, bo = params["wo"].astype(w_dtype), row_vec(params["bo"])
    gh, bh = row_vec(params["gh"]), row_vec(params["bh"])
    ge, be = row_vec(params["ge"]), row_vec(params["be"])

    # ---- natural-width HBM slabs (no zero-padded lanes moved through HBM) ---
    x_flat = jnp.transpose(hidden_nchw, (0, 2, 3, 1)).reshape(B * S, D).astype(f32)
    enc_flat = enc.reshape(B * S, E).astype(f32)

    # per-row neighbour-validity bits for the replicate-padded 3x3 conv
    ii = jnp.repeat(jnp.arange(H, dtype=jnp.int32), W)
    jj = jnp.tile(jnp.arange(W, dtype=jnp.int32), H)
    bits = ((jj > 0).astype(jnp.int32)
            + 2 * (jj < W - 1).astype(jnp.int32)
            + 4 * (ii > 0).astype(jnp.int32)
            + 8 * (ii < H - 1).astype(jnp.int32))
    edge_bits = jnp.tile(bits, B).reshape(B * S, 1)

    cparams = pltpu.CompilerParams(
        dimension_semantics=("parallel",),
        vmem_limit_bytes=vmem_limit,
    )

    def row_spec(c):
        return pl.BlockSpec((rows, c), lambda i: (i, 0))

    def const_spec(shape):
        # grid-invariant weights: single-buffered (no wasted double-buffer VMEM)
        return pl.BlockSpec(shape, lambda i: (0,) * len(shape),
                            pipeline_mode=pl.Buffered(1))

    kernel = functools.partial(_lime_kernel, seq=S, width=W, tb=TB, margin=margin)

    out_flat, attn = pl.pallas_call(
        kernel,
        grid=grid,
        in_specs=[
            row_spec(1),                                   # edge bits
            row_spec(D),                                   # hidden (flattened NHWC)
            row_spec(E),                                   # enc
            const_spec((D, D)), const_spec((1, D)),        # w1, b1 (BN folded)
            const_spec((9, D, D)), const_spec((1, D)),     # w2 taps, b2
            const_spec((D, D)), const_spec((1, D)),        # w3, b3
            const_spec((1, D)), const_spec((1, D)),        # LN(hidden) gamma/beta
            const_spec((1, E)), const_spec((1, E)),        # LN(enc) gamma/beta
            const_spec((D, D)), const_spec((1, D)),        # wq, bq (scale folded)
            const_spec((E, D)), const_spec((1, D)),        # wk, bk
            const_spec((E, D)), const_spec((1, D)),        # wv, bv
            const_spec((D, D)), const_spec((1, D)),        # wo, bo
        ],
        out_specs=(row_spec(D),
                   pl.BlockSpec((TB, D, D), lambda i: (i, 0, 0))),
        out_shape=(jax.ShapeDtypeStruct((B * S, D), f32),
                   jax.ShapeDtypeStruct((B, D, D), f32)),
        scratch_shapes=[
            pltpu.VMEM((rows + 2 * margin, D), f32),       # y1 / hidden (padded)
            pltpu.VMEM((rows, D), f32),                    # q
            pltpu.VMEM((rows, D), f32),                    # k
            pltpu.VMEM((rows, D), f32),                    # v
            pltpu.VMEM((rows, D), f32),                    # v @ attn
        ],
        compiler_params=cparams,
    )(edge_bits, x_flat, enc_flat,
      w1, b1, w2, b2, w3, b3, gh, bh, ge, be,
      wq, bq, wk, bk, wv, bv, wo, bo)

    out = jnp.transpose(out_flat.reshape(B, S, D), (0, 2, 1)).reshape(B, C, H, W)
    return out, attn


# ---------------------------------------------------------------------------
# Pure-JAX reference (mirrors the PyTorch forward, eval mode)
# ---------------------------------------------------------------------------
def lime_layer_ref(hidden_nchw, enc, params):
    B, C, H, W = hidden_nchw.shape
    S = H * W
    eps = 1e-5

    def bn(y, p):
        return (y - p["mean"]) * lax.rsqrt(p["var"] + eps) * p["gamma"] + p["beta"]

    def ln(z, g, b):
        mu = jnp.mean(z, axis=-1, keepdims=True)
        var = jnp.mean(jnp.square(z - mu), axis=-1, keepdims=True)
        return (z - mu) * lax.rsqrt(var + eps) * g + b

    x = jnp.transpose(hidden_nchw, (0, 2, 3, 1))                       # NHWC
    y1 = jax.nn.gelu(bn(jnp.einsum("bhwc,co->bhwo", x, params["w1"]), params["bn1"]),
                     approximate=False)
    y1p = jnp.pad(y1, ((0, 0), (1, 1), (1, 1), (0, 0)), mode="edge")   # replicate pad
    y2 = lax.conv_general_dilated(
        y1p, params["w2"], window_strides=(1, 1), padding="VALID",
        dimension_numbers=("NHWC", "HWIO", "NHWC"))
    y2 = jax.nn.gelu(bn(y2, params["bn2"]), approximate=False)
    y3 = bn(jnp.einsum("bhwc,co->bhwo", y2, params["w3"]), params["bn3"])
    hidden = (y3 + x).reshape(B, S, C)

    xn = ln(hidden, params["gh"], params["bh"])
    en = ln(enc, params["ge"], params["be"])
    q = xn @ params["wq"] + params["bq"]
    k = en @ params["wk"] + params["bk"]
    v = en @ params["wv"] + params["bv"]
    attn = jnp.einsum("bsd,bse->bde", k, q) * math.sqrt(1.0 / S)
    attn = jax.nn.softmax(attn, axis=-2)
    out = jnp.einsum("bsd,bde->bse", v, attn) @ params["wo"] + params["bo"]
    out = out + hidden
    out = jnp.transpose(out, (0, 2, 1)).reshape(B, C, H, W)
    return out, attn


def init_params(key, hidden_dim, enc_dim):
    D, E = hidden_dim, enc_dim
    ks = jax.random.split(key, 14)

    def lin(k, fan_in, fan_out):
        bound = 1.0 / math.sqrt(fan_in)
        kw, kb = jax.random.split(k)
        w = jax.random.uniform(kw, (fan_in, fan_out), jnp.float32, -bound, bound)
        b = jax.random.uniform(kb, (fan_out,), jnp.float32, -bound, bound)
        return w, b

    def bn_params(k, n):
        k1, k2, k3, k4 = jax.random.split(k, 4)
        return dict(gamma=jax.random.uniform(k1, (n,), jnp.float32, 0.8, 1.2),
                    beta=0.1 * jax.random.normal(k2, (n,), jnp.float32),
                    mean=0.1 * jax.random.normal(k3, (n,), jnp.float32),
                    var=jax.random.uniform(k4, (n,), jnp.float32, 0.6, 1.4))

    w1, _ = lin(ks[0], D, D)                          # conv1 1x1, bias=False
    b2 = 1.0 / math.sqrt(9 * D)
    w2 = jax.random.uniform(ks[1], (3, 3, D, D), jnp.float32, -b2, b2)
    w3, _ = lin(ks[2], D, D)                          # conv3 1x1, bias=False
    wq, bq = lin(ks[3], D, D)
    wk, bk = lin(ks[4], E, D)
    wv, bv = lin(ks[5], E, D)
    wo, bo = lin(ks[6], D, D)
    return dict(
        w1=w1, bn1=bn_params(ks[7], D),
        w2=w2, bn2=bn_params(ks[8], D),
        w3=w3, bn3=bn_params(ks[9], D),
        gh=1.0 + 0.05 * jax.random.normal(ks[10], (D,), jnp.float32),
        bh=0.05 * jax.random.normal(ks[11], (D,), jnp.float32),
        ge=1.0 + 0.05 * jax.random.normal(ks[12], (E,), jnp.float32),
        be=0.05 * jax.random.normal(ks[13], (E,), jnp.float32),
        wq=wq, bq=bq, wk=wk, bk=bk, wv=wv, bv=bv, wo=wo, bo=bo,
    )


if __name__ == "__main__":
    HIDDEN_DIM, ENC_DIM, H, W = 32, 16, 4, 4          # S = H * W = 16

    def run_case(batch, use_bf16, rtol, atol):
        key = jax.random.PRNGKey(0)
        kh, ke, kp = jax.random.split(key, 3)
        hidden = jax.random.normal(kh, (batch, HIDDEN_DIM, H, W), jnp.float32)
        enc = jax.random.normal(ke, (batch, H * W, ENC_DIM), jnp.float32)
        params = init_params(kp, HIDDEN_DIM, ENC_DIM)

        fwd = jax.jit(functools.partial(lime_layer, use_bf16=use_bf16))
        out, attn = fwd(hidden, enc, params)
        jax.block_until_ready((out, attn))

        out_ref, attn_ref = jax.jit(lime_layer_ref)(hidden, enc, params)
        assert out.shape == (batch, HIDDEN_DIM, H, W)
        assert attn.shape == (batch, HIDDEN_DIM, HIDDEN_DIM)
        assert jnp.allclose(out, out_ref, rtol=rtol, atol=atol), \
            float(jnp.max(jnp.abs(out - out_ref)))
        assert jnp.allclose(attn, attn_ref, rtol=rtol, atol=atol), \
            float(jnp.max(jnp.abs(attn - attn_ref)))

    run_case(batch=2, use_bf16=False, rtol=2e-3, atol=2e-3)  # f32, TB=1, grid=(2,)
    run_case(batch=8, use_bf16=False, rtol=2e-3, atol=2e-3)  # batch-tiled, TB=4
    run_case(batch=2, use_bf16=True, rtol=5e-2, atol=5e-2)   # bf16-MXU fast path
    print("KERNEL_OK")
</pallas_src>

<mosaic_0001>
module attributes {stable_mosaic.version = 11 : i64} {
  func.func @_lime_kernel(%arg0: i32, %arg1: memref<16x1xi32, #tpu.memory_space<vmem>>, %arg2: memref<16x32xf32, #tpu.memory_space<vmem>>, %arg3: memref<16x16xf32, #tpu.memory_space<vmem>>, %arg4: memref<32x32xf32, #tpu.memory_space<vmem>>, %arg5: memref<1x32xf32, #tpu.memory_space<vmem>>, %arg6: memref<9x32x32xf32, #tpu.memory_space<vmem>>, %arg7: memref<1x32xf32, #tpu.memory_space<vmem>>, %arg8: memref<32x32xf32, #tpu.memory_space<vmem>>, %arg9: memref<1x32xf32, #tpu.memory_space<vmem>>, %arg10: memref<1x32xf32, #tpu.memory_space<vmem>>, %arg11: memref<1x32xf32, #tpu.memory_space<vmem>>, %arg12: memref<1x16xf32, #tpu.memory_space<vmem>>, %arg13: memref<1x16xf32, #tpu.memory_space<vmem>>, %arg14: memref<32x32xf32, #tpu.memory_space<vmem>>, %arg15: memref<1x32xf32, #tpu.memory_space<vmem>>, %arg16: memref<16x32xf32, #tpu.memory_space<vmem>>, %arg17: memref<1x32xf32, #tpu.memory_space<vmem>>, %arg18: memref<16x32xf32, #tpu.memory_space<vmem>>, %arg19: memref<1x32xf32, #tpu.memory_space<vmem>>, %arg20: memref<32x32xf32, #tpu.memory_space<vmem>>, %arg21: memref<1x32xf32, #tpu.memory_space<vmem>>, %arg22: memref<16x32xf32, #tpu.memory_space<vmem>>, %arg23: memref<1x32x32xf32, #tpu.memory_space<vmem>>, %arg24: memref<32x32xf32, #tpu.memory_space<vmem>>, %arg25: memref<16x32xf32, #tpu.memory_space<vmem>>, %arg26: memref<16x32xf32, #tpu.memory_space<vmem>>, %arg27: memref<16x32xf32, #tpu.memory_space<vmem>>, %arg28: memref<16x32xf32, #tpu.memory_space<vmem>>) attributes {dimension_semantics = [#tpu.dimension_semantics<parallel>], iteration_bounds = array<i64: 2>, scalar_prefetch = 0 : i64, scratch_operands = 5 : i64, tpu.core_type = #tpu.core_type<tc>, window_params = [{transform_indices = @transform_0, window_bounds = array<i64: 16, 1>}, {transform_indices = @transform_1, window_bounds = array<i64: 16, 32>}, {transform_indices = @transform_2, window_bounds = array<i64: 16, 16>}, {pipeline_mode = #tpu.pipeline_mode<synchronous>, transform_indices = @transform_3, window_bounds = array<i64: 32, 32>}, {pipeline_mode = #tpu.pipeline_mode<synchronous>, transform_indices = @transform_4, window_bounds = array<i64: 1, 32>}, {pipeline_mode = #tpu.pipeline_mode<synchronous>, transform_indices = @transform_5, window_bounds = array<i64: 9, 32, 32>}, {pipeline_mode = #tpu.pipeline_mode<synchronous>, transform_indices = @transform_6, window_bounds = array<i64: 1, 32>}, {pipeline_mode = #tpu.pipeline_mode<synchronous>, transform_indices = @transform_7, window_bounds = array<i64: 32, 32>}, {pipeline_mode = #tpu.pipeline_mode<synchronous>, transform_indices = @transform_8, window_bounds = array<i64: 1, 32>}, {pipeline_mode = #tpu.pipeline_mode<synchronous>, transform_indices = @transform_9, window_bounds = array<i64: 1, 32>}, {pipeline_mode = #tpu.pipeline_mode<synchronous>, transform_indices = @transform_10, window_bounds = array<i64: 1, 32>}, {pipeline_mode = #tpu.pipeline_mode<synchronous>, transform_indices = @transform_11, window_bounds = array<i64: 1, 16>}, {pipeline_mode = #tpu.pipeline_mode<synchronous>, transform_indices = @transform_12, window_bounds = array<i64: 1, 16>}, {pipeline_mode = #tpu.pipeline_mode<synchronous>, transform_indices = @transform_13, window_bounds = array<i64: 32, 32>}, {pipeline_mode = #tpu.pipeline_mode<synchronous>, transform_indices = @transform_14, window_bounds = array<i64: 1, 32>}, {pipeline_mode = #tpu.pipeline_mode<synchronous>, transform_indices = @transform_15, window_bounds = array<i64: 16, 32>}, {pipeline_mode = #tpu.pipeline_mode<synchronous>, transform_indices = @transform_16, window_bounds = array<i64: 1, 32>}, {pipeline_mode = #tpu.pipeline_mode<synchronous>, transform_indices = @transform_17, window_bounds = array<i64: 16, 32>}, {pipeline_mode = #tpu.pipeline_mode<synchronous>, transform_indices = @transform_18, window_bounds = array<i64: 1, 32>}, {pipeline_mode = #tpu.pipeline_mode<synchronous>, transform_indices = @transform_19, window_bounds = array<i64: 32, 32>}, {pipeline_mode = #tpu.pipeline_mode<synchronous>, transform_indices = @transform_20, window_bounds = array<i64: 1, 32>}, {transform_indices = @transform_21, window_bounds = array<i64: 16, 32>}, {transform_indices = @transform_22, window_bounds = array<i64: 1, 32, 32>}]} {
    %c0 = arith.constant 0 : index
    %c0_0 = arith.constant 0 : index
    %0 = vector.load %arg2[%c0, %c0_0] : memref<16x32xf32, #tpu.memory_space<vmem>>, vector<16x32xf32>
    %c0_1 = arith.constant 0 : index
    %c0_2 = arith.constant 0 : index
    %1 = vector.load %arg4[%c0_1, %c0_2] : memref<32x32xf32, #tpu.memory_space<vmem>>, vector<32x32xf32>
    %cst = arith.constant dense<0.000000e+00> : vector<16x32xf32>
    %2 = tpu.matmul %0, %1, %cst {dimension_numbers = #tpu.dot_dimension_numbers<[1], [0], [0], [1], [0, 0, 1, 1], [], []>} : vector<16x32xf32>, vector<32x32xf32>, vector<16x32xf32> -> vector<16x32xf32>
    %c0_3 = arith.constant 0 : index
    %c0_4 = arith.constant 0 : index
    %3 = vector.load %arg5[%c0_3, %c0_4] : memref<1x32xf32, #tpu.memory_space<vmem>>, vector<1x32xf32>
    %4 = vector.broadcast %3 : vector<1x32xf32> to vector<16x32xf32>
    %5 = arith.addf %2, %4 : vector<16x32xf32>
    %cst_5 = arith.constant 0.707106769 : f32
    %6 = vector.broadcast %cst_5 : f32 to vector<16x32xf32>
    %7 = arith.mulf %5, %6 : vector<16x32xf32>
    %8 = math.absf %7 : vector<16x32xf32>
    %cst_6 = arith.constant 0.327591091 : f32
    %9 = vector.broadcast %cst_6 : f32 to vector<16x32xf32>
    %10 = arith.mulf %9, %8 : vector<16x32xf32>
    %cst_7 = arith.constant 1.000000e+00 : f32
    %11 = vector.broadcast %cst_7 : f32 to vector<16x32xf32>
    %12 = arith.addf %11, %10 : vector<16x32xf32>
    %cst_8 = arith.constant 1.000000e+00 : f32
    %13 = vector.broadcast %cst_8 : f32 to vector<16x32xf32>
    %14 = arith.divf %13, %12 : vector<16x32xf32>
    %cst_9 = arith.constant 1.06140542 : f32
    %15 = vector.broadcast %cst_9 : f32 to vector<16x32xf32>
    %16 = arith.mulf %14, %15 : vector<16x32xf32>
    %cst_10 = arith.constant -1.45315206 : f32
    %17 = vector.broadcast %cst_10 : f32 to vector<16x32xf32>
    %18 = arith.addf %17, %16 : vector<16x32xf32>
    %19 = arith.mulf %14, %18 : vector<16x32xf32>
    %cst_11 = arith.constant 1.42141378 : f32
    %20 = vector.broadcast %cst_11 : f32 to vector<16x32xf32>
    %21 = arith.addf %20, %19 : vector<16x32xf32>
    %22 = arith.mulf %14, %21 : vector<16x32xf32>
    %cst_12 = arith.constant -0.284496725 : f32
    %23 = vector.broadcast %cst_12 : f32 to vector<16x32xf32>
    %24 = arith.addf %23, %22 : vector<16x32xf32>
    %25 = arith.mulf %14, %24 : vector<16x32xf32>
    %cst_13 = arith.constant 0.254829586 : f32
    %26 = vector.broadcast %cst_13 : f32 to vector<16x32xf32>
    %27 = arith.addf %26, %25 : vector<16x32xf32>
    %28 = arith.mulf %14, %27 : vector<16x32xf32>
    %cst_14 = arith.constant 0.000000e+00 : f32
    %29 = vector.broadcast %cst_14 : f32 to vector<16x32xf32>
    %30 = arith.subf %29, %8 : vector<16x32xf32>
    %31 = arith.mulf %30, %8 : vector<16x32xf32>
    %32 = math.exp %31 : vector<16x32xf32>
    %33 = arith.mulf %28, %32 : vector<16x32xf32>
    %cst_15 = arith.constant 1.000000e+00 : f32
    %34 = vector.broadcast %cst_15 : f32 to vector<16x32xf32>
    %35 = arith.subf %34, %33 : vector<16x32xf32>
    %cst_16 = arith.constant 0.000000e+00 : f32
    %36 = vector.broadcast %cst_16 : f32 to vector<16x32xf32>
    %37 = arith.cmpf olt, %7, %36 : vector<16x32xf32>
    %cst_17 = arith.constant 0.000000e+00 : f32
    %38 = vector.broadcast %cst_17 : f32 to vector<16x32xf32>
    %39 = arith.subf %38, %35 : vector<16x32xf32>
    %40 = arith.select %37, %39, %35 : vector<16x32xi1>, vector<16x32xf32>
    %cst_18 = arith.constant 5.000000e-01 : f32
    %41 = vector.broadcast %cst_18 : f32 to vector<16x32xf32>
    %42 = arith.mulf %41, %5 : vector<16x32xf32>
    %cst_19 = arith.constant 1.000000e+00 : f32
    %43 = vector.broadcast %cst_19 : f32 to vector<16x32xf32>
    %44 = arith.addf %43, %40 : vector<16x32xf32>
    %45 = arith.mulf %42, %44 : vector<16x32xf32>
    %cst_20 = arith.constant 0.000000e+00 : f32
    %46 = vector.broadcast %cst_20 : f32 to vector<8x32xf32>
    %c0_21 = arith.constant 0 : index
    %c0_22 = arith.constant 0 : index
    %47 = vector.load %arg24[%c0_21, %c0_22] : memref<32x32xf32, #tpu.memory_space<vmem>>, vector<8x32xf32>
    tpu.vector_store %arg24[%c0_21, %c0_22], %46 {strides = array<i32>} : memref<32x32xf32, #tpu.memory_space<vmem>>, vector<8x32xf32>,
    %cst_23 = arith.constant 0.000000e+00 : f32
    %48 = vector.broadcast %cst_23 : f32 to vector<8x32xf32>
    %c24 = arith.constant 24 : index
    %c0_24 = arith.constant 0 : index
    %49 = vector.load %arg24[%c24, %c0_24] : memref<32x32xf32, #tpu.memory_space<vmem>>, vector<8x32xf32>
    tpu.vector_store %arg24[%c24, %c0_24], %48 {strides = array<i32>} : memref<32x32xf32, #tpu.memory_space<vmem>>, vector<8x32xf32>,
    %c8 = arith.constant 8 : index
    %c0_25 = arith.constant 0 : index
    %50 = vector.load %arg24[%c8, %c0_25] : memref<32x32xf32, #tpu.memory_space<vmem>>, vector<16x32xf32>
    tpu.vector_store %arg24[%c8, %c0_25], %45 {strides = array<i32>} : memref<32x32xf32, #tpu.memory_space<vmem>>, vector<16x32xf32>,
    %c0_26 = arith.constant 0 : index
    %c0_27 = arith.constant 0 : index
    %51 = vector.load %arg1[%c0_26, %c0_27] : memref<16x1xi32, #tpu.memory_space<vmem>>, vector<16x1xi32>
    %c1_i32 = arith.constant 1 : i32
    %52 = vector.broadcast %c1_i32 : i32 to vector<16x1xi32>
    %53 = arith.andi %51, %52 : vector<16x1xi32>
    %c0_i32 = arith.constant 0 : i32
    %54 = vector.broadcast %c0_i32 : i32 to vector<16x1xi32>
    %55 = arith.cmpi sgt, %53, %54 : vector<16x1xi32>
    %c2_i32 = arith.constant 2 : i32
    %56 = vector.broadcast %c2_i32 : i32 to vector<16x1xi32>
    %57 = arith.andi %51, %56 : vector<16x1xi32>
    %c0_i32_28 = arith.constant 0 : i32
    %58 = vector.broadcast %c0_i32_28 : i32 to vector<16x1xi32>
    %59 = arith.cmpi sgt, %57, %58 : vector<16x1xi32>
    %c4_i32 = arith.constant 4 : i32
    %60 = vector.broadcast %c4_i32 : i32 to vector<16x1xi32>
    %61 = arith.andi %51, %60 : vector<16x1xi32>
    %c0_i32_29 = arith.constant 0 : i32
    %62 = vector.broadcast %c0_i32_29 : i32 to vector<16x1xi32>
    %63 = arith.cmpi sgt, %61, %62 : vector<16x1xi32>
    %c8_i32 = arith.constant 8 : i32
    %64 = vector.broadcast %c8_i32 : i32 to vector<16x1xi32>
    %65 = arith.andi %51, %64 : vector<16x1xi32>
    %c0_i32_30 = arith.constant 0 : i32
    %66 = vector.broadcast %c0_i32_30 : i32 to vector<16x1xi32>
    %67 = arith.cmpi sgt, %65, %66 : vector<16x1xi32>
    %c3 = arith.constant 3 : index
    %c0_31 = arith.constant 0 : index
    %68 = vector.load %arg24[%c3, %c0_31] : memref<32x32xf32, #tpu.memory_space<vmem>>, vector<16x32xf32>
    %c4 = arith.constant 4 : index
    %c0_32 = arith.constant 0 : index
    %69 = vector.load %arg24[%c4, %c0_32] : memref<32x32xf32, #tpu.memory_space<vmem>>, vector<16x32xf32>
    %70 = vector.shape_cast %55 : vector<16x1xi1> to vector<16x1xi1>
    %71 = vector.broadcast %70 : vector<16x1xi1> to vector<16x32xi1>
    %72 = arith.select %71, %68, %69 : vector<16x32xi1>, vector<16x32xf32>
    %c7 = arith.constant 7 : index
    %c0_33 = arith.constant 0 : index
    %73 = vector.load %arg24[%c7, %c0_33] : memref<32x32xf32, #tpu.memory_space<vmem>>, vector<16x32xf32>
    %c8_34 = arith.constant 8 : index
    %c0_35 = arith.constant 0 : index
    %74 = vector.load %arg24[%c8_34, %c0_35] : memref<32x32xf32, #tpu.memory_space<vmem>>, vector<16x32xf32>
    %75 = vector.shape_cast %55 : vector<16x1xi1> to vector<16x1xi1>
    %76 = vector.broadcast %75 : vector<16x1xi1> to vector<16x32xi1>
    %77 = arith.select %76, %73, %74 : vector<16x32xi1>, vector<16x32xf32>
    %78 = vector.shape_cast %63 : vector<16x1xi1> to vector<16x1xi1>
    %79 = vector.broadcast %78 : vector<16x1xi1> to vector<16x32xi1>
    %80 = arith.select %79, %72, %77 : vector<16x32xi1>, vector<16x32xf32>
    %c0_36 = arith.constant 0 : index
    %c0_37 = arith.constant 0 : index
    %c0_38 = arith.constant 0 : index
    %81 = vector.load %arg6[%c0_36, %c0_37, %c0_38] : memref<9x32x32xf32, #tpu.memory_space<vmem>>, vector<1x32x32xf32>
    %82 = vector.shape_cast %81 : vector<1x32x32xf32> to vector<32x32xf32>
    %cst_39 = arith.constant dense<0.000000e+00> : vector<16x32xf32>
    %83 = tpu.matmul %80, %82, %cst_39 {dimension_numbers = #tpu.dot_dimension_numbers<[1], [0], [0], [1], [0, 0, 1, 1], [], []>} : vector<16x32xf32>, vector<32x32xf32>, vector<16x32xf32> -> vector<16x32xf32>
    %c4_40 = arith.constant 4 : index
    %c0_41 = arith.constant 0 : index
    %84 = vector.load %arg24[%c4_40, %c0_41] : memref<32x32xf32, #tpu.memory_space<vmem>>, vector<16x32xf32>
    %c8_42 = arith.constant 8 : index
    %c0_43 = arith.constant 0 : index
    %85 = vector.load %arg24[%c8_42, %c0_43] : memref<32x32xf32, #tpu.memory_space<vmem>>, vector<16x32xf32>
    %86 = vector.shape_cast %63 : vector<16x1xi1> to vector<16x1xi1>
    %87 = vector.broadcast %86 : vector<16x1xi1> to vector<16x32xi1>
    %88 = arith.select %87, %84, %85 : vector<16x32xi1>, vector<16x32xf32>
    %c1 = arith.constant 1 : index
    %c0_44 = arith.constant 0 : index
    %c0_45 = arith.constant 0 : index
    %89 = vector.load %arg6[%c1, %c0_44, %c0_45] : memref<9x32x32xf32, #tpu.memory_space<vmem>>, vector<1x32x32xf32>
    %90 = vector.shape_cast %89 : vector<1x32x32xf32> to vector<32x32xf32>
    %cst_46 = arith.constant dense<0.000000e+00> : vector<16x32xf32>
    %91 = tpu.matmul %88, %90, %cst_46 {dimension_numbers = #tpu.dot_dimension_numbers<[1], [0], [0], [1], [0, 0, 1, 1], [], []>} : vector<16x32xf32>, vector<32x32xf32>, vector<16x32xf32> -> vector<16x32xf32>
    %92 = arith.addf %83, %91 : vector<16x32xf32>
    %c5 = arith.constant 5 : index
    %c0_47 = arith.constant 0 : index
    %93 = vector.load %arg24[%c5, %c0_47] : memref<32x32xf32, #tpu.memory_space<vmem>>, vector<16x32xf32>
    %c4_48 = arith.constant 4 : index
    %c0_49 = arith.constant 0 : index
    %94 = vector.load %arg24[%c4_48, %c0_49] : memref<32x32xf32, #tpu.memory_space<vmem>>, vector<16x32xf32>
    %95 = vector.shape_cast %59 : vector<16x1xi1> to vector<16x1xi1>
    %96 = vector.broadcast %95 : vector<16x1xi1> to vector<16x32xi1>
    %97 = arith.select %96, %93, %94 : vector<16x32xi1>, vector<16x32xf32>
    %c9 = arith.constant 9 : index
    %c0_50 = arith.constant 0 : index
    %98 = vector.load %arg24[%c9, %c0_50] : memref<32x32xf32, #tpu.memory_space<vmem>>, vector<16x32xf32>
    %c8_51 = arith.constant 8 : index
    %c0_52 = arith.constant 0 : index
    %99 = vector.load %arg24[%c8_51, %c0_52] : memref<32x32xf32, #tpu.memory_space<vmem>>, vector<16x32xf32>
    %100 = vector.shape_cast %59 : vector<16x1xi1> to vector<16x1xi1>
    %101 = vector.broadcast %100 : vector<16x1xi1> to vector<16x32xi1>
    %102 = arith.select %101, %98, %99 : vector<16x32xi1>, vector<16x32xf32>
    %103 = vector.shape_cast %63 : vector<16x1xi1> to vector<16x1xi1>
    %104 = vector.broadcast %103 : vector<16x1xi1> to vector<16x32xi1>
    %105 = arith.select %104, %97, %102 : vector<16x32xi1>, vector<16x32xf32>
    %c2 = arith.constant 2 : index
    %c0_53 = arith.constant 0 : index
    %c0_54 = arith.constant 0 : index
    %106 = vector.load %arg6[%c2, %c0_53, %c0_54] : memref<9x32x32xf32, #tpu.memory_space<vmem>>, vector<1x32x32xf32>
    %107 = vector.shape_cast %106 : vector<1x32x32xf32> to vector<32x32xf32>
    %cst_55 = arith.constant dense<0.000000e+00> : vector<16x32xf32>
    %108 = tpu.matmul %105, %107, %cst_55 {dimension_numbers = #tpu.dot_dimension_numbers<[1], [0], [0], [1], [0, 0, 1, 1], [], []>} : vector<16x32xf32>, vector<32x32xf32>, vector<16x32xf32> -> vector<16x32xf32>
    %109 = arith.addf %92, %108 : vector<16x32xf32>
    %c7_56 = arith.constant 7 : index
    %c0_57 = arith.constant 0 : index
    %110 = vector.load %arg24[%c7_56, %c0_57] : memref<32x32xf32, #tpu.memory_space<vmem>>, vector<16x32xf32>
    %c8_58 = arith.constant 8 : index
    %c0_59 = arith.constant 0 : index
    %111 = vector.load %arg24[%c8_58, %c0_59] : memref<32x32xf32, #tpu.memory_space<vmem>>, vector<16x32xf32>
    %112 = vector.shape_cast %55 : vector<16x1xi1> to vector<16x1xi1>
    %113 = vector.broadcast %112 : vector<16x1xi1> to vector<16x32xi1>
    %114 = arith.select %113, %110, %111 : vector<16x32xi1>, vector<16x32xf32>
    %c3_60 = arith.constant 3 : index
    %c0_61 = arith.constant 0 : index
    %c0_62 = arith.constant 0 : index
    %115 = vector.load %arg6[%c3_60, %c0_61, %c0_62] : memref<9x32x32xf32, #tpu.memory_space<vmem>>, vector<1x32x32xf32>
    %116 = vector.shape_cast %115 : vector<1x32x32xf32> to vector<32x32xf32>
    %cst_63 = arith.constant dense<0.000000e+00> : vector<16x32xf32>
    %117 = tpu.matmul %114, %116, %cst_63 {dimension_numbers = #tpu.dot_dimension_numbers<[1], [0], [0], [1], [0, 0, 1, 1], [], []>} : vector<16x32xf32>, vector<32x32xf32>, vector<16x32xf32> -> vector<16x32xf32>
    %118 = arith.addf %109, %117 : vector<16x32xf32>
    %c8_64 = arith.constant 8 : index
    %c0_65 = arith.constant 0 : index
    %119 = vector.load %arg24[%c8_64, %c0_65] : memref<32x32xf32, #tpu.memory_space<vmem>>, vector<16x32xf32>
    %c4_66 = arith.constant 4 : index
    %c0_67 = arith.constant 0 : index
    %c0_68 = arith.constant 0 : index
    %120 = vector.load %arg6[%c4_66, %c0_67, %c0_68] : memref<9x32x32xf32, #tpu.memory_space<vmem>>, vector<1x32x32xf32>
    %121 = vector.shape_cast %120 : vector<1x32x32xf32> to vector<32x32xf32>
    %cst_69 = arith.constant dense<0.000000e+00> : vector<16x32xf32>
    %122 = tpu.matmul %119, %121, %cst_69 {dimension_numbers = #tpu.dot_dimension_numbers<[1], [0], [0], [1], [0, 0, 1, 1], [], []>} : vector<16x32xf32>, vector<32x32xf32>, vector<16x32xf32> -> vector<16x32xf32>
    %123 = arith.addf %118, %122 : vector<16x32xf32>
    %c9_70 = arith.constant 9 : index
    %c0_71 = arith.constant 0 : index
    %124 = vector.load %arg24[%c9_70, %c0_71] : memref<32x32xf32, #tpu.memory_space<vmem>>, vector<16x32xf32>
    %c8_72 = arith.constant 8 : index
    %c0_73 = arith.constant 0 : index
    %125 = vector.load %arg24[%c8_72, %c0_73] : memref<32x32xf32, #tpu.memory_space<vmem>>, vector<16x32xf32>
    %126 = vector.shape_cast %59 : vector<16x1xi1> to vector<16x1xi1>
    %127 = vector.broadcast %126 : vector<16x1xi1> to vector<16x32xi1>
    %128 = arith.select %127, %124, %125 : vector<16x32xi1>, vector<16x32xf32>
    %c5_74 = arith.constant 5 : index
    %c0_75 = arith.constant 0 : index
    %c0_76 = arith.constant 0 : index
    %129 = vector.load %arg6[%c5_74, %c0_75, %c0_76] : memref<9x32x32xf32, #tpu.memory_space<vmem>>, vector<1x32x32xf32>
    %130 = vector.shape_cast %129 : vector<1x32x32xf32> to vector<32x32xf32>
    %cst_77 = arith.constant dense<0.000000e+00> : vector<16x32xf32>
    %131 = tpu.matmul %128, %130, %cst_77 {dimension_numbers = #tpu.dot_dimension_numbers<[1], [0], [0], [1], [0, 0, 1, 1], [], []>} : vector<16x32xf32>, vector<32x32xf32>, vector<16x32xf32> -> vector<16x32xf32>
    %132 = arith.addf %123, %131 : vector<16x32xf32>
    %c11 = arith.constant 11 : index
    %c0_78 = arith.constant 0 : index
    %133 = vector.load %arg24[%c11, %c0_78] : memref<32x32xf32, #tpu.memory_space<vmem>>, vector<16x32xf32>
    %c12 = arith.constant 12 : index
    %c0_79 = arith.constant 0 : index
    %134 = vector.load %arg24[%c12, %c0_79] : memref<32x32xf32, #tpu.memory_space<vmem>>, vector<16x32xf32>
    %135 = vector.shape_cast %55 : vector<16x1xi1> to vector<16x1xi1>
    %136 = vector.broadcast %135 : vector<16x1xi1> to vector<16x32xi1>
    %137 = arith.select %136, %133, %134 : vector<16x32xi1>, vector<16x32xf32>
    %c7_80 = arith.constant 7 : index
    %c0_81 = arith.constant 0 : index
    %138 = vector.load %arg24[%c7_80, %c0_81] : memref<32x32xf32, #tpu.memory_space<vmem>>, vector<16x32xf32>
    %c8_82 = arith.constant 8 : index
    %c0_83 = arith.constant 0 : index
    %139 = vector.load %arg24[%c8_82, %c0_83] : memref<32x32xf32, #tpu.memory_space<vmem>>, vector<16x32xf32>
    %140 = vector.shape_cast %55 : vector<16x1xi1> to vector<16x1xi1>
    %141 = vector.broadcast %140 : vector<16x1xi1> to vector<16x32xi1>
    %142 = arith.select %141, %138, %139 : vector<16x32xi1>, vector<16x32xf32>
    %143 = vector.shape_cast %67 : vector<16x1xi1> to vector<16x1xi1>
    %144 = vector.broadcast %143 : vector<16x1xi1> to vector<16x32xi1>
    %145 = arith.select %144, %137, %142 : vector<16x32xi1>, vector<16x32xf32>
    %c6 = arith.constant 6 : index
    %c0_84 = arith.constant 0 : index
    %c0_85 = arith.constant 0 : index
    %146 = vector.load %arg6[%c6, %c0_84, %c0_85] : memref<9x32x32xf32, #tpu.memory_space<vmem>>, vector<1x32x32xf32>
    %147 = vector.shape_cast %146 : vector<1x32x32xf32> to vector<32x32xf32>
    %cst_86 = arith.constant dense<0.000000e+00> : vector<16x32xf32>
    %148 = tpu.matmul %145, %147, %cst_86 {dimension_numbers = #tpu.dot_dimension_numbers<[1], [0], [0], [1], [0, 0, 1, 1], [], []>} : vector<16x32xf32>, vector<32x32xf32>, vector<16x32xf32> -> vector<16x32xf32>
    %149 = arith.addf %132, %148 : vector<16x32xf32>
    %c12_87 = arith.constant 12 : index
    %c0_88 = arith.constant 0 : index
    %150 = vector.load %arg24[%c12_87, %c0_88] : memref<32x32xf32, #tpu.memory_space<vmem>>, vector<16x32xf32>
    %c8_89 = arith.constant 8 : index
    %c0_90 = arith.constant 0 : index
    %151 = vector.load %arg24[%c8_89, %c0_90] : memref<32x32xf32, #tpu.memory_space<vmem>>, vector<16x32xf32>
    %152 = vector.shape_cast %67 : vector<16x1xi1> to vector<16x1xi1>
    %153 = vector.broadcast %152 : vector<16x1xi1> to vector<16x32xi1>
    %154 = arith.select %153, %150, %151 : vector<16x32xi1>, vector<16x32xf32>
    %c7_91 = arith.constant 7 : index
    %c0_92 = arith.constant 0 : index
    %c0_93 = arith.constant 0 : index
    %155 = vector.load %arg6[%c7_91, %c0_92, %c0_93] : memref<9x32x32xf32, #tpu.memory_space<vmem>>, vector<1x32x32xf32>
    %156 = vector.shape_cast %155 : vector<1x32x32xf32> to vector<32x32xf32>
    %cst_94 = arith.constant dense<0.000000e+00> : vector<16x32xf32>
    %157 = tpu.matmul %154, %156, %cst_94 {dimension_numbers = #tpu.dot_dimension_numbers<[1], [0], [0], [1], [0, 0, 1, 1], [], []>} : vector<16x32xf32>, vector<32x32xf32>, vector<16x32xf32> -> vector<16x32xf32>
    %158 = arith.addf %149, %157 : vector<16x32xf32>
    %c13 = arith.constant 13 : index
    %c0_95 = arith.constant 0 : index
    %159 = vector.load %arg24[%c13, %c0_95] : memref<32x32xf32, #tpu.memory_space<vmem>>, vector<16x32xf32>
    %c12_96 = arith.constant 12 : index
    %c0_97 = arith.constant 0 : index
    %160 = vector.load %arg24[%c12_96, %c0_97] : memref<32x32xf32, #tpu.memory_space<vmem>>, vector<16x32xf32>
    %161 = vector.shape_cast %59 : vector<16x1xi1> to vector<16x1xi1>
    %162 = vector.broadcast %161 : vector<16x1xi1> to vector<16x32xi1>
    %163 = arith.select %162, %159, %160 : vector<16x32xi1>, vector<16x32xf32>
    %c9_98 = arith.constant 9 : index
    %c0_99 = arith.constant 0 : index
    %164 = vector.load %arg24[%c9_98, %c0_99] : memref<32x32xf32, #tpu.memory_space<vmem>>, vector<16x32xf32>
    %c8_100 = arith.constant 8 : index
    %c0_101 = arith.constant 0 : index
    %165 = vector.load %arg24[%c8_100, %c0_101] : memref<32x32xf32, #tpu.memory_space<vmem>>, vector<16x32xf32>
    %166 = vector.shape_cast %59 : vector<16x1xi1> to vector<16x1xi1>
    %167 = vector.broadcast %166 : vector<16x1xi1> to vector<16x32xi1>
    %168 = arith.select %167, %164, %165 : vector<16x32xi1>, vector<16x32xf32>
    %169 = vector.shape_cast %67 : vector<16x1xi1> to vector<16x1xi1>
    %170 = vector.broadcast %169 : vector<16x1xi1> to vector<16x32xi1>
    %171 = arith.select %170, %163, %168 : vector<16x32xi1>, vector<16x32xf32>
    %c8_102 = arith.constant 8 : index
    %c0_103 = arith.constant 0 : index
    %c0_104 = arith.constant 0 : index
    %172 = vector.load %arg6[%c8_102, %c0_103, %c0_104] : memref<9x32x32xf32, #tpu.memory_space<vmem>>, vector<1x32x32xf32>
    %173 = vector.shape_cast %172 : vector<1x32x32xf32> to vector<32x32xf32>
    %cst_105 = arith.constant dense<0.000000e+00> : vector<16x32xf32>
    %174 = tpu.matmul %171, %173, %cst_105 {dimension_numbers = #tpu.dot_dimension_numbers<[1], [0], [0], [1], [0, 0, 1, 1], [], []>} : vector<16x32xf32>, vector<32x32xf32>, vector<16x32xf32> -> vector<16x32xf32>
    %175 = arith.addf %158, %174 : vector<16x32xf32>
    %c0_106 = arith.constant 0 : index
    %c0_107 = arith.constant 0 : index
    %176 = vector.load %arg7[%c0_106, %c0_107] : memref<1x32xf32, #tpu.memory_space<vmem>>, vector<1x32xf32>
    %177 = vector.broadcast %176 : vector<1x32xf32> to vector<16x32xf32>
    %178 = arith.addf %175, %177 : vector<16x32xf32>
    %cst_108 = arith.constant 0.707106769 : f32
    %179 = vector.broadcast %cst_108 : f32 to vector<16x32xf32>
    %180 = arith.mulf %178, %179 : vector<16x32xf32>
    %181 = math.absf %180 : vector<16x32xf32>
    %cst_109 = arith.constant 0.327591091 : f32
    %182 = vector.broadcast %cst_109 : f32 to vector<16x32xf32>
    %183 = arith.mulf %182, %181 : vector<16x32xf32>
    %cst_110 = arith.constant 1.000000e+00 : f32
    %184 = vector.broadcast %cst_110 : f32 to vector<16x32xf32>
    %185 = arith.addf %184, %183 : vector<16x32xf32>
    %cst_111 = arith.constant 1.000000e+00 : f32
    %186 = vector.broadcast %cst_111 : f32 to vector<16x32xf32>
    %187 = arith.divf %186, %185 : vector<16x32xf32>
    %cst_112 = arith.constant 1.06140542 : f32
    %188 = vector.broadcast %cst_112 : f32 to vector<16x32xf32>
    %189 = arith.mulf %187, %188 : vector<16x32xf32>
    %cst_113 = arith.constant -1.45315206 : f32
    %190 = vector.broadcast %cst_113 : f32 to vector<16x32xf32>
    %191 = arith.addf %190, %189 : vector<16x32xf32>
    %192 = arith.mulf %187, %191 : vector<16x32xf32>
    %cst_114 = arith.constant 1.42141378 : f32
    %193 = vector.broadcast %cst_114 : f32 to vector<16x32xf32>
    %194 = arith.addf %193, %192 : vector<16x32xf32>
    %195 = arith.mulf %187, %194 : vector<16x32xf32>
    %cst_115 = arith.constant -0.284496725 : f32
    %196 = vector.broadcast %cst_115 : f32 to vector<16x32xf32>
    %197 = arith.addf %196, %195 : vector<16x32xf32>
    %198 = arith.mulf %187, %197 : vector<16x32xf32>
    %cst_116 = arith.constant 0.254829586 : f32
    %199 = vector.broadcast %cst_116 : f32 to vector<16x32xf32>
    %200 = arith.addf %199, %198 : vector<16x32xf32>
    %201 = arith.mulf %187, %200 : vector<16x32xf32>
    %cst_117 = arith.constant 0.000000e+00 : f32
    %202 = vector.broadcast %cst_117 : f32 to vector<16x32xf32>
    %203 = arith.subf %202, %181 : vector<16x32xf32>
    %204 = arith.mulf %203, %181 : vector<16x32xf32>
    %205 = math.exp %204 : vector<16x32xf32>
    %206 = arith.mulf %201, %205 : vector<16x32xf32>
    %cst_118 = arith.constant 1.000000e+00 : f32
    %207 = vector.broadcast %cst_118 : f32 to vector<16x32xf32>
    %208 = arith.subf %207, %206 : vector<16x32xf32>
    %cst_119 = arith.constant 0.000000e+00 : f32
    %209 = vector.broadcast %cst_119 : f32 to vector<16x32xf32>
    %210 = arith.cmpf olt, %180, %209 : vector<16x32xf32>
    %cst_120 = arith.constant 0.000000e+00 : f32
    %211 = vector.broadcast %cst_120 : f32 to vector<16x32xf32>
    %212 = arith.subf %211, %208 : vector<16x32xf32>
    %213 = arith.select %210, %212, %208 : vector<16x32xi1>, vector<16x32xf32>
    %cst_121 = arith.constant 5.000000e-01 : f32
    %214 = vector.broadcast %cst_121 : f32 to vector<16x32xf32>
    %215 = arith.mulf %214, %178 : vector<16x32xf32>
    %cst_122 = arith.constant 1.000000e+00 : f32
    %216 = vector.broadcast %cst_122 : f32 to vector<16x32xf32>
    %217 = arith.addf %216, %213 : vector<16x32xf32>
    %218 = arith.mulf %215, %217 : vector<16x32xf32>
    %c0_123 = arith.constant 0 : index
    %c0_124 = arith.constant 0 : index
    %219 = vector.load %arg8[%c0_123, %c0_124] : memref<32x32xf32, #tpu.memory_space<vmem>>, vector<32x32xf32>
    %cst_125 = arith.constant dense<0.000000e+00> : vector<16x32xf32>
    %220 = tpu.matmul %218, %219, %cst_125 {dimension_numbers = #tpu.dot_dimension_numbers<[1], [0], [0], [1], [0, 0, 1, 1], [], []>} : vector<16x32xf32>, vector<32x32xf32>, vector<16x32xf32> -> vector<16x32xf32>
    %c0_126 = arith.constant 0 : index
    %c0_127 = arith.constant 0 : index
    %221 = vector.load %arg9[%c0_126, %c0_127] : memref<1x32xf32, #tpu.memory_space<vmem>>, vector<1x32xf32>
    %222 = vector.broadcast %221 : vector<1x32xf32> to vector<16x32xf32>
    %223 = arith.addf %220, %222 : vector<16x32xf32>
    %c0_128 = arith.constant 0 : index
    %c0_129 = arith.constant 0 : index
    %224 = vector.load %arg2[%c0_128, %c0_129] : memref<16x32xf32, #tpu.memory_space<vmem>>, vector<16x32xf32>
    %225 = arith.addf %223, %224 : vector<16x32xf32>
    %c8_130 = arith.constant 8 : index
    %c0_131 = arith.constant 0 : index
    %226 = vector.load %arg24[%c8_130, %c0_131] : memref<32x32xf32, #tpu.memory_space<vmem>>, vector<16x32xf32>
    tpu.vector_store %arg24[%c8_130, %c0_131], %225 {strides = array<i32>} : memref<32x32xf32, #tpu.memory_space<vmem>>, vector<16x32xf32>,
    %c0_132 = arith.constant 0 : index
    %c0_133 = arith.constant 0 : index
    %227 = vector.load %arg10[%c0_132, %c0_133] : memref<1x32xf32, #tpu.memory_space<vmem>>, vector<1x32xf32>
    %c0_134 = arith.constant 0 : index
    %c0_135 = arith.constant 0 : index
    %228 = vector.load %arg11[%c0_134, %c0_135] : memref<1x32xf32, #tpu.memory_space<vmem>>, vector<1x32xf32>
    %cst_136 = arith.constant dense<0.000000e+00> : vector<16xf32>
    %229 = vector.multi_reduction <add>, %225, %cst_136 [1] : vector<16x32xf32> to vector<16xf32>
    %230 = vector.shape_cast %229 : vector<16xf32> to vector<16x1xf32>
    %cst_137 = arith.constant 3.200000e+01 : f32
    %231 = vector.broadcast %cst_137 : f32 to vector<16x1xf32>
    %232 = arith.divf %230, %231 : vector<16x1xf32>
    %233 = vector.broadcast %232 : vector<16x1xf32> to vector<16x32xf32>
    %234 = arith.subf %225, %233 : vector<16x32xf32>
    %235 = arith.mulf %234, %234 : vector<16x32xf32>
    %cst_138 = arith.constant dense<0.000000e+00> : vector<16xf32>
    %236 = vector.multi_reduction <add>, %235, %cst_138 [1] : vector<16x32xf32> to vector<16xf32>
    %237 = vector.shape_cast %236 : vector<16xf32> to vector<16x1xf32>
    %cst_139 = arith.constant 3.200000e+01 : f32
    %238 = vector.broadcast %cst_139 : f32 to vector<16x1xf32>
    %239 = arith.divf %237, %238 : vector<16x1xf32>
    %cst_140 = arith.constant 9.99999974E-6 : f32
    %240 = vector.broadcast %cst_140 : f32 to vector<16x1xf32>
    %241 = arith.addf %239, %240 : vector<16x1xf32>
    %242 = math.rsqrt %241 : vector<16x1xf32>
    %243 = vector.broadcast %242 : vector<16x1xf32> to vector<16x32xf32>
    %244 = arith.mulf %234, %243 : vector<16x32xf32>
    %245 = vector.broadcast %227 : vector<1x32xf32> to vector<16x32xf32>
    %246 = arith.mulf %244, %245 : vector<16x32xf32>
    %247 = vector.broadcast %228 : vector<1x32xf32> to vector<16x32xf32>
    %248 = arith.addf %246, %247 : vector<16x32xf32>
    %c0_141 = arith.constant 0 : index
    %c0_142 = arith.constant 0 : index
    %249 = vector.load %arg3[%c0_141, %c0_142] : memref<16x16xf32, #tpu.memory_space<vmem>>, vector<16x16xf32>
    %c0_143 = arith.constant 0 : index
    %c0_144 = arith.constant 0 : index
    %250 = vector.load %arg12[%c0_143, %c0_144] : memref<1x16xf32, #tpu.memory_space<vmem>>, vector<1x16xf32>
    %c0_145 = arith.constant 0 : index
    %c0_146 = arith.constant 0 : index
    %251 = vector.load %arg13[%c0_145, %c0_146] : memref<1x16xf32, #tpu.memory_space<vmem>>, vector<1x16xf32>
    %cst_147 = arith.constant dense<0.000000e+00> : vector<16xf32>
    %252 = vector.multi_reduction <add>, %249, %cst_147 [1] : vector<16x16xf32> to vector<16xf32>
    %253 = vector.shape_cast %252 : vector<16xf32> to vector<16x1xf32>
    %cst_148 = arith.constant 1.600000e+01 : f32
    %254 = vector.broadcast %cst_148 : f32 to vector<16x1xf32>
    %255 = arith.divf %253, %254 : vector<16x1xf32>
    %256 = vector.broadcast %255 : vector<16x1xf32> to vector<16x16xf32>
    %257 = arith.subf %249, %256 : vector<16x16xf32>
    %258 = arith.mulf %257, %257 : vector<16x16xf32>
    %cst_149 = arith.constant dense<0.000000e+00> : vector<16xf32>
    %259 = vector.multi_reduction <add>, %258, %cst_149 [1] : vector<16x16xf32> to vector<16xf32>
    %260 = vector.shape_cast %259 : vector<16xf32> to vector<16x1xf32>
    %cst_150 = arith.constant 1.600000e+01 : f32
    %261 = vector.broadcast %cst_150 : f32 to vector<16x1xf32>
    %262 = arith.divf %260, %261 : vector<16x1xf32>
    %cst_151 = arith.constant 9.99999974E-6 : f32
    %263 = vector.broadcast %cst_151 : f32 to vector<16x1xf32>
    %264 = arith.addf %262, %263 : vector<16x1xf32>
    %265 = math.rsqrt %264 : vector<16x1xf32>
    %266 = vector.broadcast %265 : vector<16x1xf32> to vector<16x16xf32>
    %267 = arith.mulf %257, %266 : vector<16x16xf32>
    %268 = vector.broadcast %250 : vector<1x16xf32> to vector<16x16xf32>
    %269 = arith.mulf %267, %268 : vector<16x16xf32>
    %270 = vector.broadcast %251 : vector<1x16xf32> to vector<16x16xf32>
    %271 = arith.addf %269, %270 : vector<16x16xf32>
    %c0_152 = arith.constant 0 : index
    %c0_153 = arith.constant 0 : index
    %272 = vector.load %arg14[%c0_152, %c0_153] : memref<32x32xf32, #tpu.memory_space<vmem>>, vector<32x32xf32>
    %cst_154 = arith.constant dense<0.000000e+00> : vector<16x32xf32>
    %273 = tpu.matmul %248, %272, %cst_154 {dimension_numbers = #tpu.dot_dimension_numbers<[1], [0], [0], [1], [0, 0, 1, 1], [], []>} : vector<16x32xf32>, vector<32x32xf32>, vector<16x32xf32> -> vector<16x32xf32>
    %c0_155 = arith.constant 0 : index
    %c0_156 = arith.constant 0 : index
    %274 = vector.load %arg15[%c0_155, %c0_156] : memref<1x32xf32, #tpu.memory_space<vmem>>, vector<1x32xf32>
    %275 = vector.broadcast %274 : vector<1x32xf32> to vector<16x32xf32>
    %276 = arith.addf %273, %275 : vector<16x32xf32>
    %c0_157 = arith.constant 0 : index
    %c0_158 = arith.constant 0 : index
    %277 = vector.load %arg25[%c0_157, %c0_158] : memref<16x32xf32, #tpu.memory_space<vmem>>, vector<16x32xf32>
    tpu.vector_store %arg25[%c0_157, %c0_158], %276 {strides = array<i32>} : memref<16x32xf32, #tpu.memory_space<vmem>>, vector<16x32xf32>,
    %c0_159 = arith.constant 0 : index
    %c0_160 = arith.constant 0 : index
    %278 = vector.load %arg16[%c0_159, %c0_160] : memref<16x32xf32, #tpu.memory_space<vmem>>, vector<16x32xf32>
    %cst_161 = arith.constant dense<0.000000e+00> : vector<16x32xf32>
    %279 = tpu.matmul %271, %278, %cst_161 {dimension_numbers = #tpu.dot_dimension_numbers<[1], [0], [0], [1], [0, 0, 1, 1], [], []>} : vector<16x16xf32>, vector<16x32xf32>, vector<16x32xf32> -> vector<16x32xf32>
    %c0_162 = arith.constant 0 : index
    %c0_163 = arith.constant 0 : index
    %280 = vector.load %arg17[%c0_162, %c0_163] : memref<1x32xf32, #tpu.memory_space<vmem>>, vector<1x32xf32>
    %281 = vector.broadcast %280 : vector<1x32xf32> to vector<16x32xf32>
    %282 = arith.addf %279, %281 : vector<16x32xf32>
    %c0_164 = arith.constant 0 : index
    %c0_165 = arith.constant 0 : index
    %283 = vector.load %arg26[%c0_164, %c0_165] : memref<16x32xf32, #tpu.memory_space<vmem>>, vector<16x32xf32>
    tpu.vector_store %arg26[%c0_164, %c0_165], %282 {strides = array<i32>} : memref<16x32xf32, #tpu.memory_space<vmem>>, vector<16x32xf32>,
    %c0_166 = arith.constant 0 : index
    %c0_167 = arith.constant 0 : index
    %284 = vector.load %arg18[%c0_166, %c0_167] : memref<16x32xf32, #tpu.memory_space<vmem>>, vector<16x32xf32>
    %cst_168 = arith.constant dense<0.000000e+00> : vector<16x32xf32>
    %285 = tpu.matmul %271, %284, %cst_168 {dimension_numbers = #tpu.dot_dimension_numbers<[1], [0], [0], [1], [0, 0, 1, 1], [], []>} : vector<16x16xf32>, vector<16x32xf32>, vector<16x32xf32> -> vector<16x32xf32>
    %c0_169 = arith.constant 0 : index
    %c0_170 = arith.constant 0 : index
    %286 = vector.load %arg19[%c0_169, %c0_170] : memref<1x32xf32, #tpu.memory_space<vmem>>, vector<1x32xf32>
    %287 = vector.broadcast %286 : vector<1x32xf32> to vector<16x32xf32>
    %288 = arith.addf %285, %287 : vector<16x32xf32>
    %c0_171 = arith.constant 0 : index
    %c0_172 = arith.constant 0 : index
    %289 = vector.load %arg27[%c0_171, %c0_172] : memref<16x32xf32, #tpu.memory_space<vmem>>, vector<16x32xf32>
    tpu.vector_store %arg27[%c0_171, %c0_172], %288 {strides = array<i32>} : memref<16x32xf32, #tpu.memory_space<vmem>>, vector<16x32xf32>,
    %c0_i32_173 = arith.constant 0 : i32
    %c16_i32 = arith.constant 16 : i32
    %290 = arith.muli %c0_i32_173, %c16_i32 : i32
    %291 = arith.index_cast %290 : i32 to index
    %c0_174 = arith.constant 0 : index
    %292 = vector.load %arg26[%291, %c0_174] : memref<16x32xf32, #tpu.memory_space<vmem>>, vector<16x32xf32>
    %293 = arith.index_cast %290 : i32 to index
    %c0_175 = arith.constant 0 : index
    %294 = vector.load %arg25[%293, %c0_175] : memref<16x32xf32, #tpu.memory_space<vmem>>, vector<16x32xf32>
    %cst_176 = arith.constant dense<0.000000e+00> : vector<32x32xf32>
    %295 = tpu.matmul %292, %294, %cst_176 {dimension_numbers = #tpu.dot_dimension_numbers<[0], [0], [1], [1], [0, 1, 1, 1], [], []>} : vector<16x32xf32>, vector<16x32xf32>, vector<32x32xf32> -> vector<32x32xf32>
    %cst_177 = arith.constant dense<0xFF800000> : vector<32xf32>
    %296 = vector.multi_reduction <maximumf>, %295, %cst_177 [0] : vector<32x32xf32> to vector<32xf32>
    %297 = vector.shape_cast %296 : vector<32xf32> to vector<1x32xf32>
    %298 = vector.broadcast %297 : vector<1x32xf32> to vector<32x32xf32>
    %299 = arith.subf %295, %298 : vector<32x32xf32>
    %300 = math.exp %299 : vector<32x32xf32>
    %cst_178 = arith.constant dense<0.000000e+00> : vector<32xf32>
    %301 = vector.multi_reduction <add>, %300, %cst_178 [0] : vector<32x32xf32> to vector<32xf32>
    %302 = vector.shape_cast %301 : vector<32xf32> to vector<1x32xf32>
    %303 = tpu.reciprocal %302 {approx = true} : vector<1x32xf32> -> vector<1x32xf32>
    %304 = vector.broadcast %303 : vector<1x32xf32> to vector<32x32xf32>
    %305 = arith.mulf %300, %304 : vector<32x32xf32>
    %306 = arith.index_cast %c0_i32_173 : i32 to index
    %c0_179 = arith.constant 0 : index
    %c0_180 = arith.constant 0 : index
    %307 = vector.load %arg23[%306, %c0_179, %c0_180] : memref<1x32x32xf32, #tpu.memory_space<vmem>>, vector<1x32x32xf32>
    %308 = vector.shape_cast %307 : vector<1x32x32xf32> to vector<32x32xf32>
    %309 = vector.shape_cast %305 : vector<32x32xf32> to vector<1x32x32xf32>
    tpu.vector_store %arg23[%306, %c0_179, %c0_180], %309 {strides = array<i32>} : memref<1x32x32xf32, #tpu.memory_space<vmem>>, vector<1x32x32xf32>,
    %310 = arith.index_cast %290 : i32 to index
    %c0_181 = arith.constant 0 : index
    %311 = vector.load %arg27[%310, %c0_181] : memref<16x32xf32, #tpu.memory_space<vmem>>, vector<16x32xf32>
    %cst_182 = arith.constant dense<0.000000e+00> : vector<16x32xf32>
    %312 = tpu.matmul %311, %305, %cst_182 {dimension_numbers = #tpu.dot_dimension_numbers<[1], [0], [0], [1], [0, 0, 1, 1], [], []>} : vector<16x32xf32>, vector<32x32xf32>, vector<16x32xf32> -> vector<16x32xf32>
    %313 = arith.index_cast %290 : i32 to index
    %c0_183 = arith.constant 0 : index
    %314 = vector.load %arg28[%313, %c0_183] : memref<16x32xf32, #tpu.memory_space<vmem>>, vector<16x32xf32>
    tpu.vector_store %arg28[%313, %c0_183], %312 {strides = array<i32>} : memref<16x32xf32, #tpu.memory_space<vmem>>, vector<16x32xf32>,
    %c1_i32_184 = arith.constant 1 : i32
    %c0_185 = arith.constant 0 : index
    %c0_186 = arith.constant 0 : index
    %315 = vector.load %arg28[%c0_185, %c0_186] : memref<16x32xf32, #tpu.memory_space<vmem>>, vector<16x32xf32>
    %c0_187 = arith.constant 0 : index
    %c0_188 = arith.constant 0 : index
    %316 = vector.load %arg20[%c0_187, %c0_188] : memref<32x32xf32, #tpu.memory_space<vmem>>, vector<32x32xf32>
    %cst_189 = arith.constant dense<0.000000e+00> : vector<16x32xf32>
    %317 = tpu.matmul %315, %316, %cst_189 {dimension_numbers = #tpu.dot_dimension_numbers<[1], [0], [0], [1], [0, 0, 1, 1], [], []>} : vector<16x32xf32>, vector<32x32xf32>, vector<16x32xf32> -> vector<16x32xf32>
    %c0_190 = arith.constant 0 : index
    %c0_191 = arith.constant 0 : index
    %318 = vector.load %arg21[%c0_190, %c0_191] : memref<1x32xf32, #tpu.memory_space<vmem>>, vector<1x32xf32>
    %319 = vector.broadcast %318 : vector<1x32xf32> to vector<16x32xf32>
    %320 = arith.addf %317, %319 : vector<16x32xf32>
    %c8_192 = arith.constant 8 : index
    %c0_193 = arith.constant 0 : index
    %321 = vector.load %arg24[%c8_192, %c0_193] : memref<32x32xf32, #tpu.memory_space<vmem>>, vector<16x32xf32>
    %322 = arith.addf %320, %321 : vector<16x32xf32>
    %c0_194 = arith.constant 0 : index
    %c0_195 = arith.constant 0 : index
    %323 = vector.load %arg22[%c0_194, %c0_195] : memref<16x32xf32, #tpu.memory_space<vmem>>, vector<16x32xf32>
    tpu.vector_store %arg22[%c0_194, %c0_195], %322 {strides = array<i32>} : memref<16x32xf32, #tpu.memory_space<vmem>>, vector<16x32xf32>,
    return
  }
  func.func @transform_0(%arg0: i32) -> (i32, i32) {
    %c0_i32 = arith.constant 0 : i32
    %c0_i32_0 = arith.constant 0 : i32
    return %arg0, %c0_i32 : i32, i32
  }
  func.func @transform_1(%arg0: i32) -> (i32, i32) {
    %c0_i32 = arith.constant 0 : i32
    %c0_i32_0 = arith.constant 0 : i32
    return %arg0, %c0_i32 : i32, i32
  }
  func.func @transform_2(%arg0: i32) -> (i32, i32) {
    %c0_i32 = arith.constant 0 : i32
    %c0_i32_0 = arith.constant 0 : i32
    return %arg0, %c0_i32 : i32, i32
  }
  func.func @transform_3(%arg0: i32) -> (i32, i32) {
    %c0_i32 = arith.constant 0 : i32
    %c0_i32_0 = arith.constant 0 : i32
    %c0_i32_1 = arith.constant 0 : i32
    return %c0_i32, %c0_i32_0 : i32, i32
  }
  func.func @transform_4(%arg0: i32) -> (i32, i32) {
    %c0_i32 = arith.constant 0 : i32
    %c0_i32_0 = arith.constant 0 : i32
    %c0_i32_1 = arith.constant 0 : i32
    return %c0_i32, %c0_i32_0 : i32, i32
  }
  func.func @transform_5(%arg0: i32) -> (i32, i32, i32) {
    %c0_i32 = arith.constant 0 : i32
    %c0_i32_0 = arith.constant 0 : i32
    %c0_i32_1 = arith.constant 0 : i32
    %c0_i32_2 = arith.constant 0 : i32
    return %c0_i32, %c0_i32_0, %c0_i32_1 : i32, i32, i32
  }
  func.func @transform_6(%arg0: i32) -> (i32, i32) {
    %c0_i32 = arith.constant 0 : i32
    %c0_i32_0 = arith.constant 0 : i32
    %c0_i32_1 = arith.constant 0 : i32
    return %c0_i32, %c0_i32_0 : i32, i32
  }
  func.func @transform_7(%arg0: i32) -> (i32, i32) {
    %c0_i32 = arith.constant 0 : i32
    %c0_i32_0 = arith.constant 0 : i32
    %c0_i32_1 = arith.constant 0 : i32
    return %c0_i32, %c0_i32_0 : i32, i32
  }
  func.func @transform_8(%arg0: i32) -> (i32, i32) {
    %c0_i32 = arith.constant 0 : i32
    %c0_i32_0 = arith.constant 0 : i32
    %c0_i32_1 = arith.constant 0 : i32
    return %c0_i32, %c0_i32_0 : i32, i32
  }
  func.func @transform_9(%arg0: i32) -> (i32, i32) {
    %c0_i32 = arith.constant 0 : i32
    %c0_i32_0 = arith.constant 0 : i32
    %c0_i32_1 = arith.constant 0 : i32
    return %c0_i32, %c0_i32_0 : i32, i32
  }
  func.func @transform_10(%arg0: i32) -> (i32, i32) {
    %c0_i32 = arith.constant 0 : i32
    %c0_i32_0 = arith.constant 0 : i32
    %c0_i32_1 = arith.constant 0 : i32
    return %c0_i32, %c0_i32_0 : i32, i32
  }
  func.func @transform_11(%arg0: i32) -> (i32, i32) {
    %c0_i32 = arith.constant 0 : i32
    %c0_i32_0 = arith.constant 0 : i32
    %c0_i32_1 = arith.constant 0 : i32
    return %c0_i32, %c0_i32_0 : i32, i32
  }
  func.func @transform_12(%arg0: i32) -> (i32, i32) {
    %c0_i32 = arith.constant 0 : i32
    %c0_i32_0 = arith.constant 0 : i32
    %c0_i32_1 = arith.constant 0 : i32
    return %c0_i32, %c0_i32_0 : i32, i32
  }
  func.func @transform_13(%arg0: i32) -> (i32, i32) {
    %c0_i32 = arith.constant 0 : i32
    %c0_i32_0 = arith.constant 0 : i32
    %c0_i32_1 = arith.constant 0 : i32
    return %c0_i32, %c0_i32_0 : i32, i32
  }
  func.func @transform_14(%arg0: i32) -> (i32, i32) {
    %c0_i32 = arith.constant 0 : i32
    %c0_i32_0 = arith.constant 0 : i32
    %c0_i32_1 = arith.constant 0 : i32
    return %c0_i32, %c0_i32_0 : i32, i32
  }
  func.func @transform_15(%arg0: i32) -> (i32, i32) {
    %c0_i32 = arith.constant 0 : i32
    %c0_i32_0 = arith.constant 0 : i32
    %c0_i32_1 = arith.constant 0 : i32
    return %c0_i32, %c0_i32_0 : i32, i32
  }
  func.func @transform_16(%arg0: i32) -> (i32, i32) {
    %c0_i32 = arith.constant 0 : i32
    %c0_i32_0 = arith.constant 0 : i32
    %c0_i32_1 = arith.constant 0 : i32
    return %c0_i32, %c0_i32_0 : i32, i32
  }
  func.func @transform_17(%arg0: i32) -> (i32, i32) {
    %c0_i32 = arith.constant 0 : i32
    %c0_i32_0 = arith.constant 0 : i32
    %c0_i32_1 = arith.constant 0 : i32
    return %c0_i32, %c0_i32_0 : i32, i32
  }
  func.func @transform_18(%arg0: i32) -> (i32, i32) {
    %c0_i32 = arith.constant 0 : i32
    %c0_i32_0 = arith.constant 0 : i32
    %c0_i32_1 = arith.constant 0 : i32
    return %c0_i32, %c0_i32_0 : i32, i32
  }
  func.func @transform_19(%arg0: i32) -> (i32, i32) {
    %c0_i32 = arith.constant 0 : i32
    %c0_i32_0 = arith.constant 0 : i32
    %c0_i32_1 = arith.constant 0 : i32
    return %c0_i32, %c0_i32_0 : i32, i32
  }
  func.func @transform_20(%arg0: i32) -> (i32, i32) {
    %c0_i32 = arith.constant 0 : i32
    %c0_i32_0 = arith.constant 0 : i32
    %c0_i32_1 = arith.constant 0 : i32
    return %c0_i32, %c0_i32_0 : i32, i32
  }
  func.func @transform_21(%arg0: i32) -> (i32, i32) {
    %c0_i32 = arith.constant 0 : i32
    %c0_i32_0 = arith.constant 0 : i32
    return %arg0, %c0_i32 : i32, i32
  }
  func.func @transform_22(%arg0: i32) -> (i32, i32, i32) {
    %c0_i32 = arith.constant 0 : i32
    %c0_i32_0 = arith.constant 0 : i32
    %c0_i32_1 = arith.constant 0 : i32
    return %arg0, %c0_i32, %c0_i32_0 : i32, i32, i32
  }
}

</mosaic_0001>

<llo_original>
// kernel: tile.0
$region0: #{tile.0}
  %s0 = inlined_call_operand.vmem [shape: s32[2,16], index: 0, kind: input, shape index: {}]
  %s1 = inlined_call_operand.vmem [shape: s32[32,1], index: 1, kind: output, shape index: {}]
  $region1: #{tile.0} parent=0
    #allocation0 [shape = 'u8[4096]{0}', space=vmem, size = 0x1000, scoped, tag = 'scoped mem for input reshape']
    %s3 = sshllo.u32 0, 2
    %v4 = vld [vmem:[%s0] sm:%s3]
    %5 = vst [vmem:[#allocation0] sm:%s3] %v4
    %v6 = vld [vmem:[#allocation0] sm:$0x3]
    %vm7 = vcmask 7168
    %8 = vst.msk [vmem:[%s1] ss:$16 sm:$0x3] %vm7, %v6
    %v9 = vld [vmem:[#allocation0] sm:$0x3]
    %10 = vrot.lane.b32.xlu0 %v9, 127
    %v11 = vpop.permute.xlu0 %10
    %vm12 = vcmask 7168
    %s13 = scalar_lea.vmem %s1, 1
    %14 = vst.msk [vmem:[%s13] ss:$16 sm:$0x3] %vm12, %v11
    %v15 = vld [vmem:[#allocation0] sm:$0x3]
    %16 = vrot.lane.b32.xlu0 %v15, 126
    %v17 = vpop.permute.xlu0 %16
    %vm18 = vcmask 7168
    %s19 = scalar_lea.vmem %s1, 2
    %20 = vst.msk [vmem:[%s19] ss:$16 sm:$0x3] %vm18, %v17
    %v21 = vld [vmem:[#allocation0] sm:$0x3]
    %22 = vrot.lane.b32.xlu0 %v21, 125
    %v23 = vpop.permute.xlu0 %22
    %vm24 = vcmask 7168
    %s25 = scalar_lea.vmem %s1, 3
    %26 = vst.msk [vmem:[%s25] ss:$16 sm:$0x3] %vm24, %v23
    %v27 = vld [vmem:[#allocation0] sm:$0x3]
    %28 = vrot.lane.b32.xlu0 %v27, 124
    %v29 = vpop.permute.xlu0 %28
    %vm30 = vcmask 7168
    %s31 = scalar_lea.vmem %s1, 4
    %32 = vst.msk [vmem:[%s31] ss:$16 sm:$0x3] %vm30, %v29
    %v33 = vld [vmem:[#allocation0] sm:$0x3]
    %34 = vrot.lane.b32.xlu0 %v33, 123
    %v35 = vpop.permute.xlu0 %34
    %vm36 = vcmask 7168
    %s37 = scalar_lea.vmem %s1, 5
    %38 = vst.msk [vmem:[%s37] ss:$16 sm:$0x3] %vm36, %v35
    %v39 = vld [vmem:[#allocation0] sm:$0x3]
    %40 = vrot.lane.b32.xlu0 %v39, 122
    %v41 = vpop.permute.xlu0 %40
    %vm42 = vcmask 7168
    %s43 = scalar_lea.vmem %s1, 6
    %44 = vst.msk [vmem:[%s43] ss:$16 sm:$0x3] %vm42, %v41
    %v45 = vld [vmem:[#allocation0] sm:$0x3]
    %46 = vrot.lane.b32.xlu0 %v45, 121
    %v47 = vpop.permute.xlu0 %46
    %vm48 = vcmask 7168
    %s49 = scalar_lea.vmem %s1, 7
    %50 = vst.msk [vmem:[%s49] ss:$16 sm:$0x3] %vm48, %v47
    %v51 = vld [vmem:[#allocation0] sm:$0x3]
    %52 = vrot.lane.b32.xlu0 %v51, 120
    %v53 = vpop.permute.xlu0 %52
    %vm54 = vcmask 7168
    %s55 = scalar_lea.vmem %s1, 8
    %56 = vst.msk [vmem:[%s55] ss:$16 sm:$0x3] %vm54, %v53
    %v57 = vld [vmem:[#allocation0] sm:$0x3]
    %58 = vrot.lane.b32.xlu0 %v57, 119
    %v59 = vpop.permute.xlu0 %58
    %vm60 = vcmask 7168
    %s61 = scalar_lea.vmem %s1, 9
    %62 = vst.msk [vmem:[%s61] ss:$16 sm:$0x3] %vm60, %v59
    %v63 = vld [vmem:[#allocation0] sm:$0x3]
    %64 = vrot.lane.b32.xlu0 %v63, 118
    %v65 = vpop.permute.xlu0 %64
    %vm66 = vcmask 7168
    %s67 = scalar_lea.vmem %s1, 10
    %68 = vst.msk [vmem:[%s67] ss:$16 sm:$0x3] %vm66, %v65
    %v69 = vld [vmem:[#allocation0] sm:$0x3]
    %70 = vrot.lane.b32.xlu0 %v69, 117
    %v71 = vpop.permute.xlu0 %70
    %vm72 = vcmask 7168
    %s73 = scalar_lea.vmem %s1, 11
    %74 = vst.msk [vmem:[%s73] ss:$16 sm:$0x3] %vm72, %v71
    %v75 = vld [vmem:[#allocation0] sm:$0x3]
    %76 = vrot.lane.b32.xlu0 %v75, 116
    %v77 = vpop.permute.xlu0 %76
    %vm78 = vcmask 7168
    %s79 = scalar_lea.vmem %s1, 12
    %80 = vst.msk [vmem:[%s79] ss:$16 sm:$0x3] %vm78, %v77
    %v81 = vld [vmem:[#allocation0] sm:$0x3]
    %82 = vrot.lane.b32.xlu0 %v81, 115
    %v83 = vpop.permute.xlu0 %82
    %vm84 = vcmask 7168
    %s85 = scalar_lea.vmem %s1, 13
    %86 = vst.msk [vmem:[%s85] ss:$16 sm:$0x3] %vm84, %v83
    %v87 = vld [vmem:[#allocation0] sm:$0x3]
    %88 = vrot.lane.b32.xlu0 %v87, 114
    %v89 = vpop.permute.xlu0 %88
    %vm90 = vcmask 7168
    %s91 = scalar_lea.vmem %s1, 14
    %92 = vst.msk [vmem:[%s91] ss:$16 sm:$0x3] %vm90, %v89
    %v93 = vld [vmem:[#allocation0] sm:$0x3]
    %94 = vrot.lane.b32.xlu0 %v93, 113
    %v95 = vpop.permute.xlu0 %94
    %vm96 = vcmask 7168
    %s97 = scalar_lea.vmem %s1, 15
    %98 = vst.msk [vmem:[%s97] ss:$16 sm:$0x3] %vm96, %v95

// kernel: tile.18
$region0: #{tile.18}
  #allocation0 [shape = 's32[1]{0}', space=sflag, size = 0x4, scoped, tag = 'scoped memory for tile.18']
  %s0 = inlined_call_operand.vmem [shape: s32[16], index: 0, kind: input, shape index: {}]
  %s1 = inlined_call_operand.vmem [shape: s32[2,16], index: 1, kind: output, shape index: {}]
  // Predicated region
  $region2: #{tile.18} parent=0 // pred_check
    _
  $region3: #{tile.18} parent=0 // pred_check_branch
    %3 = sbr.rel (0) target = $region5
  $region4: #{tile.18} parent=0 // pred_region
    _
  $region5: #{tile.18} parent=0 // pred_fallthru
    _
  %v4 = vld [vmem:[%s0] ss:$0 sm:$0xff]
  %5 = vst [vmem:[%s1] sm:$0x3] %v4

// kernel: lime_layer.1
$region0: #{lime_layer.1}
  #allocation0 [shape = 'u32[]', space=smem, size = 0x4, offset = 0x4, fixed_abs, tag = 'smem constant byte address 0x4 - core index']
  #allocation1 [shape = 'u32[144,128]{1,0:T(1,128)}', space=vmem, size = 0x12000, scoped, tag = 'internal scratch']
  #allocation2 [shape = 'f32[32,32]{1,0:T(8,128)}', space=vmem, size = 0x4000, scoped, tag = 'scratch operand']
  #allocation3 [shape = 'f32[16,32]{1,0:T(8,128)}', space=vmem, size = 0x2000, scoped, tag = 'scratch operand']
  #allocation4 [shape = 'f32[16,32]{1,0:T(8,128)}', space=vmem, size = 0x2000, scoped, tag = 'scratch operand']
  #allocation5 [shape = 'f32[16,32]{1,0:T(8,128)}', space=vmem, size = 0x2000, scoped, tag = 'scratch operand']
  #allocation6 [shape = 'f32[16,32]{1,0:T(8,128)}', space=vmem, size = 0x2000, scoped, tag = 'scratch operand']
  %s0 = inlined_call_operand.vmem [shape: s32[32,1], index: 0, kind: input, shape index: {}]
  %s1 = inlined_call_operand.vmem [shape: f32[32,32], index: 1, kind: input, shape index: {}]
  %s2 = inlined_call_operand.vmem [shape: f32[32,16], index: 2, kind: input, shape index: {}]
  %s3 = inlined_call_operand.vmem [shape: f32[32,32], index: 3, kind: input, shape index: {}]
  %s4 = inlined_call_operand.vmem [shape: f32[1,32], index: 4, kind: input, shape index: {}]
  %s5 = inlined_call_operand.vmem [shape: f32[9,32,32], index: 5, kind: input, shape index: {}]
  %s6 = inlined_call_operand.vmem [shape: f32[1,32], index: 6, kind: input, shape index: {}]
  %s7 = inlined_call_operand.vmem [shape: f32[32,32], index: 7, kind: input, shape index: {}]
  %s8 = inlined_call_operand.vmem [shape: f32[1,32], index: 8, kind: input, shape index: {}]
  %s9 = inlined_call_operand.vmem [shape: f32[1,32], index: 9, kind: input, shape index: {}]
  %s10 = inlined_call_operand.vmem [shape: f32[1,32], index: 10, kind: input, shape index: {}]
  %s11 = inlined_call_operand.vmem [shape: f32[1,16], index: 11, kind: input, shape index: {}]
  %s12 = inlined_call_operand.vmem [shape: f32[1,16], index: 12, kind: input, shape index: {}]
  %s13 = inlined_call_operand.vmem [shape: f32[32,32], index: 13, kind: input, shape index: {}]
  %s14 = inlined_call_operand.vmem [shape: f32[1,32], index: 14, kind: input, shape index: {}]
  %s15 = inlined_call_operand.vmem [shape: f32[16,32], index: 15, kind: input, shape index: {}]
  %s16 = inlined_call_operand.vmem [shape: f32[1,32], index: 16, kind: input, shape index: {}]
  %s17 = inlined_call_operand.vmem [shape: f32[16,32], index: 17, kind: input, shape index: {}]
  %s18 = inlined_call_operand.vmem [shape: f32[1,32], index: 18, kind: input, shape index: {}]
  %s19 = inlined_call_operand.vmem [shape: f32[32,32], index: 19, kind: input, shape index: {}]
  %s20 = inlined_call_operand.vmem [shape: f32[1,32], index: 20, kind: input, shape index: {}]
  %s21 = inlined_call_operand.hbm [shape: f32[32,32], index: 21, kind: output, shape index: {0}]
  %s22 = inlined_call_operand.hbm [shape: f32[2,32,32], index: 22, kind: output, shape index: {1}]
  %23 = xla_tuple %s21, %s22
  %s24 = sld [smem:[#allocation0]]
  $region125: #{lime_layer.1} parent=0
    _
  %s26 = ssub.s32 1, %s24
  %s27 = scalar_select 0, %s26, %s24
  $region1: #{lime_layer.1} parent=0
    #allocation7 [shape = 'u8[16384]{0}', space=vmem, size = 0x4000, scoped, tag = 'output window, operand 0']
    #allocation8 [shape = 's32[2]{0}', space=sflag, size = 0x8, scoped, tag = 'scoped memory for lime_layer.1']
    #allocation9 [shape = 'u8[32768]{0}', space=vmem, size = 0x8000, scoped, tag = 'output window, operand 1']
    #allocation10 [shape = 's32[2]{0}', space=sflag, size = 0x8, scoped, tag = 'scoped memory for lime_layer.1']
    %28 = vsyncpa [#allocation8], 0
    %s29 = scalar_lea.sflag [#allocation8], 1
    %30 = vsyncpa %s29, 0
    %31 = vsyncpa [#allocation10], 0
    %s32 = scalar_lea.sflag [#allocation10], 1
    %33 = vsyncpa %s32, 0
    loop: start=0, step=1, limit=4
    $region2: #{lime_layer.1} parent=1 // loop_pre_header
      _
    $region3: #{lime_layer.1} parent=1 // loop_header
      %s35 = sphi 0, %s39
      %p36 = scmp.ge.s32.totalorder %s35, 4
      %s45 = sphi 0, %s47
      %s48 = sphi 0, %s45
      %s49 = sphi 0, %s48
      %s65 = sphi 0, %s49
      %s71 = sphi 0, %s73
      %s74 = sphi 0, %s71
      %s75 = sphi 0, %s74
      %s91 = sphi 0, %s75
      %s97 = sphi 0, %s99
      %s100 = sphi 0, %s97
      %s101 = sphi 0, %s100
      %s117 = sphi 0, %s101
      %s121 = sphi 0, %s121
      %s123 = sphi 0, %s121
      %s124 = sphi 0, %s123
      %s138 = sphi 0, %s124
      %s142 = sphi 0, %s142
      %s144 = sphi 0, %s142
      %s145 = sphi 0, %s144
      %s159 = sphi 0, %s145
      %s163 = sphi 0, %s163
      %s165 = sphi 0, %s163
      %s166 = sphi 0, %s165
      %s180 = sphi 0, %s166
      %s184 = sphi 0, %s184
      %s186 = sphi 0, %s184
      %s187 = sphi 0, %s186
      %s201 = sphi 0, %s187
      %s205 = sphi 0, %s205
      %s207 = sphi 0, %s205
      %s208 = sphi 0, %s207
      %s222 = sphi 0, %s208
      %s226 = sphi 0, %s226
      %s228 = sphi 0, %s226
      %s229 = sphi 0, %s228
      %s243 = sphi 0, %s229
      %s247 = sphi 0, %s247
      %s249 = sphi 0, %s247
      %s250 = sphi 0, %s249
      %s264 = sphi 0, %s250
      %s268 = sphi 0, %s268
      %s270 = sphi 0, %s268
      %s271 = sphi 0, %s270
      %s285 = sphi 0, %s271
      %s289 = sphi 0, %s289
      %s291 = sphi 0, %s289
      %s292 = sphi 0, %s291
      %s306 = sphi 0, %s292
      %s310 = sphi 0, %s310
      %s312 = sphi 0, %s310
      %s313 = sphi 0, %s312
      %s327 = sphi 0, %s313
      %s331 = sphi 0, %s331
      %s333 = sphi 0, %s331
      %s334 = sphi 0, %s333
      %s348 = sphi 0, %s334
      %s352 = sphi 0, %s352
      %s354 = sphi 0, %s352
      %s355 = sphi 0, %s354
      %s369 = sphi 0, %s355
      %s373 = sphi 0, %s373
      %s375 = sphi 0, %s373
      %s376 = sphi 0, %s375
      %s390 = sphi 0, %s376
      %s394 = sphi 0, %s394
      %s396 = sphi 0, %s394
      %s397 = sphi 0, %s396
      %s411 = sphi 0, %s397
      %s415 = sphi 0, %s415
      %s417 = sphi 0, %s415
      %s418 = sphi 0, %s417
      %s432 = sphi 0, %s418
      %s436 = sphi 0, %s436
      %s438 = sphi 0, %s436
      %s439 = sphi 0, %s438
      %s453 = sphi 0, %s439
      %s457 = sphi 0, %s457
      %s459 = sphi 0, %s457
      %s460 = sphi 0, %s459
      %s474 = sphi 0, %s460
      %s478 = sphi 0, %s478
      %s480 = sphi 0, %s478
      %s481 = sphi 0, %s480
      %s495 = sphi 0, %s481
      %s501 = sphi 0, %s503
      %s504 = sphi 0, %s501
      %s505 = sphi 0, %s504
      %s521 = sphi 0, %s505
      %s527 = sphi 0, %s529
      %s530 = sphi 0, %s527
      %s531 = sphi 0, %s530
      %s547 = sphi 0, %s531
    $region4: #{lime_layer.1} parent=1 // loop_header_branch
      %38 = sbr.rel (%p36) target = $region8
    $region5: #{lime_layer.1} parent=1 // loop_body
      %s40 = ssub.s32 %s35, 1
      %s41 = ssub.s32 %s35, 2
      %s42 = sadd.s32 %s35, 1
      %s43 = ssub.s32 %s35, %s42
      %p44 = scmp.eq.s32.totalorder %s43, 0
      %s46 = sadd.s32 %s45, 1
      %s47 = scalar_select %p44, %s45, %s46
      %p50 = pneg %p44
      %p51 = scmp.eq.s32.totalorder %s35, 1
      %p52 = por %p50, %p51
      %p53 = scmp.ne.s32.totalorder %s45, %s48
      %p54 = scmp.eq.s32.totalorder %s35, 0
      %p55 = por %p53, %p54
      %p56 = scmp.ne.s32.totalorder %s45, %s48
      %p57 = scmp.eq.s32.totalorder %s40, 1
      %p58 = por %p56, %p57
      %p59 = scmp.ne.s32.totalorder %s48, %s49
      %p60 = scmp.eq.s32.totalorder %s40, 0
      %p61 = por %p59, %p60
      %p62 = scmp.ne.s32.totalorder %s48, %s49
      %p63 = scmp.eq.s32.totalorder %s41, 1
      %p64 = por %p62, %p63
      %p66 = scmp.ne.s32.totalorder %s49, %s65
      %p67 = scmp.eq.s32.totalorder %s41, 0
      %p68 = por %p66, %p67
      %s69 = ssub.s32 %s35, %s42
      %p70 = scmp.eq.s32.totalorder %s69, 0
      %s72 = sadd.s32 %s71, 1
      %s73 = scalar_select %p70, %s71, %s72
      %p76 = pneg %p70
      %p77 = scmp.eq.s32.totalorder %s35, 1
      %p78 = por %p76, %p77
      %p79 = scmp.ne.s32.totalorder %s71, %s74
      %p80 = scmp.eq.s32.totalorder %s35, 0
      %p81 = por %p79, %p80
      %p82 = scmp.ne.s32.totalorder %s71, %s74
      %p83 = scmp.eq.s32.totalorder %s40, 1
      %p84 = por %p82, %p83
      %p85 = scmp.ne.s32.totalorder %s74, %s75
      %p86 = scmp.eq.s32.totalorder %s40, 0
      %p87 = por %p85, %p86
      %p88 = scmp.ne.s32.totalorder %s74, %s75
      %p89 = scmp.eq.s32.totalorder %s41, 1
      %p90 = por %p88, %p89
      %p92 = scmp.ne.s32.totalorder %s75, %s91
      %p93 = scmp.eq.s32.totalorder %s41, 0
      %p94 = por %p92, %p93
      %s95 = ssub.s32 %s35, %s42
      %p96 = scmp.eq.s32.totalorder %s95, 0
      %s98 = sadd.s32 %s97, 1
      %s99 = scalar_select %p96, %s97, %s98
      %p102 = pneg %p96
      %p103 = scmp.eq.s32.totalorder %s35, 1
      %p104 = por %p102, %p103
      %p105 = scmp.ne.s32.totalorder %s97, %s100
      %p106 = scmp.eq.s32.totalorder %s35, 0
      %p107 = por %p105, %p106
      %p108 = scmp.ne.s32.totalorder %s97, %s100
      %p109 = scmp.eq.s32.totalorder %s40, 1
      %p110 = por %p108, %p109
      %p111 = scmp.ne.s32.totalorder %s100, %s101
      %p112 = scmp.eq.s32.totalorder %s40, 0
      %p113 = por %p111, %p112
      %p114 = scmp.ne.s32.totalorder %s100, %s101
      %p115 = scmp.eq.s32.totalorder %s41, 1
      %p116 = por %p114, %p115
      %p118 = scmp.ne.s32.totalorder %s101, %s117
      %p119 = scmp.eq.s32.totalorder %s41, 0
      %p120 = por %p118, %p119
      %s122 = sadd.s32 %s121, 1
      %p125 = scmp.eq.s32.totalorder %s35, 1
      %p126 = scmp.ne.s32.totalorder %s121, %s123
      %p127 = scmp.eq.s32.totalorder %s35, 0
      %p128 = por %p126, %p127
      %p129 = scmp.ne.s32.totalorder %s121, %s123
      %p130 = scmp.eq.s32.totalorder %s40, 1
      %p131 = por %p129, %p130
      %p132 = scmp.ne.s32.totalorder %s123, %s124
      %p133 = scmp.eq.s32.totalorder %s40, 0
      %p134 = por %p132, %p133
      %p135 = scmp.ne.s32.totalorder %s123, %s124
      %p136 = scmp.eq.s32.totalorder %s41, 1
      %p137 = por %p135, %p136
      %p139 = scmp.ne.s32.totalorder %s124, %s138
      %p140 = scmp.eq.s32.totalorder %s41, 0
      %p141 = por %p139, %p140
      %s143 = sadd.s32 %s142, 1
      %p146 = scmp.eq.s32.totalorder %s35, 1
      %p147 = scmp.ne.s32.totalorder %s142, %s144
      %p148 = scmp.eq.s32.totalorder %s35, 0
      %p149 = por %p147, %p148
      %p150 = scmp.ne.s32.totalorder %s142, %s144
      %p151 = scmp.eq.s32.totalorder %s40, 1
      %p152 = por %p150, %p151
      %p153 = scmp.ne.s32.totalorder %s144, %s145
      %p154 = scmp.eq.s32.totalorder %s40, 0
      %p155 = por %p153, %p154
      %p156 = scmp.ne.s32.totalorder %s144, %s145
      %p157 = scmp.eq.s32.totalorder %s41, 1
      %p158 = por %p156, %p157
      %p160 = scmp.ne.s32.totalorder %s145, %s159
      %p161 = scmp.eq.s32.totalorder %s41, 0
      %p162 = por %p160, %p161
      %s164 = sadd.s32 %s163, 1
      %p167 = scmp.eq.s32.totalorder %s35, 1
      %p168 = scmp.ne.s32.totalorder %s163, %s165
      %p169 = scmp.eq.s32.totalorder %s35, 0
      %p170 = por %p168, %p169
      %p171 = scmp.ne.s32.totalorder %s163, %s165
      %p172 = scmp.eq.s32.totalorder %s40, 1
      %p173 = por %p171, %p172
      %p174 = scmp.ne.s32.totalorder %s165, %s166
      %p175 = scmp.eq.s32.totalorder %s40, 0
      %p176 = por %p174, %p175
      %p177 = scmp.ne.s32.totalorder %s165, %s166
      %p178 = scmp.eq.s32.totalorder %s41, 1
      %p179 = por %p177, %p178
      %p181 = scmp.ne.s32.totalorder %s166, %s180
      %p182 = scmp.eq.s32.totalorder %s41, 0
      %p183 = por %p181, %p182
      %s185 = sadd.s32 %s184, 1
      %p188 = scmp.eq.s32.totalorder %s35, 1
      %p189 = scmp.ne.s32.totalorder %s184, %s186
      %p190 = scmp.eq.s32.totalorder %s35, 0
      %p191 = por %p189, %p190
      %p192 = scmp.ne.s32.totalorder %s184, %s186
      %p193 = scmp.eq.s32.totalorder %s40, 1
      %p194 = por %p192, %p193
      %p195 = scmp.ne.s32.totalorder %s186, %s187
      %p196 = scmp.eq.s32.totalorder %s40, 0
      %p197 = por %p195, %p196
      %p198 = scmp.ne.s32.totalorder %s186, %s187
      %p199 = scmp.eq.s32.totalorder %s41, 1
      %p200 = por %p198, %p199
      %p202 = scmp.ne.s32.totalorder %s187, %s201
      %p203 = scmp.eq.s32.totalorder %s41, 0
      %p204 = por %p202, %p203
      %s206 = sadd.s32 %s205, 1
      %p209 = scmp.eq.s32.totalorder %s35, 1
      %p210 = scmp.ne.s32.totalorder %s205, %s207
      %p211 = scmp.eq.s32.totalorder %s35, 0
      %p212 = por %p210, %p211
      %p213 = scmp.ne.s32.totalorder %s205, %s207
      %p214 = scmp.eq.s32.totalorder %s40, 1
      %p215 = por %p213, %p214
      %p216 = scmp.ne.s32.totalorder %s207, %s208
      %p217 = scmp.eq.s32.totalorder %s40, 0
      %p218 = por %p216, %p217
      %p219 = scmp.ne.s32.totalorder %s207, %s208
      %p220 = scmp.eq.s32.totalorder %s41, 1
      %p221 = por %p219, %p220
      %p223 = scmp.ne.s32.totalorder %s208, %s222
      %p224 = scmp.eq.s32.totalorder %s41, 0
      %p225 = por %p223, %p224
      %s227 = sadd.s32 %s226, 1
      %p230 = scmp.eq.s32.totalorder %s35, 1
      %p231 = scmp.ne.s32.totalorder %s226, %s228
      %p232 = scmp.eq.s32.totalorder %s35, 0
      %p233 = por %p231, %p232
      %p234 = scmp.ne.s32.totalorder %s226, %s228
      %p235 = scmp.eq.s32.totalorder %s40, 1
      %p236 = por %p234, %p235
      %p237 = scmp.ne.s32.totalorder %s228, %s229
      %p238 = scmp.eq.s32.totalorder %s40, 0
      %p239 = por %p237, %p238
      %p240 = scmp.ne.s32.totalorder %s228, %s229
      %p241 = scmp.eq.s32.totalorder %s41, 1
      %p242 = por %p240, %p241
      %p244 = scmp.ne.s32.totalorder %s229, %s243
      %p245 = scmp.eq.s32.totalorder %s41, 0
      %p246 = por %p244, %p245
      %s248 = sadd.s32 %s247, 1
      %p251 = scmp.eq.s32.totalorder %s35, 1
      %p252 = scmp.ne.s32.totalorder %s247, %s249
      %p253 = scmp.eq.s32.totalorder %s35, 0
      %p254 = por %p252, %p253
      %p255 = scmp.ne.s32.totalorder %s247, %s249
      %p256 = scmp.eq.s32.totalorder %s40, 1
      %p257 = por %p255, %p256
      %p258 = scmp.ne.s32.totalorder %s249, %s250
      %p259 = scmp.eq.s32.totalorder %s40, 0
      %p260 = por %p258, %p259
      %p261 = scmp.ne.s32.totalorder %s249, %s250
      %p262 = scmp.eq.s32.totalorder %s41, 1
      %p263 = por %p261, %p262
      %p265 = scmp.ne.s32.totalorder %s250, %s264
      %p266 = scmp.eq.s32.totalorder %s41, 0
      %p267 = por %p265, %p266
      %s269 = sadd.s32 %s268, 1
      %p272 = scmp.eq.s32.totalorder %s35, 1
      %p273 = scmp.ne.s32.totalorder %s268, %s270
      %p274 = scmp.eq.s32.totalorder %s35, 0
      %p275 = por %p273, %p274
      %p276 = scmp.ne.s32.totalorder %s268, %s270
      %p277 = scmp.eq.s32.totalorder %s40, 1
      %p278 = por %p276, %p277
      %p279 = scmp.ne.s32.totalorder %s270, %s271
      %p280 = scmp.eq.s32.totalorder %s40, 0
      %p281 = por %p279, %p280
      %p282 = scmp.ne.s32.totalorder %s270, %s271
      %p283 = scmp.eq.s32.totalorder %s41, 1
      %p284 = por %p282, %p283
      %p286 = scmp.ne.s32.totalorder %s271, %s285
      %p287 = scmp.eq.s32.totalorder %s41, 0
      %p288 = por %p286, %p287
      %s290 = sadd.s32 %s289, 1
      %p293 = scmp.eq.s32.totalorder %s35, 1
      %p294 = scmp.ne.s32.totalorder %s289, %s291
      %p295 = scmp.eq.s32.totalorder %s35, 0
      %p296 = por %p294, %p295
      %p297 = scmp.ne.s32.totalorder %s289, %s291
      %p298 = scmp.eq.s32.totalorder %s40, 1
      %p299 = por %p297, %p298
      %p300 = scmp.ne.s32.totalorder %s291, %s292
      %p301 = scmp.eq.s32.totalorder %s40, 0
      %p302 = por %p300, %p301
      %p303 = scmp.ne.s32.totalorder %s291, %s292
      %p304 = scmp.eq.s32.totalorder %s41, 1
      %p305 = por %p303, %p304
      %p307 = scmp.ne.s32.totalorder %s292, %s306
      %p308 = scmp.eq.s32.totalorder %s41, 0
      %p309 = por %p307, %p308
      %s311 = sadd.s32 %s310, 1
      %p314 = scmp.eq.s32.totalorder %s35, 1
      %p315 = scmp.ne.s32.totalorder %s310, %s312
      %p316 = scmp.eq.s32.totalorder %s35, 0
      %p317 = por %p315, %p316
      %p318 = scmp.ne.s32.totalorder %s310, %s312
      %p319 = scmp.eq.s32.totalorder %s40, 1
      %p320 = por %p318, %p319
      %p321 = scmp.ne.s32.totalorder %s312, %s313
      %p322 = scmp.eq.s32.totalorder %s40, 0
      %p323 = por %p321, %p322
      %p324 = scmp.ne.s32.totalorder %s312, %s313
      %p325 = scmp.eq.s32.totalorder %s41, 1
      %p326 = por %p324, %p325
      %p328 = scmp.ne.s32.totalorder %s313, %s327
      %p329 = scmp.eq.s32.totalorder %s41, 0
      %p330 = por %p328, %p329
      %s332 = sadd.s32 %s331, 1
      %p335 = scmp.eq.s32.totalorder %s35, 1
      %p336 = scmp.ne.s32.totalorder %s331, %s333
      %p337 = scmp.eq.s32.totalorder %s35, 0
      %p338 = por %p336, %p337
      %p339 = scmp.ne.s32.totalorder %s331, %s333
      %p340 = scmp.eq.s32.totalorder %s40, 1
      %p341 = por %p339, %p340
      %p342 = scmp.ne.s32.totalorder %s333, %s334
      %p343 = scmp.eq.s32.totalorder %s40, 0
      %p344 = por %p342, %p343
      %p345 = scmp.ne.s32.totalorder %s333, %s334
      %p346 = scmp.eq.s32.totalorder %s41, 1
      %p347 = por %p345, %p346
      %p349 = scmp.ne.s32.totalorder %s334, %s348
      %p350 = scmp.eq.s32.totalorder %s41, 0
      %p351 = por %p349, %p350
      %s353 = sadd.s32 %s352, 1
      %p356 = scmp.eq.s32.totalorder %s35, 1
      %p357 = scmp.ne.s32.totalorder %s352, %s354
      %p358 = scmp.eq.s32.totalorder %s35, 0
      %p359 = por %p357, %p358
      %p360 = scmp.ne.s32.totalorder %s352, %s354
      %p361 = scmp.eq.s32.totalorder %s40, 1
      %p362 = por %p360, %p361
      %p363 = scmp.ne.s32.totalorder %s354, %s355
      %p364 = scmp.eq.s32.totalorder %s40, 0
      %p365 = por %p363, %p364
      %p366 = scmp.ne.s32.totalorder %s354, %s355
      %p367 = scmp.eq.s32.totalorder %s41, 1
      %p368 = por %p366, %p367
      %p370 = scmp.ne.s32.totalorder %s355, %s369
      %p371 = scmp.eq.s32.totalorder %s41, 0
      %p372 = por %p370, %p371
      %s374 = sadd.s32 %s373, 1
      %p377 = scmp.eq.s32.totalorder %s35, 1
      %p378 = scmp.ne.s32.totalorder %s373, %s375
      %p379 = scmp.eq.s32.totalorder %s35, 0
      %p380 = por %p378, %p379
      %p381 = scmp.ne.s32.totalorder %s373, %s375
      %p382 = scmp.eq.s32.totalorder %s40, 1
      %p383 = por %p381, %p382
      %p384 = scmp.ne.s32.totalorder %s375, %s376
      %p385 = scmp.eq.s32.totalorder %s40, 0
      %p386 = por %p384, %p385
      %p387 = scmp.ne.s32.totalorder %s375, %s376
      %p388 = scmp.eq.s32.totalorder %s41, 1
      %p389 = por %p387, %p388
      %p391 = scmp.ne.s32.totalorder %s376, %s390
      %p392 = scmp.eq.s32.totalorder %s41, 0
      %p393 = por %p391, %p392
      %s395 = sadd.s32 %s394, 1
      %p398 = scmp.eq.s32.totalorder %s35, 1
      %p399 = scmp.ne.s32.totalorder %s394, %s396
      %p400 = scmp.eq.s32.totalorder %s35, 0
      %p401 = por %p399, %p400
      %p402 = scmp.ne.s32.totalorder %s394, %s396
      %p403 = scmp.eq.s32.totalorder %s40, 1
      %p404 = por %p402, %p403
      %p405 = scmp.ne.s32.totalorder %s396, %s397
      %p406 = scmp.eq.s32.totalorder %s40, 0
      %p407 = por %p405, %p406
      %p408 = scmp.ne.s32.totalorder %s396, %s397
      %p409 = scmp.eq.s32.totalorder %s41, 1
      %p410 = por %p408, %p409
      %p412 = scmp.ne.s32.totalorder %s397, %s411
      %p413 = scmp.eq.s32.totalorder %s41, 0
      %p414 = por %p412, %p413
      %s416 = sadd.s32 %s415, 1
      %p419 = scmp.eq.s32.totalorder %s35, 1
      %p420 = scmp.ne.s32.totalorder %s415, %s417
      %p421 = scmp.eq.s32.totalorder %s35, 0
      %p422 = por %p420, %p421
      %p423 = scmp.ne.s32.totalorder %s415, %s417
      %p424 = scmp.eq.s32.totalorder %s40, 1
      %p425 = por %p423, %p424
      %p426 = scmp.ne.s32.totalorder %s417, %s418
      %p427 = scmp.eq.s32.totalorder %s40, 0
      %p428 = por %p426, %p427
      %p429 = scmp.ne.s32.totalorder %s417, %s418
      %p430 = scmp.eq.s32.totalorder %s41, 1
      %p431 = por %p429, %p430
      %p433 = scmp.ne.s32.totalorder %s418, %s432
      %p434 = scmp.eq.s32.totalorder %s41, 0
      %p435 = por %p433, %p434
      %s437 = sadd.s32 %s436, 1
      %p440 = scmp.eq.s32.totalorder %s35, 1
      %p441 = scmp.ne.s32.totalorder %s436, %s438
      %p442 = scmp.eq.s32.totalorder %s35, 0
      %p443 = por %p441, %p442
      %p444 = scmp.ne.s32.totalorder %s436, %s438
      %p445 = scmp.eq.s32.totalorder %s40, 1
      %p446 = por %p444, %p445
      %p447 = scmp.ne.s32.totalorder %s438, %s439
      %p448 = scmp.eq.s32.totalorder %s40, 0
      %p449 = por %p447, %p448
      %p450 = scmp.ne.s32.totalorder %s438, %s439
      %p451 = scmp.eq.s32.totalorder %s41, 1
      %p452 = por %p450, %p451
      %p454 = scmp.ne.s32.totalorder %s439, %s453
      %p455 = scmp.eq.s32.totalorder %s41, 0
      %p456 = por %p454, %p455
      %s458 = sadd.s32 %s457, 1
      %p461 = scmp.eq.s32.totalorder %s35, 1
      %p462 = scmp.ne.s32.totalorder %s457, %s459
      %p463 = scmp.eq.s32.totalorder %s35, 0
      %p464 = por %p462, %p463
      %p465 = scmp.ne.s32.totalorder %s457, %s459
      %p466 = scmp.eq.s32.totalorder %s40, 1
      %p467 = por %p465, %p466
      %p468 = scmp.ne.s32.totalorder %s459, %s460
      %p469 = scmp.eq.s32.totalorder %s40, 0
      %p470 = por %p468, %p469
      %p471 = scmp.ne.s32.totalorder %s459, %s460
      %p472 = scmp.eq.s32.totalorder %s41, 1
      %p473 = por %p471, %p472
      %p475 = scmp.ne.s32.totalorder %s460, %s474
      %p476 = scmp.eq.s32.totalorder %s41, 0
      %p477 = por %p475, %p476
      %s479 = sadd.s32 %s478, 1
      %p482 = scmp.eq.s32.totalorder %s35, 1
      %p483 = scmp.ne.s32.totalorder %s478, %s480
      %p484 = scmp.eq.s32.totalorder %s35, 0
      %p485 = por %p483, %p484
      %p486 = scmp.ne.s32.totalorder %s478, %s480
      %p487 = scmp.eq.s32.totalorder %s40, 1
      %p488 = por %p486, %p487
      %p489 = scmp.ne.s32.totalorder %s480, %s481
      %p490 = scmp.eq.s32.totalorder %s40, 0
      %p491 = por %p489, %p490
      %p492 = scmp.ne.s32.totalorder %s480, %s481
      %p493 = scmp.eq.s32.totalorder %s41, 1
      %p494 = por %p492, %p493
      %p496 = scmp.ne.s32.totalorder %s481, %s495
      %p497 = scmp.eq.s32.totalorder %s41, 0
      %p498 = por %p496, %p497
      %s499 = ssub.s32 %s35, %s42
      %p500 = scmp.eq.s32.totalorder %s499, 0
      %s502 = sadd.s32 %s501, 1
      %s503 = scalar_select %p500, %s501, %s502
      %p506 = pneg %p500
      %p507 = scmp.eq.s32.totalorder %s35, 1
      %p508 = por %p506, %p507
      %p509 = scmp.ne.s32.totalorder %s501, %s504
      %p510 = scmp.eq.s32.totalorder %s35, 0
      %p511 = por %p509, %p510
      %p512 = scmp.ne.s32.totalorder %s501, %s504
      %p513 = scmp.eq.s32.totalorder %s40, 1
      %p514 = por %p512, %p513
      %p515 = scmp.ne.s32.totalorder %s504, %s505
      %p516 = scmp.eq.s32.totalorder %s40, 0
      %p517 = por %p515, %p516
      %p518 = scmp.ne.s32.totalorder %s504, %s505
      %p519 = scmp.eq.s32.totalorder %s41, 1
      %p520 = por %p518, %p519
      %p522 = scmp.ne.s32.totalorder %s505, %s521
      %p523 = scmp.eq.s32.totalorder %s41, 0
      %p524 = por %p522, %p523
      %s525 = ssub.s32 %s35, %s42
      %p526 = scmp.eq.s32.totalorder %s525, 0
      %s528 = sadd.s32 %s527, 1
      %s529 = scalar_select %p526, %s527, %s528
      %p532 = pneg %p526
      %p533 = scmp.eq.s32.totalorder %s35, 1
      %p534 = por %p532, %p533
      %p535 = scmp.ne.s32.totalorder %s527, %s530
      %p536 = scmp.eq.s32.totalorder %s35, 0
      %p537 = por %p535, %p536
      %p538 = scmp.ne.s32.totalorder %s527, %s530
      %p539 = scmp.eq.s32.totalorder %s40, 1
      %p540 = por %p538, %p539
      %p541 = scmp.ne.s32.totalorder %s530, %s531
      %p542 = scmp.eq.s32.totalorder %s40, 0
      %p543 = por %p541, %p542
      %p544 = scmp.ne.s32.totalorder %s530, %s531
      %p545 = scmp.eq.s32.totalorder %s41, 1
      %p546 = por %p544, %p545
      %p548 = scmp.ne.s32.totalorder %s531, %s547
      %p549 = scmp.eq.s32.totalorder %s41, 0
      %p550 = por %p548, %p549
      %p551 = scmp.le.s32.totalorder 1, %s35
      %p552 = scmp.lt.s32.totalorder %s35, 3
      %p553 = pnand %p551, %p552
      %p554 = pneg %p553
      // Predicated region
      $region9: #{lime_layer.1} parent=5 // pred_check
        _
      $region10: #{lime_layer.1} parent=5 // pred_check_branch
        %556 = sbr.rel (%p553) target = $region12
      $region11: #{lime_layer.1} parent=5 // pred_region
        %s557 = ssub.s32 %s35, 1
        // Predicated region
        $region13: #{lime_layer.1} parent=11 // pred_check
          %p558 = pneg %p134
        $region14: #{lime_layer.1} parent=11 // pred_check_branch
          %560 = sbr.rel (%p558) target = $region16
        $region15: #{lime_layer.1} parent=11 // pred_region
          _
        $region16: #{lime_layer.1} parent=11 // pred_fallthru
          _
        // Predicated region
        $region17: #{lime_layer.1} parent=11 // pred_check
          %p561 = pneg %p155
        $region18: #{lime_layer.1} parent=11 // pred_check_branch
          %563 = sbr.rel (%p561) target = $region20
        $region19: #{lime_layer.1} parent=11 // pred_region
          _
        $region20: #{lime_layer.1} parent=11 // pred_fallthru
          _
        // Predicated region
        $region21: #{lime_layer.1} parent=11 // pred_check
          %p564 = pneg %p176
        $region22: #{lime_layer.1} parent=11 // pred_check_branch
          %566 = sbr.rel (%p564) target = $region24
        $region23: #{lime_layer.1} parent=11 // pred_region
          _
        $region24: #{lime_layer.1} parent=11 // pred_fallthru
          _
        // Predicated region
        $region25: #{lime_layer.1} parent=11 // pred_check
          %p567 = pneg %p197
        $region26: #{lime_layer.1} parent=11 // pred_check_branch
          %569 = sbr.rel (%p567) target = $region28
        $region27: #{lime_layer.1} parent=11 // pred_region
          _
        $region28: #{lime_layer.1} parent=11 // pred_fallthru
          _
        // Predicated region
        $region29: #{lime_layer.1} parent=11 // pred_check
          %p570 = pneg %p218
        $region30: #{lime_layer.1} parent=11 // pred_check_branch
          %572 = sbr.rel (%p570) target = $region32
        $region31: #{lime_layer.1} parent=11 // pred_region
          _
        $region32: #{lime_layer.1} parent=11 // pred_fallthru
          _
        // Predicated region
        $region33: #{lime_layer.1} parent=11 // pred_check
          %p573 = pneg %p239
        $region34: #{lime_layer.1} parent=11 // pred_check_branch
          %575 = sbr.rel (%p573) target = $region36
        $region35: #{lime_layer.1} parent=11 // pred_region
          _
        $region36: #{lime_layer.1} parent=11 // pred_fallthru
          _
        // Predicated region
        $region37: #{lime_layer.1} parent=11 // pred_check
          %p576 = pneg %p260
        $region38: #{lime_layer.1} parent=11 // pred_check_branch
          %578 = sbr.rel (%p576) target = $region40
        $region39: #{lime_layer.1} parent=11 // pred_region
          _
        $region40: #{lime_layer.1} parent=11 // pred_fallthru
          _
        // Predicated region
        $region41: #{lime_layer.1} parent=11 // pred_check
          %p579 = pneg %p281
        $region42: #{lime_layer.1} parent=11 // pred_check_branch
          %581 = sbr.rel (%p579) target = $region44
        $region43: #{lime_layer.1} parent=11 // pred_region
          _
        $region44: #{lime_layer.1} parent=11 // pred_fallthru
          _
        // Predicated region
        $region45: #{lime_layer.1} parent=11 // pred_check
          %p582 = pneg %p302
        $region46: #{lime_layer.1} parent=11 // pred_check_branch
          %584 = sbr.rel (%p582) target = $region48
        $region47: #{lime_layer.1} parent=11 // pred_region
          _
        $region48: #{lime_layer.1} parent=11 // pred_fallthru
          _
        // Predicated region
        $region49: #{lime_layer.1} parent=11 // pred_check
          %p585 = pneg %p323
        $region50: #{lime_layer.1} parent=11 // pred_check_branch
          %587 = sbr.rel (%p585) target = $region52
        $region51: #{lime_layer.1} parent=11 // pred_region
          _
        $region52: #{lime_layer.1} parent=11 // pred_fallthru
          _
        // Predicated region
        $region53: #{lime_layer.1} parent=11 // pred_check
          %p588 = pneg %p344
        $region54: #{lime_layer.1} parent=11 // pred_check_branch
          %590 = sbr.rel (%p588) target = $region56
        $region55: #{lime_layer.1} parent=11 // pred_region
          _
        $region56: #{lime_layer.1} parent=11 // pred_fallthru
          _
        // Predicated region
        $region57: #{lime_layer.1} parent=11 // pred_check
          %p591 = pneg %p365
        $region58: #{lime_layer.1} parent=11 // pred_check_branch
          %593 = sbr.rel (%p591) target = $region60
        $region59: #{lime_layer.1} parent=11 // pred_region
          _
        $region60: #{lime_layer.1} parent=11 // pred_fallthru
          _
        // Predicated region
        $region61: #{lime_layer.1} parent=11 // pred_check
          %p594 = pneg %p386
        $region62: #{lime_layer.1} parent=11 // pred_check_branch
          %596 = sbr.rel (%p594) target = $region64
        $region63: #{lime_layer.1} parent=11 // pred_region
          _
        $region64: #{lime_layer.1} parent=11 // pred_fallthru
          _
        // Predicated region
        $region65: #{lime_layer.1} parent=11 // pred_check
          %p597 = pneg %p407
        $region66: #{lime_layer.1} parent=11 // pred_check_branch
          %599 = sbr.rel (%p597) target = $region68
        $region67: #{lime_layer.1} parent=11 // pred_region
          _
        $region68: #{lime_layer.1} parent=11 // pred_fallthru
          _
        // Predicated region
        $region69: #{lime_layer.1} parent=11 // pred_check
          %p600 = pneg %p428
        $region70: #{lime_layer.1} parent=11 // pred_check_branch
          %602 = sbr.rel (%p600) target = $region72
        $region71: #{lime_layer.1} parent=11 // pred_region
          _
        $region72: #{lime_layer.1} parent=11 // pred_fallthru
          _
        // Predicated region
        $region73: #{lime_layer.1} parent=11 // pred_check
          %p603 = pneg %p449
        $region74: #{lime_layer.1} parent=11 // pred_check_branch
          %605 = sbr.rel (%p603) target = $region76
        $region75: #{lime_layer.1} parent=11 // pred_region
          _
        $region76: #{lime_layer.1} parent=11 // pred_fallthru
          _
        // Predicated region
        $region77: #{lime_layer.1} parent=11 // pred_check
          %p606 = pneg %p470
        $region78: #{lime_layer.1} parent=11 // pred_check_branch
          %608 = sbr.rel (%p606) target = $region80
        $region79: #{lime_layer.1} parent=11 // pred_region
          _
        $region80: #{lime_layer.1} parent=11 // pred_fallthru
          _
        // Predicated region
        $region81: #{lime_layer.1} parent=11 // pred_check
          %p609 = pneg %p491
        $region82: #{lime_layer.1} parent=11 // pred_check_branch
          %611 = sbr.rel (%p609) target = $region84
        $region83: #{lime_layer.1} parent=11 // pred_region
          _
        $region84: #{lime_layer.1} parent=11 // pred_fallthru
          _
      $region12: #{lime_layer.1} parent=5 // pred_fallthru
        _
      %p612 = scmp.lt.s32.totalorder %s35, 2
      // Predicated region
      $region85: #{lime_layer.1} parent=5 // pred_check
        %p613 = pneg %p612
      $region86: #{lime_layer.1} parent=5 // pred_check_branch
        %615 = sbr.rel (%p613) target = $region88
      $region87: #{lime_layer.1} parent=5 // pred_region
        // Predicated region
        $region89: #{lime_layer.1} parent=87 // pred_check
          %p616 = pneg %p55
        $region90: #{lime_layer.1} parent=87 // pred_check_branch
          %618 = sbr.rel (%p616) target = $region92
        $region91: #{lime_layer.1} parent=87 // pred_region
          %s619 = smul.u32 2, %s35
          %p620 = scmp.lt.s32.totalorder %s619, 3
          %s621 = scalar_select %p620, %s619, 3
          %s622 = smul.addr %s621, 8
          %s623 = scalar_lea.vmem %s0, %s622
          %s624 = smul.u32 2, %s35
        $region92: #{lime_layer.1} parent=87 // pred_fallthru
          _
        // Predicated region
        $region93: #{lime_layer.1} parent=87 // pred_check
          %p625 = pneg %p81
        $region94: #{lime_layer.1} parent=87 // pred_check_branch
          %627 = sbr.rel (%p625) target = $region96
        $region95: #{lime_layer.1} parent=87 // pred_region
          %s628 = smul.u32 2, %s35
          %p629 = scmp.lt.s32.totalorder %s628, 3
          %s630 = scalar_select %p629, %s628, 3
          %s631 = smul.addr %s630, 8
          %s632 = scalar_lea.vmem %s1, %s631
          %s633 = smul.u32 2, %s35
        $region96: #{lime_layer.1} parent=87 // pred_fallthru
          _
        // Predicated region
        $region97: #{lime_layer.1} parent=87 // pred_check
          %p634 = pneg %p107
        $region98: #{lime_layer.1} parent=87 // pred_check_branch
          %636 = sbr.rel (%p634) target = $region100
        $region99: #{lime_layer.1} parent=87 // pred_region
          %s637 = smul.u32 2, %s35
          %p638 = scmp.lt.s32.totalorder %s637, 3
          %s639 = scalar_select %p638, %s637, 3
          %s640 = smul.addr %s639, 8
          %s641 = scalar_lea.vmem %s2, %s640
          %s642 = smul.u32 2, %s35
        $region100: #{lime_layer.1} parent=87 // pred_fallthru
          _
      $region88: #{lime_layer.1} parent=5 // pred_fallthru
        _
      %p643 = scmp.le.s32.totalorder 1, %s35
      %p644 = scmp.lt.s32.totalorder %s35, 3
      %p645 = pnand %p643, %p644
      %p646 = pneg %p645
      // Predicated region
      $region101: #{lime_layer.1} parent=5 // pred_check
        _
      $region102: #{lime_layer.1} parent=5 // pred_check_branch
        %648 = sbr.rel (%p645) target = $region104
      $region103: #{lime_layer.1} parent=5 // pred_region
        %s649 = ssub.s32 %s35, 1
        %s650 = smul.u32 2, %s40
        %p651 = scmp.lt.s32.totalorder %s650, 3
        %s652 = scalar_select %p651, %s650, 3
        %s653 = smul.addr %s652, 8
        %s654 = scalar_lea.vmem %s0, %s653
        %p655 = pneg %p61
        %p656 = pneg %p58
        %s657 = smul.u32 2, %s40
        %p658 = scmp.lt.s32.totalorder %s657, 3
        %s659 = scalar_select %p658, %s657, 3
        %s660 = smul.addr %s659, 8
        %s661 = scalar_lea.vmem %s1, %s660
        %p662 = pneg %p87
        %p663 = pneg %p84
        %s664 = smul.u32 2, %s40
        %p665 = scmp.lt.s32.totalorder %s664, 3
        %s666 = scalar_select %p665, %s664, 3
        %s667 = smul.addr %s666, 8
        %s668 = scalar_lea.vmem %s2, %s667
        %p669 = pneg %p113
        %p670 = pneg %p110
        %p671 = pneg %p134
        %p672 = pneg %p131
        %p673 = pneg %p155
        %p674 = pneg %p152
        %p675 = pneg %p176
        %p676 = pneg %p173
        %p677 = pneg %p197
        %p678 = pneg %p194
        %p679 = pneg %p218
        %p680 = pneg %p215
        %p681 = pneg %p239
        %p682 = pneg %p236
        %p683 = pneg %p260
        %p684 = pneg %p257
        %p685 = pneg %p281
        %p686 = pneg %p278
        %p687 = pneg %p302
        %p688 = pneg %p299
        %p689 = pneg %p323
        %p690 = pneg %p320
        %p691 = pneg %p344
        %p692 = pneg %p341
        %p693 = pneg %p365
        %p694 = pneg %p362
        %p695 = pneg %p386
        %p696 = pneg %p383
        %p697 = pneg %p407
        %p698 = pneg %p404
        %p699 = pneg %p428
        %p700 = pneg %p425
        %p701 = pneg %p449
        %p702 = pneg %p446
        %p703 = pneg %p470
        %p704 = pneg %p467
        %p705 = pneg %p491
        %p706 = pneg %p488
        %p707 = pneg %p517
        %p708 = pneg %p514
        %s709 = sand.u32 %s504, 1
        %s710 = scalar_lea.sflag [#allocation8], %s709
        %s711 = sand.u32 %s504, 1
        %s712 = smul.addr %s711, 16
        %s713 = scalar_lea.vmem [#allocation7], %s712
        %p714 = pneg %p543
        %p715 = pneg %p540
        %s716 = sand.u32 %s530, 1
        %s717 = scalar_lea.sflag [#allocation10], %s716
        %s718 = sand.u32 %s530, 1
        %s719 = smul.addr %s718, 32
        %s720 = scalar_lea.vmem [#allocation9], %s719
        %s721 = smul.u32 2, %s40
        %p722 = scmp.lt.s32.totalorder %s721, 3
        %s723 = scalar_select %p722, %s721, 3
        %s724 = smul.addr %s723, 8
        %s725 = scalar_lea.vmem %s0, %s724
        %s726 = smul.u32 2, %s40
        %s727 = smul.u32 2, %s40
        %p728 = scmp.lt.s32.totalorder %s727, 3
        %s729 = scalar_select %p728, %s727, 3
        %s730 = smul.addr %s729, 8
        %s731 = scalar_lea.vmem %s1, %s730
        %s732 = smul.u32 2, %s40
        %s733 = smul.u32 2, %s40
        %p734 = scmp.lt.s32.totalorder %s733, 3
        %s735 = scalar_select %p734, %s733, 3
        %s736 = smul.addr %s735, 8
        %s737 = scalar_lea.vmem %s2, %s736
        %s738 = smul.u32 2, %s40
        %s739 = smul.u32 2, %s40
        %v740 = vld [vmem:[%s731] sm:$0xff]
        %v741 = vld [vmem:[%s731 + $0x8] sm:$0xff]
        %v742 = vld [vmem:[%s3] sm:$0xff]
        %v743 = vld [vmem:[%s3 + $0x8] sm:$0xff]
        %v744 = vld [vmem:[%s3 + $0x10] sm:$0xff]
        %v745 = vld [vmem:[%s3 + $0x18] sm:$0xff]
        %v746 = vld [vmem:[%s4] sm:$0x1]
        %v748 = vlaneseq
        %v749 = vshrl.u32 %v748, 7
        %v750 = vsub.s32 0, %v749
        %v751 = vrot.slane %v746, %v750
        %vm753 = vcmask 261120
        %v755 = vsel %vm753, %v740, 0
        %v758 = vsel %vm753, %v741, 0
        %760 = vmatprep.subr.mxu0 0.0
        %761 = vmatpush1.msra.mxu0 %v742
        %762 = vmatprep.subr.mxu0 0.0
        %763 = vmatpush1.msra.mxu0 %v743
        %764 = vmatprep.subr.mxu0 0.0
        %765 = vmatpush1.msra.mxu0 %v744
        %766 = vmatprep.subr.mxu0 0.0
        %767 = vmatpush1.msra.mxu0 %v745
        %768 = vmatprep.subr.mxu0 0.0
        %769 = vmatpush1.msra.mxu0 0.0
        %770 = vmatprep.subr.mxu0 0.0
        %771 = vmatpush1.msra.mxu0 0.0
        %772 = vmatprep.subr.mxu0 0.0
        %773 = vmatpush1.msra.mxu0 0.0
        %774 = vmatprep.subr.mxu0 0.0
        %775 = vmatpush1.msra.mxu0 0.0
        %776 = vmatprep.subr.mxu0 0.0
        %777 = vmatpush1.msra.mxu0 0.0
        %778 = vmatprep.subr.mxu0 0.0
        %779 = vmatpush1.msra.mxu0 0.0
        %780 = vmatprep.subr.mxu0 0.0
        %781 = vmatpush1.msra.mxu0 0.0
        %782 = vmatprep.subr.mxu0 0.0
        %783 = vmatpush1.msra.mxu0 0.0
        %784 = vmatprep.subr.mxu0 0.0
        %785 = vmatpush1.msra.mxu0 0.0
        %786 = vmatprep.subr.mxu0 0.0
        %787 = vmatpush1.msra.mxu0 0.0
        %788 = vmatprep.subr.mxu0 0.0
        %789 = vmatpush1.msra.mxu0 0.0
        %790 = vmatprep.subr.mxu0 0.0
        %791 = vmatpush1.msra.mxu0 0.0
        %792 = vmatprep.subr.mxu0 0.0
        %793 = vmatpush1.msra.mxu0 0.0
        %794 = vmatprep.subr.mxu0 0.0
        %795 = vmatpush1.msra.mxu0 0.0
        %796 = vmatprep.subr.mxu0 0.0
        %797 = vmatpush1.msra.mxu0 0.0
        %798 = vmatprep.subr.mxu0 0.0
        %799 = vmatpush1.msra.mxu0 0.0
        %800 = vmatprep.subr.mxu0 0.0
        %801 = vmatpush1.msra.mxu0 0.0
        %802 = vmatprep.subr.mxu0 0.0
        %803 = vmatpush1.msra.mxu0 0.0
        %804 = vmatprep.subr.mxu0 0.0
        %805 = vmatpush1.msra.mxu0 0.0
        %806 = vmatprep.subr.mxu0 0.0
        %807 = vmatpush1.msra.mxu0 0.0
        %808 = vmatprep.subr.mxu0 0.0
        %809 = vmatpush1.msra.mxu0 0.0
        %810 = vmatprep.subr.mxu0 0.0
        %811 = vmatpush1.msra.mxu0 0.0
        %812 = vmatprep.subr.mxu0 0.0
        %813 = vmatpush1.msra.mxu0 0.0
        %814 = vmatprep.subr.mxu0 0.0
        %815 = vmatpush1.msra.mxu0 0.0
        %816 = vmatprep.subr.mxu0 0.0
        %817 = vmatpush1.msra.mxu0 0.0
        %818 = vmatprep.subr.mxu0 0.0
        %819 = vmatpush1.msra.mxu0 0.0
        %820 = vmatprep.subr.mxu0 0.0
        %821 = vmatpush1.msra.mxu0 0.0
        %822 = vmatprep.subr.mxu0 0.0
        %823 = vmatpush1.msra.mxu0 0.0
        %824 = vmatprep.mubr.f32.mxu0 0.0
        %825 = vmatmul.mubr.f32.gmra.mrb[0].mxu0 %v755
        %v826 = vpop.f32.mrb[0].mxu0
        %v827 = vadd.f32 %v751, %v826
        %v828 = vpop.f32.mrb[0].mxu0
        %829 = vmatprep.mubr.f32.mxu0 0.0
        %830 = vmatmul.mubr.f32.gmra.mrb[0].mxu0 %v758
        %v831 = vpop.f32.mrb[0].mxu0
        %v832 = vadd.f32 %v751, %v831
        %v833 = vpop.f32.mrb[0].mxu0
        %834 = vdwg.mxu0
        %v835 = vmul.f32 %v827, 0.70710677
        %v836 = vmul.f32 %v832, 0.70710677
        %v837 = vand.u32 2147483647, %v835
        %v838 = vand.u32 2147483647, %v836
        %v839 = vmul.f32 %v837, 0.3275911
        %v840 = vmul.f32 %v838, 0.3275911
        %v841 = vadd.f32 %v839, 1.0
        %v842 = vadd.f32 %v840, 1.0
        %v843 = vrcp.pop %v841
        %v844 = vmul.f32 1.0, %v843
        %v845 = vrcp.pop %v842
        %v846 = vmul.f32 1.0, %v845
        %v847 = vmul.f32 %v844, 1.0614054
        %v848 = vmul.f32 %v846, 1.0614054
        %v849 = vadd.f32 %v847, -1.4531521
        %v850 = vadd.f32 %v848, -1.4531521
        %v851 = vmul.f32 %v844, %v849
        %v852 = vmul.f32 %v846, %v850
        %v853 = vadd.f32 %v851, 1.4214138
        %v854 = vadd.f32 %v852, 1.4214138
        %v855 = vmul.f32 %v844, %v853
        %v856 = vmul.f32 %v846, %v854
        %v857 = vadd.f32 %v855, -0.28449672
        %v858 = vadd.f32 %v856, -0.28449672
        %v859 = vmul.f32 %v844, %v857
        %v860 = vmul.f32 %v846, %v858
        %v861 = vadd.f32 %v859, 0.2548296
        %v862 = vadd.f32 %v860, 0.2548296
        %v863 = vmul.f32 %v844, %v861
        %v864 = vmul.f32 %v846, %v862
        %v865 = vsub.f32 0.0, %v837
        %v866 = vsub.f32 0.0, %v838
        %v867 = vmul.f32 %v865, %v837
        %v868 = vmul.f32 %v866, %v838
        %v869 = vmul.f32 %v867, 1.442695
        %v870 = vpow.pop %v869
        %v871 = vmul.f32 %v868, 1.442695
        %v872 = vpow.pop %v871
        %v873 = vmul.f32 %v863, %v870
        %v874 = vmul.f32 %v864, %v872
        %v875 = vsub.f32 1.0, %v873
        %v876 = vsub.f32 1.0, %v874
        %vm877 = vcmp.lt.f32.partialorder %v835, 0.0
        %vm878 = vcmp.lt.f32.partialorder %v836, 0.0
        %v879 = vsub.f32 0.0, %v875
        %v880 = vsub.f32 0.0, %v876
        %v881 = vsel %vm877, %v879, %v875
        %v882 = vsel %vm878, %v880, %v876
        %v883 = vmul.f32 %v827, 0.5
        %v884 = vmul.f32 %v832, 0.5
        %v885 = vadd.f32 %v881, 1.0
        %v886 = vadd.f32 %v882, 1.0
        %v887 = vmul.f32 %v883, %v885
        %v888 = vmul.f32 %v884, %v886
        %889 = vst.msk [vmem:[#allocation2] sm:$0xff] %vm753, 0.0
        %890 = vst.msk [vmem:[#allocation2 + $0x18] sm:$0xff] %vm753, 0.0
        %891 = vst.msk [vmem:[#allocation2 + $0x8] sm:$0xff] %vm753, %v887
        %892 = vst.msk [vmem:[#allocation2 + $0x10] sm:$0xff] %vm753, %v888
        %v893 = vld [vmem:[%s725] sm:$0xff]
        %v894 = vld [vmem:[%s725 + $0x8] sm:$0xff]
        %v895 = vand.u32 %v893, 1
        %v896 = vand.u32 %v894, 1
        %vm897 = vcmp.gt.s32.totalorder %v895, 0
        %vm898 = vcmp.gt.s32.totalorder %v896, 0
        %v899 = vand.u32 %v893, 2
        %v900 = vand.u32 %v894, 2
        %vm901 = vcmp.gt.s32.totalorder %v899, 0
        %vm902 = vcmp.gt.s32.totalorder %v900, 0
        %v903 = vand.u32 %v893, 4
        %v904 = vand.u32 %v894, 4
        %vm905 = vcmp.gt.s32.totalorder %v903, 0
        %vm906 = vcmp.gt.s32.totalorder %v904, 0
        %v907 = vand.u32 %v893, 8
        %v908 = vand.u32 %v894, 8
        %vm909 = vcmp.gt.s32.totalorder %v907, 0
        %vm910 = vcmp.gt.s32.totalorder %v908, 0
        %v911 = vld [vmem:[#allocation2 + $0x3] sm:$0xff]
        %v912 = vld [vmem:[#allocation2 + $0xb] sm:$0xff]
        %v913 = vld [vmem:[#allocation2 + $0x4] sm:$0xff]
        %v914 = vld [vmem:[#allocation2 + $0xc] sm:$0xff]
        %v915 = vsel %vm897, 1, 0
        %v916 = vsel %vm898, 1, 0
        %917 = vset.pattern.permute.xlu0 0
        %918 = vperm.xlu0 %917, %v915
        %v919 = vpop.permute.xlu0 %918
        %920 = vset.pattern.permute.xlu0 0
        %921 = vperm.xlu0 %920, %v916
        %v922 = vpop.permute.xlu0 %921
        %vm923 = vcmp.eq.s32.totalorder %v919, 1
        %vm924 = vcmp.eq.s32.totalorder %v922, 1
        %v925 = vsel %vm923, %v911, %v913
        %v926 = vsel %vm924, %v912, %v914
        %v927 = vld [vmem:[#allocation2 + $0x7] sm:$0xff]
        %v928 = vld [vmem:[#allocation2 + $0xf] sm:$0xff]
        %v929 = vld [vmem:[#allocation2 + $0x8] sm:$0xff]
        %v930 = vld [vmem:[#allocation2 + $0x10] sm:$0xff]
        %v931 = vsel %vm923, %v927, %v929
        %v932 = vsel %vm924, %v928, %v930
        %v933 = vsel %vm905, 1, 0
        %v934 = vsel %vm906, 1, 0
        %935 = vset.pattern.permute.xlu0 0
        %936 = vperm.xlu0 %935, %v933
        %v937 = vpop.permute.xlu0 %936
        %938 = vset.pattern.permute.xlu0 0
        %939 = vperm.xlu0 %938, %v934
        %v940 = vpop.permute.xlu0 %939
        %vm941 = vcmp.eq.s32.totalorder %v937, 1
        %vm942 = vcmp.eq.s32.totalorder %v940, 1
        %v943 = vsel %vm941, %v925, %v931
        %v944 = vsel %vm942, %v926, %v932
        %v945 = vld [vmem:[%s5] sm:$0xff]
        %v946 = vld [vmem:[%s5 + $0x8] sm:$0xff]
        %v947 = vld [vmem:[%s5 + $0x10] sm:$0xff]
        %v948 = vld [vmem:[%s5 + $0x18] sm:$0xff]
        %v949 = vsel %vm941, %v913, %v929
        %v950 = vsel %vm942, %v914, %v930
        %s951 = scalar_lea.vmem %s5, 32
        %v952 = vld [vmem:[%s951] sm:$0xff]
        %v953 = vld [vmem:[%s951 + $0x8] sm:$0xff]
        %v954 = vld [vmem:[%s951 + $0x10] sm:$0xff]
        %v955 = vld [vmem:[%s951 + $0x18] sm:$0xff]
        %v957 = vsel %vm753, %v949, 0
        %v960 = vsel %vm753, %v950, 0
        %962 = vmatprep.subr.mxu0 0.0
        %963 = vmatpush1.msra.mxu0 %v952
        %964 = vmatprep.subr.mxu0 0.0
        %965 = vmatpush1.msra.mxu0 %v953
        %966 = vmatprep.subr.mxu0 0.0
        %967 = vmatpush1.msra.mxu0 %v954
        %968 = vmatprep.subr.mxu0 0.0
        %969 = vmatpush1.msra.mxu0 %v955
        %970 = vmatprep.subr.mxu0 0.0
        %971 = vmatpush1.msra.mxu0 0.0
        %972 = vmatprep.subr.mxu0 0.0
        %973 = vmatpush1.msra.mxu0 0.0
        %974 = vmatprep.subr.mxu0 0.0
        %975 = vmatpush1.msra.mxu0 0.0
        %976 = vmatprep.subr.mxu0 0.0
        %977 = vmatpush1.msra.mxu0 0.0
        %978 = vmatprep.subr.mxu0 0.0
        %979 = vmatpush1.msra.mxu0 0.0
        %980 = vmatprep.subr.mxu0 0.0
        %981 = vmatpush1.msra.mxu0 0.0
        %982 = vmatprep.subr.mxu0 0.0
        %983 = vmatpush1.msra.mxu0 0.0
        %984 = vmatprep.subr.mxu0 0.0
        %985 = vmatpush1.msra.mxu0 0.0
        %986 = vmatprep.subr.mxu0 0.0
        %987 = vmatpush1.msra.mxu0 0.0
        %988 = vmatprep.subr.mxu0 0.0
        %989 = vmatpush1.msra.mxu0 0.0
        %990 = vmatprep.subr.mxu0 0.0
        %991 = vmatpush1.msra.mxu0 0.0
        %992 = vmatprep.subr.mxu0 0.0
        %993 = vmatpush1.msra.mxu0 0.0
        %994 = vmatprep.subr.mxu0 0.0
        %995 = vmatpush1.msra.mxu0 0.0
        %996 = vmatprep.subr.mxu0 0.0
        %997 = vmatpush1.msra.mxu0 0.0
        %998 = vmatprep.subr.mxu0 0.0
        %999 = vmatpush1.msra.mxu0 0.0
        %1000 = vmatprep.subr.mxu0 0.0
        %1001 = vmatpush1.msra.mxu0 0.0
        %1002 = vmatprep.subr.mxu0 0.0
        %1003 = vmatpush1.msra.mxu0 0.0
        %1004 = vmatprep.subr.mxu0 0.0
        %1005 = vmatpush1.msra.mxu0 0.0
        %1006 = vmatprep.subr.mxu0 0.0
        %1007 = vmatpush1.msra.mxu0 0.0
        %1008 = vmatprep.subr.mxu0 0.0
        %1009 = vmatpush1.msra.mxu0 0.0
        %1010 = vmatprep.subr.mxu0 0.0
        %1011 = vmatpush1.msra.mxu0 0.0
        %1012 = vmatprep.subr.mxu0 0.0
        %1013 = vmatpush1.msra.mxu0 0.0
        %1014 = vmatprep.subr.mxu0 0.0
        %1015 = vmatpush1.msra.mxu0 0.0
        %1016 = vmatprep.subr.mxu0 0.0
        %1017 = vmatpush1.msra.mxu0 0.0
        %1018 = vmatprep.subr.mxu0 0.0
        %1019 = vmatpush1.msra.mxu0 0.0
        %1020 = vmatprep.subr.mxu0 0.0
        %1021 = vmatpush1.msra.mxu0 0.0
        %1022 = vmatprep.subr.mxu0 0.0
        %1023 = vmatpush1.msra.mxu0 0.0
        %1024 = vmatprep.subr.mxu0 0.0
        %1025 = vmatpush1.msra.mxu0 0.0
        %1026 = vmatprep.mubr.f32.mxu0 0.0
        %1027 = vmatmul.mubr.f32.gmra.mrb[0].mxu0 %v957
        %v1028 = vpop.f32.mrb[0].mxu0
        %v1029 = vadd.f32 0.0, %v1028
        %v1030 = vpop.f32.mrb[0].mxu0
        %1031 = vmatprep.mubr.f32.mxu0 0.0
        %1032 = vmatmul.mubr.f32.gmra.mrb[0].mxu0 %v960
        %v1033 = vpop.f32.mrb[0].mxu0
        %v1034 = vadd.f32 0.0, %v1033
        %v1035 = vpop.f32.mrb[0].mxu0
        %1036 = vdwg.mxu0
        %v1038 = vsel %vm753, %v943, 0
        %v1041 = vsel %vm753, %v944, 0
        %1043 = vmatprep.subr.mxu0 0.0
        %1044 = vmatpush1.msra.mxu0 %v945
        %1045 = vmatprep.subr.mxu0 0.0
        %1046 = vmatpush1.msra.mxu0 %v946
        %1047 = vmatprep.subr.mxu0 0.0
        %1048 = vmatpush1.msra.mxu0 %v947
        %1049 = vmatprep.subr.mxu0 0.0
        %1050 = vmatpush1.msra.mxu0 %v948
        %1051 = vmatprep.subr.mxu0 0.0
        %1052 = vmatpush1.msra.mxu0 0.0
        %1053 = vmatprep.subr.mxu0 0.0
        %1054 = vmatpush1.msra.mxu0 0.0
        %1055 = vmatprep.subr.mxu0 0.0
        %1056 = vmatpush1.msra.mxu0 0.0
        %1057 = vmatprep.subr.mxu0 0.0
        %1058 = vmatpush1.msra.mxu0 0.0
        %1059 = vmatprep.subr.mxu0 0.0
        %1060 = vmatpush1.msra.mxu0 0.0
        %1061 = vmatprep.subr.mxu0 0.0
        %1062 = vmatpush1.msra.mxu0 0.0
        %1063 = vmatprep.subr.mxu0 0.0
        %1064 = vmatpush1.msra.mxu0 0.0
        %1065 = vmatprep.subr.mxu0 0.0
        %1066 = vmatpush1.msra.mxu0 0.0
        %1067 = vmatprep.subr.mxu0 0.0
        %1068 = vmatpush1.msra.mxu0 0.0
        %1069 = vmatprep.subr.mxu0 0.0
        %1070 = vmatpush1.msra.mxu0 0.0
        %1071 = vmatprep.subr.mxu0 0.0
        %1072 = vmatpush1.msra.mxu0 0.0
        %1073 = vmatprep.subr.mxu0 0.0
        %1074 = vmatpush1.msra.mxu0 0.0
        %1075 = vmatprep.subr.mxu0 0.0
        %1076 = vmatpush1.msra.mxu0 0.0
        %1077 = vmatprep.subr.mxu0 0.0
        %1078 = vmatpush1.msra.mxu0 0.0
        %1079 = vmatprep.subr.mxu0 0.0
        %1080 = vmatpush1.msra.mxu0 0.0
        %1081 = vmatprep.subr.mxu0 0.0
        %1082 = vmatpush1.msra.mxu0 0.0
        %1083 = vmatprep.subr.mxu0 0.0
        %1084 = vmatpush1.msra.mxu0 0.0
        %1085 = vmatprep.subr.mxu0 0.0
        %1086 = vmatpush1.msra.mxu0 0.0
        %1087 = vmatprep.subr.mxu0 0.0
        %1088 = vmatpush1.msra.mxu0 0.0
        %1089 = vmatprep.subr.mxu0 0.0
        %1090 = vmatpush1.msra.mxu0 0.0
        %1091 = vmatprep.subr.mxu0 0.0
        %1092 = vmatpush1.msra.mxu0 0.0
        %1093 = vmatprep.subr.mxu0 0.0
        %1094 = vmatpush1.msra.mxu0 0.0
        %1095 = vmatprep.subr.mxu0 0.0
        %1096 = vmatpush1.msra.mxu0 0.0
        %1097 = vmatprep.subr.mxu0 0.0
        %1098 = vmatpush1.msra.mxu0 0.0
        %1099 = vmatprep.subr.mxu0 0.0
        %1100 = vmatpush1.msra.mxu0 0.0
        %1101 = vmatprep.subr.mxu0 0.0
        %1102 = vmatpush1.msra.mxu0 0.0
        %1103 = vmatprep.subr.mxu0 0.0
        %1104 = vmatpush1.msra.mxu0 0.0
        %1105 = vmatprep.subr.mxu0 0.0
        %1106 = vmatpush1.msra.mxu0 0.0
        %1107 = vmatprep.mubr.f32.mxu0 0.0
        %1108 = vmatmul.mubr.f32.gmra.mrb[0].mxu0 %v1038
        %v1109 = vpop.f32.mrb[0].mxu0
        %v1110 = vadd.f32 %v1029, %v1109
        %v1111 = vpop.f32.mrb[0].mxu0
        %1112 = vmatprep.mubr.f32.mxu0 0.0
        %1113 = vmatmul.mubr.f32.gmra.mrb[0].mxu0 %v1041
        %v1114 = vpop.f32.mrb[0].mxu0
        %v1115 = vadd.f32 %v1034, %v1114
        %v1116 = vpop.f32.mrb[0].mxu0
        %1117 = vdwg.mxu0
        %v1118 = vld [vmem:[#allocation2 + $0x5] sm:$0xff]
        %v1119 = vld [vmem:[#allocation2 + $0xd] sm:$0xff]
        %v1120 = vsel %vm901, 1, 0
        %v1121 = vsel %vm902, 1, 0
        %1122 = vset.pattern.permute.xlu0 0
        %1123 = vperm.xlu0 %1122, %v1120
        %v1124 = vpop.permute.xlu0 %1123
        %1125 = vset.pattern.permute.xlu0 0
        %1126 = vperm.xlu0 %1125, %v1121
        %v1127 = vpop.permute.xlu0 %1126
        %vm1128 = vcmp.eq.s32.totalorder %v1124, 1
        %vm1129 = vcmp.eq.s32.totalorder %v1127, 1
        %v1130 = vsel %vm1128, %v1118, %v913
        %v1131 = vsel %vm1129, %v1119, %v914
        %v1132 = vld [vmem:[#allocation2 + $0x9] sm:$0xff]
        %v1133 = vld [vmem:[#allocation2 + $0x11] sm:$0xff]
        %v1134 = vsel %vm1128, %v1132, %v929
        %v1135 = vsel %vm1129, %v1133, %v930
        %v1136 = vsel %vm941, %v1130, %v1134
        %v1137 = vsel %vm942, %v1131, %v1135
        %s1138 = scalar_lea.vmem %s5, 64
        %v1139 = vld [vmem:[%s1138] sm:$0xff]
        %v1140 = vld [vmem:[%s1138 + $0x8] sm:$0xff]
        %v1141 = vld [vmem:[%s1138 + $0x10] sm:$0xff]
        %v1142 = vld [vmem:[%s1138 + $0x18] sm:$0xff]
        %v1144 = vsel %vm753, %v1136, 0
        %v1147 = vsel %vm753, %v1137, 0
        %1149 = vmatprep.subr.mxu0 0.0
        %1150 = vmatpush1.msra.mxu0 %v1139
        %1151 = vmatprep.subr.mxu0 0.0
        %1152 = vmatpush1.msra.mxu0 %v1140
        %1153 = vmatprep.subr.mxu0 0.0
        %1154 = vmatpush1.msra.mxu0 %v1141
        %1155 = vmatprep.subr.mxu0 0.0
        %1156 = vmatpush1.msra.mxu0 %v1142
        %1157 = vmatprep.subr.mxu0 0.0
        %1158 = vmatpush1.msra.mxu0 0.0
        %1159 = vmatprep.subr.mxu0 0.0
        %1160 = vmatpush1.msra.mxu0 0.0
        %1161 = vmatprep.subr.mxu0 0.0
        %1162 = vmatpush1.msra.mxu0 0.0
        %1163 = vmatprep.subr.mxu0 0.0
        %1164 = vmatpush1.msra.mxu0 0.0
        %1165 = vmatprep.subr.mxu0 0.0
        %1166 = vmatpush1.msra.mxu0 0.0
        %1167 = vmatprep.subr.mxu0 0.0
        %1168 = vmatpush1.msra.mxu0 0.0
        %1169 = vmatprep.subr.mxu0 0.0
        %1170 = vmatpush1.msra.mxu0 0.0
        %1171 = vmatprep.subr.mxu0 0.0
        %1172 = vmatpush1.msra.mxu0 0.0
        %1173 = vmatprep.subr.mxu0 0.0
        %1174 = vmatpush1.msra.mxu0 0.0
        %1175 = vmatprep.subr.mxu0 0.0
        %1176 = vmatpush1.msra.mxu0 0.0
        %1177 = vmatprep.subr.mxu0 0.0
        %1178 = vmatpush1.msra.mxu0 0.0
        %1179 = vmatprep.subr.mxu0 0.0
        %1180 = vmatpush1.msra.mxu0 0.0
        %1181 = vmatprep.subr.mxu0 0.0
        %1182 = vmatpush1.msra.mxu0 0.0
        %1183 = vmatprep.subr.mxu0 0.0
        %1184 = vmatpush1.msra.mxu0 0.0
        %1185 = vmatprep.subr.mxu0 0.0
        %1186 = vmatpush1.msra.mxu0 0.0
        %1187 = vmatprep.subr.mxu0 0.0
        %1188 = vmatpush1.msra.mxu0 0.0
        %1189 = vmatprep.subr.mxu0 0.0
        %1190 = vmatpush1.msra.mxu0 0.0
        %1191 = vmatprep.subr.mxu0 0.0
        %1192 = vmatpush1.msra.mxu0 0.0
        %1193 = vmatprep.subr.mxu0 0.0
        %1194 = vmatpush1.msra.mxu0 0.0
        %1195 = vmatprep.subr.mxu0 0.0
        %1196 = vmatpush1.msra.mxu0 0.0
        %1197 = vmatprep.subr.mxu0 0.0
        %1198 = vmatpush1.msra.mxu0 0.0
        %1199 = vmatprep.subr.mxu0 0.0
        %1200 = vmatpush1.msra.mxu0 0.0
        %1201 = vmatprep.subr.mxu0 0.0
        %1202 = vmatpush1.msra.mxu0 0.0
        %1203 = vmatprep.subr.mxu0 0.0
        %1204 = vmatpush1.msra.mxu0 0.0
        %1205 = vmatprep.subr.mxu0 0.0
        %1206 = vmatpush1.msra.mxu0 0.0
        %1207 = vmatprep.subr.mxu0 0.0
        %1208 = vmatpush1.msra.mxu0 0.0
        %1209 = vmatprep.subr.mxu0 0.0
        %1210 = vmatpush1.msra.mxu0 0.0
        %1211 = vmatprep.subr.mxu0 0.0
        %1212 = vmatpush1.msra.mxu0 0.0
        %1213 = vmatprep.mubr.f32.mxu0 0.0
        %1214 = vmatmul.mubr.f32.gmra.mrb[0].mxu0 %v1144
        %v1215 = vpop.f32.mrb[0].mxu0
        %v1216 = vadd.f32 0.0, %v1215
        %v1217 = vpop.f32.mrb[0].mxu0
        %1218 = vmatprep.mubr.f32.mxu0 0.0
        %1219 = vmatmul.mubr.f32.gmra.mrb[0].mxu0 %v1147
        %v1220 = vpop.f32.mrb[0].mxu0
        %v1221 = vadd.f32 0.0, %v1220
        %v1222 = vpop.f32.mrb[0].mxu0
        %1223 = vdwg.mxu0
        %v1224 = vadd.f32 %v1110, %v1216
        %v1225 = vadd.f32 %v1115, %v1221
        %s1226 = scalar_lea.vmem %s5, 96
        %v1227 = vld [vmem:[%s1226] sm:$0xff]
        %v1228 = vld [vmem:[%s1226 + $0x8] sm:$0xff]
        %v1229 = vld [vmem:[%s1226 + $0x10] sm:$0xff]
        %v1230 = vld [vmem:[%s1226 + $0x18] sm:$0xff]
        %v1232 = vsel %vm753, %v931, 0
        %v1235 = vsel %vm753, %v932, 0
        %1237 = vmatprep.subr.mxu0 0.0
        %1238 = vmatpush1.msra.mxu0 %v1227
        %1239 = vmatprep.subr.mxu0 0.0
        %1240 = vmatpush1.msra.mxu0 %v1228
        %1241 = vmatprep.subr.mxu0 0.0
        %1242 = vmatpush1.msra.mxu0 %v1229
        %1243 = vmatprep.subr.mxu0 0.0
        %1244 = vmatpush1.msra.mxu0 %v1230
        %1245 = vmatprep.subr.mxu0 0.0
        %1246 = vmatpush1.msra.mxu0 0.0
        %1247 = vmatprep.subr.mxu0 0.0
        %1248 = vmatpush1.msra.mxu0 0.0
        %1249 = vmatprep.subr.mxu0 0.0
        %1250 = vmatpush1.msra.mxu0 0.0
        %1251 = vmatprep.subr.mxu0 0.0
        %1252 = vmatpush1.msra.mxu0 0.0
        %1253 = vmatprep.subr.mxu0 0.0
        %1254 = vmatpush1.msra.mxu0 0.0
        %1255 = vmatprep.subr.mxu0 0.0
        %1256 = vmatpush1.msra.mxu0 0.0
        %1257 = vmatprep.subr.mxu0 0.0
        %1258 = vmatpush1.msra.mxu0 0.0
        %1259 = vmatprep.subr.mxu0 0.0
        %1260 = vmatpush1.msra.mxu0 0.0
        %1261 = vmatprep.subr.mxu0 0.0
        %1262 = vmatpush1.msra.mxu0 0.0
        %1263 = vmatprep.subr.mxu0 0.0
        %1264 = vmatpush1.msra.mxu0 0.0
        %1265 = vmatprep.subr.mxu0 0.0
        %1266 = vmatpush1.msra.mxu0 0.0
        %1267 = vmatprep.subr.mxu0 0.0
        %1268 = vmatpush1.msra.mxu0 0.0
        %1269 = vmatprep.subr.mxu0 0.0
        %1270 = vmatpush1.msra.mxu0 0.0
        %1271 = vmatprep.subr.mxu0 0.0
        %1272 = vmatpush1.msra.mxu0 0.0
        %1273 = vmatprep.subr.mxu0 0.0
        %1274 = vmatpush1.msra.mxu0 0.0
        %1275 = vmatprep.subr.mxu0 0.0
        %1276 = vmatpush1.msra.mxu0 0.0
        %1277 = vmatprep.subr.mxu0 0.0
        %1278 = vmatpush1.msra.mxu0 0.0
        %1279 = vmatprep.subr.mxu0 0.0
        %1280 = vmatpush1.msra.mxu0 0.0
        %1281 = vmatprep.subr.mxu0 0.0
        %1282 = vmatpush1.msra.mxu0 0.0
        %1283 = vmatprep.subr.mxu0 0.0
        %1284 = vmatpush1.msra.mxu0 0.0
        %1285 = vmatprep.subr.mxu0 0.0
        %1286 = vmatpush1.msra.mxu0 0.0
        %1287 = vmatprep.subr.mxu0 0.0
        %1288 = vmatpush1.msra.mxu0 0.0
        %1289 = vmatprep.subr.mxu0 0.0
        %1290 = vmatpush1.msra.mxu0 0.0
        %1291 = vmatprep.subr.mxu0 0.0
        %1292 = vmatpush1.msra.mxu0 0.0
        %1293 = vmatprep.subr.mxu0 0.0
        %1294 = vmatpush1.msra.mxu0 0.0
        %1295 = vmatprep.subr.mxu0 0.0
        %1296 = vmatpush1.msra.mxu0 0.0
        %1297 = vmatprep.subr.mxu0 0.0
        %1298 = vmatpush1.msra.mxu0 0.0
        %1299 = vmatprep.subr.mxu0 0.0
        %1300 = vmatpush1.msra.mxu0 0.0
        %1301 = vmatprep.mubr.f32.mxu0 0.0
        %1302 = vmatmul.mubr.f32.gmra.mrb[0].mxu0 %v1232
        %v1303 = vpop.f32.mrb[0].mxu0
        %v1304 = vadd.f32 0.0, %v1303
        %v1305 = vpop.f32.mrb[0].mxu0
        %1306 = vmatprep.mubr.f32.mxu0 0.0
        %1307 = vmatmul.mubr.f32.gmra.mrb[0].mxu0 %v1235
        %v1308 = vpop.f32.mrb[0].mxu0
        %v1309 = vadd.f32 0.0, %v1308
        %v1310 = vpop.f32.mrb[0].mxu0
        %1311 = vdwg.mxu0
        %v1312 = vadd.f32 %v1224, %v1304
        %v1313 = vadd.f32 %v1225, %v1309
        %s1314 = scalar_lea.vmem %s5, 128
        %v1315 = vld [vmem:[%s1314] sm:$0xff]
        %v1316 = vld [vmem:[%s1314 + $0x8] sm:$0xff]
        %v1317 = vld [vmem:[%s1314 + $0x10] sm:$0xff]
        %v1318 = vld [vmem:[%s1314 + $0x18] sm:$0xff]
        %v1320 = vsel %vm753, %v929, 0
        %v1323 = vsel %vm753, %v930, 0
        %1325 = vmatprep.subr.mxu0 0.0
        %1326 = vmatpush1.msra.mxu0 %v1315
        %1327 = vmatprep.subr.mxu0 0.0
        %1328 = vmatpush1.msra.mxu0 %v1316
        %1329 = vmatprep.subr.mxu0 0.0
        %1330 = vmatpush1.msra.mxu0 %v1317
        %1331 = vmatprep.subr.mxu0 0.0
        %1332 = vmatpush1.msra.mxu0 %v1318
        %1333 = vmatprep.subr.mxu0 0.0
        %1334 = vmatpush1.msra.mxu0 0.0
        %1335 = vmatprep.subr.mxu0 0.0
        %1336 = vmatpush1.msra.mxu0 0.0
        %1337 = vmatprep.subr.mxu0 0.0
        %1338 = vmatpush1.msra.mxu0 0.0
        %1339 = vmatprep.subr.mxu0 0.0
        %1340 = vmatpush1.msra.mxu0 0.0
        %1341 = vmatprep.subr.mxu0 0.0
        %1342 = vmatpush1.msra.mxu0 0.0
        %1343 = vmatprep.subr.mxu0 0.0
        %1344 = vmatpush1.msra.mxu0 0.0
        %1345 = vmatprep.subr.mxu0 0.0
        %1346 = vmatpush1.msra.mxu0 0.0
        %1347 = vmatprep.subr.mxu0 0.0
        %1348 = vmatpush1.msra.mxu0 0.0
        %1349 = vmatprep.subr.mxu0 0.0
        %1350 = vmatpush1.msra.mxu0 0.0
        %1351 = vmatprep.subr.mxu0 0.0
        %1352 = vmatpush1.msra.mxu0 0.0
        %1353 = vmatprep.subr.mxu0 0.0
        %1354 = vmatpush1.msra.mxu0 0.0
        %1355 = vmatprep.subr.mxu0 0.0
        %1356 = vmatpush1.msra.mxu0 0.0
        %1357 = vmatprep.subr.mxu0 0.0
        %1358 = vmatpush1.msra.mxu0 0.0
        %1359 = vmatprep.subr.mxu0 0.0
        %1360 = vmatpush1.msra.mxu0 0.0
        %1361 = vmatprep.subr.mxu0 0.0
        %1362 = vmatpush1.msra.mxu0 0.0
        %1363 = vmatprep.subr.mxu0 0.0
        %1364 = vmatpush1.msra.mxu0 0.0
        %1365 = vmatprep.subr.mxu0 0.0
        %1366 = vmatpush1.msra.mxu0 0.0
        %1367 = vmatprep.subr.mxu0 0.0
        %1368 = vmatpush1.msra.mxu0 0.0
        %1369 = vmatprep.subr.mxu0 0.0
        %1370 = vmatpush1.msra.mxu0 0.0
        %1371 = vmatprep.subr.mxu0 0.0
        %1372 = vmatpush1.msra.mxu0 0.0
        %1373 = vmatprep.subr.mxu0 0.0
        %1374 = vmatpush1.msra.mxu0 0.0
        %1375 = vmatprep.subr.mxu0 0.0
        %1376 = vmatpush1.msra.mxu0 0.0
        %1377 = vmatprep.subr.mxu0 0.0
        %1378 = vmatpush1.msra.mxu0 0.0
        %1379 = vmatprep.subr.mxu0 0.0
        %1380 = vmatpush1.msra.mxu0 0.0
        %1381 = vmatprep.subr.mxu0 0.0
        %1382 = vmatpush1.msra.mxu0 0.0
        %1383 = vmatprep.subr.mxu0 0.0
        %1384 = vmatpush1.msra.mxu0 0.0
        %1385 = vmatprep.subr.mxu0 0.0
        %1386 = vmatpush1.msra.mxu0 0.0
        %1387 = vmatprep.subr.mxu0 0.0
        %1388 = vmatpush1.msra.mxu0 0.0
        %1389 = vmatprep.mubr.f32.mxu0 0.0
        %1390 = vmatmul.mubr.f32.gmra.mrb[0].mxu0 %v1320
        %v1391 = vpop.f32.mrb[0].mxu0
        %v1392 = vadd.f32 0.0, %v1391
        %v1393 = vpop.f32.mrb[0].mxu0
        %1394 = vmatprep.mubr.f32.mxu0 0.0
        %1395 = vmatmul.mubr.f32.gmra.mrb[0].mxu0 %v1323
        %v1396 = vpop.f32.mrb[0].mxu0
        %v1397 = vadd.f32 0.0, %v1396
        %v1398 = vpop.f32.mrb[0].mxu0
        %1399 = vdwg.mxu0
        %v1400 = vadd.f32 %v1312, %v1392
        %v1401 = vadd.f32 %v1313, %v1397
        %s1402 = scalar_lea.vmem %s5, 160
        %v1403 = vld [vmem:[%s1402] sm:$0xff]
        %v1404 = vld [vmem:[%s1402 + $0x8] sm:$0xff]
        %v1405 = vld [vmem:[%s1402 + $0x10] sm:$0xff]
        %v1406 = vld [vmem:[%s1402 + $0x18] sm:$0xff]
        %v1408 = vsel %vm753, %v1134, 0
        %v1411 = vsel %vm753, %v1135, 0
        %1413 = vmatprep.subr.mxu0 0.0
        %1414 = vmatpush1.msra.mxu0 %v1403
        %1415 = vmatprep.subr.mxu0 0.0
        %1416 = vmatpush1.msra.mxu0 %v1404
        %1417 = vmatprep.subr.mxu0 0.0
        %1418 = vmatpush1.msra.mxu0 %v1405
        %1419 = vmatprep.subr.mxu0 0.0
        %1420 = vmatpush1.msra.mxu0 %v1406
        %1421 = vmatprep.subr.mxu0 0.0
        %1422 = vmatpush1.msra.mxu0 0.0
        %1423 = vmatprep.subr.mxu0 0.0
        %1424 = vmatpush1.msra.mxu0 0.0
        %1425 = vmatprep.subr.mxu0 0.0
        %1426 = vmatpush1.msra.mxu0 0.0
        %1427 = vmatprep.subr.mxu0 0.0
        %1428 = vmatpush1.msra.mxu0 0.0
        %1429 = vmatprep.subr.mxu0 0.0
        %1430 = vmatpush1.msra.mxu0 0.0
        %1431 = vmatprep.subr.mxu0 0.0
        %1432 = vmatpush1.msra.mxu0 0.0
        %1433 = vmatprep.subr.mxu0 0.0
        %1434 = vmatpush1.msra.mxu0 0.0
        %1435 = vmatprep.subr.mxu0 0.0
        %1436 = vmatpush1.msra.mxu0 0.0
        %1437 = vmatprep.subr.mxu0 0.0
        %1438 = vmatpush1.msra.mxu0 0.0
        %1439 = vmatprep.subr.mxu0 0.0
        %1440 = vmatpush1.msra.mxu0 0.0
        %1441 = vmatprep.subr.mxu0 0.0
        %1442 = vmatpush1.msra.mxu0 0.0
        %1443 = vmatprep.subr.mxu0 0.0
        %1444 = vmatpush1.msra.mxu0 0.0
        %1445 = vmatprep.subr.mxu0 0.0
        %1446 = vmatpush1.msra.mxu0 0.0
        %1447 = vmatprep.subr.mxu0 0.0
        %1448 = vmatpush1.msra.mxu0 0.0
        %1449 = vmatprep.subr.mxu0 0.0
        %1450 = vmatpush1.msra.mxu0 0.0
        %1451 = vmatprep.subr.mxu0 0.0
        %1452 = vmatpush1.msra.mxu0 0.0
        %1453 = vmatprep.subr.mxu0 0.0
        %1454 = vmatpush1.msra.mxu0 0.0
        %1455 = vmatprep.subr.mxu0 0.0
        %1456 = vmatpush1.msra.mxu0 0.0
        %1457 = vmatprep.subr.mxu0 0.0
        %1458 = vmatpush1.msra.mxu0 0.0
        %1459 = vmatprep.subr.mxu0 0.0
        %1460 = vmatpush1.msra.mxu0 0.0
        %1461 = vmatprep.subr.mxu0 0.0
        %1462 = vmatpush1.msra.mxu0 0.0
        %1463 = vmatprep.subr.mxu0 0.0
        %1464 = vmatpush1.msra.mxu0 0.0
        %1465 = vmatprep.subr.mxu0 0.0
        %1466 = vmatpush1.msra.mxu0 0.0
        %1467 = vmatprep.subr.mxu0 0.0
        %1468 = vmatpush1.msra.mxu0 0.0
        %1469 = vmatprep.subr.mxu0 0.0
        %1470 = vmatpush1.msra.mxu0 0.0
        %1471 = vmatprep.subr.mxu0 0.0
        %1472 = vmatpush1.msra.mxu0 0.0
        %1473 = vmatprep.subr.mxu0 0.0
        %1474 = vmatpush1.msra.mxu0 0.0
        %1475 = vmatprep.subr.mxu0 0.0
        %1476 = vmatpush1.msra.mxu0 0.0
        %1477 = vmatprep.mubr.f32.mxu0 0.0
        %1478 = vmatmul.mubr.f32.gmra.mrb[0].mxu0 %v1408
        %v1479 = vpop.f32.mrb[0].mxu0
        %v1480 = vadd.f32 0.0, %v1479
        %v1481 = vpop.f32.mrb[0].mxu0
        %1482 = vmatprep.mubr.f32.mxu0 0.0
        %1483 = vmatmul.mubr.f32.gmra.mrb[0].mxu0 %v1411
        %v1484 = vpop.f32.mrb[0].mxu0
        %v1485 = vadd.f32 0.0, %v1484
        %v1486 = vpop.f32.mrb[0].mxu0
        %1487 = vdwg.mxu0
        %v1488 = vadd.f32 %v1400, %v1480
        %v1489 = vadd.f32 %v1401, %v1485
        %v1490 = vld [vmem:[#allocation2 + $0xb] sm:$0xff]
        %v1491 = vld [vmem:[#allocation2 + $0x13] sm:$0xff]
        %v1492 = vld [vmem:[#allocation2 + $0xc] sm:$0xff]
        %v1493 = vld [vmem:[#allocation2 + $0x14] sm:$0xff]
        %v1494 = vsel %vm923, %v1490, %v1492
        %v1495 = vsel %vm924, %v1491, %v1493
        %v1496 = vsel %vm909, 1, 0
        %v1497 = vsel %vm910, 1, 0
        %1498 = vset.pattern.permute.xlu0 0
        %1499 = vperm.xlu0 %1498, %v1496
        %v1500 = vpop.permute.xlu0 %1499
        %1501 = vset.pattern.permute.xlu0 0
        %1502 = vperm.xlu0 %1501, %v1497
        %v1503 = vpop.permute.xlu0 %1502
        %vm1504 = vcmp.eq.s32.totalorder %v1500, 1
        %vm1505 = vcmp.eq.s32.totalorder %v1503, 1
        %v1506 = vsel %vm1504, %v1494, %v931
        %v1507 = vsel %vm1505, %v1495, %v932
        %s1508 = scalar_lea.vmem %s5, 192
        %v1509 = vld [vmem:[%s1508] sm:$0xff]
        %v1510 = vld [vmem:[%s1508 + $0x8] sm:$0xff]
        %v1511 = vld [vmem:[%s1508 + $0x10] sm:$0xff]
        %v1512 = vld [vmem:[%s1508 + $0x18] sm:$0xff]
        %v1514 = vsel %vm753, %v1506, 0
        %v1517 = vsel %vm753, %v1507, 0
        %1519 = vmatprep.subr.mxu0 0.0
        %1520 = vmatpush1.msra.mxu0 %v1509
        %1521 = vmatprep.subr.mxu0 0.0
        %1522 = vmatpush1.msra.mxu0 %v1510
        %1523 = vmatprep.subr.mxu0 0.0
        %1524 = vmatpush1.msra.mxu0 %v1511
        %1525 = vmatprep.subr.mxu0 0.0
        %1526 = vmatpush1.msra.mxu0 %v1512
        %1527 = vmatprep.subr.mxu0 0.0
        %1528 = vmatpush1.msra.mxu0 0.0
        %1529 = vmatprep.subr.mxu0 0.0
        %1530 = vmatpush1.msra.mxu0 0.0
        %1531 = vmatprep.subr.mxu0 0.0
        %1532 = vmatpush1.msra.mxu0 0.0
        %1533 = vmatprep.subr.mxu0 0.0
        %1534 = vmatpush1.msra.mxu0 0.0
        %1535 = vmatprep.subr.mxu0 0.0
        %1536 = vmatpush1.msra.mxu0 0.0
        %1537 = vmatprep.subr.mxu0 0.0
        %1538 = vmatpush1.msra.mxu0 0.0
        %1539 = vmatprep.subr.mxu0 0.0
        %1540 = vmatpush1.msra.mxu0 0.0
        %1541 = vmatprep.subr.mxu0 0.0
        %1542 = vmatpush1.msra.mxu0 0.0
        %1543 = vmatprep.subr.mxu0 0.0
        %1544 = vmatpush1.msra.mxu0 0.0
        %1545 = vmatprep.subr.mxu0 0.0
        %1546 = vmatpush1.msra.mxu0 0.0
        %1547 = vmatprep.subr.mxu0 0.0
        %1548 = vmatpush1.msra.mxu0 0.0
        %1549 = vmatprep.subr.mxu0 0.0
        %1550 = vmatpush1.msra.mxu0 0.0
        %1551 = vmatprep.subr.mxu0 0.0
        %1552 = vmatpush1.msra.mxu0 0.0
        %1553 = vmatprep.subr.mxu0 0.0
        %1554 = vmatpush1.msra.mxu0 0.0
        %1555 = vmatprep.subr.mxu0 0.0
        %1556 = vmatpush1.msra.mxu0 0.0
        %1557 = vmatprep.subr.mxu0 0.0
        %1558 = vmatpush1.msra.mxu0 0.0
        %1559 = vmatprep.subr.mxu0 0.0
        %1560 = vmatpush1.msra.mxu0 0.0
        %1561 = vmatprep.subr.mxu0 0.0
        %1562 = vmatpush1.msra.mxu0 0.0
        %1563 = vmatprep.subr.mxu0 0.0
        %1564 = vmatpush1.msra.mxu0 0.0
        %1565 = vmatprep.subr.mxu0 0.0
        %1566 = vmatpush1.msra.mxu0 0.0
        %1567 = vmatprep.subr.mxu0 0.0
        %1568 = vmatpush1.msra.mxu0 0.0
        %1569 = vmatprep.subr.mxu0 0.0
        %1570 = vmatpush1.msra.mxu0 0.0
        %1571 = vmatprep.subr.mxu0 0.0
        %1572 = vmatpush1.msra.mxu0 0.0
        %1573 = vmatprep.subr.mxu0 0.0
        %1574 = vmatpush1.msra.mxu0 0.0
        %1575 = vmatprep.subr.mxu0 0.0
        %1576 = vmatpush1.msra.mxu0 0.0
        %1577 = vmatprep.subr.mxu0 0.0
        %1578 = vmatpush1.msra.mxu0 0.0
        %1579 = vmatprep.subr.mxu0 0.0
        %1580 = vmatpush1.msra.mxu0 0.0
        %1581 = vmatprep.subr.mxu0 0.0
        %1582 = vmatpush1.msra.mxu0 0.0
        %1583 = vmatprep.mubr.f32.mxu0 0.0
        %1584 = vmatmul.mubr.f32.gmra.mrb[0].mxu0 %v1514
        %v1585 = vpop.f32.mrb[0].mxu0
        %v1586 = vadd.f32 0.0, %v1585
        %v1587 = vpop.f32.mrb[0].mxu0
        %1588 = vmatprep.mubr.f32.mxu0 0.0
        %1589 = vmatmul.mubr.f32.gmra.mrb[0].mxu0 %v1517
        %v1590 = vpop.f32.mrb[0].mxu0
        %v1591 = vadd.f32 0.0, %v1590
        %v1592 = vpop.f32.mrb[0].mxu0
        %1593 = vdwg.mxu0
        %v1594 = vadd.f32 %v1488, %v1586
        %v1595 = vadd.f32 %v1489, %v1591
        %v1596 = vsel %vm1504, %v1492, %v929
        %v1597 = vsel %vm1505, %v1493, %v930
        %s1598 = scalar_lea.vmem %s5, 224
        %v1599 = vld [vmem:[%s1598] sm:$0xff]
        %v1600 = vld [vmem:[%s1598 + $0x8] sm:$0xff]
        %v1601 = vld [vmem:[%s1598 + $0x10] sm:$0xff]
        %v1602 = vld [vmem:[%s1598 + $0x18] sm:$0xff]
        %v1604 = vsel %vm753, %v1596, 0
        %v1607 = vsel %vm753, %v1597, 0
        %1609 = vmatprep.subr.mxu0 0.0
        %1610 = vmatpush1.msra.mxu0 %v1599
        %1611 = vmatprep.subr.mxu0 0.0
        %1612 = vmatpush1.msra.mxu0 %v1600
        %1613 = vmatprep.subr.mxu0 0.0
        %1614 = vmatpush1.msra.mxu0 %v1601
        %1615 = vmatprep.subr.mxu0 0.0
        %1616 = vmatpush1.msra.mxu0 %v1602
        %1617 = vmatprep.subr.mxu0 0.0
        %1618 = vmatpush1.msra.mxu0 0.0
        %1619 = vmatprep.subr.mxu0 0.0
        %1620 = vmatpush1.msra.mxu0 0.0
        %1621 = vmatprep.subr.mxu0 0.0
        %1622 = vmatpush1.msra.mxu0 0.0
        %1623 = vmatprep.subr.mxu0 0.0
        %1624 = vmatpush1.msra.mxu0 0.0
        %1625 = vmatprep.subr.mxu0 0.0
        %1626 = vmatpush1.msra.mxu0 0.0
        %1627 = vmatprep.subr.mxu0 0.0
        %1628 = vmatpush1.msra.mxu0 0.0
        %1629 = vmatprep.subr.mxu0 0.0
        %1630 = vmatpush1.msra.mxu0 0.0
        %1631 = vmatprep.subr.mxu0 0.0
        %1632 = vmatpush1.msra.mxu0 0.0
        %1633 = vmatprep.subr.mxu0 0.0
        %1634 = vmatpush1.msra.mxu0 0.0
        %1635 = vmatprep.subr.mxu0 0.0
        %1636 = vmatpush1.msra.mxu0 0.0
        %1637 = vmatprep.subr.mxu0 0.0
        %1638 = vmatpush1.msra.mxu0 0.0
        %1639 = vmatprep.subr.mxu0 0.0
        %1640 = vmatpush1.msra.mxu0 0.0
        %1641 = vmatprep.subr.mxu0 0.0
        %1642 = vmatpush1.msra.mxu0 0.0
        %1643 = vmatprep.subr.mxu0 0.0
        %1644 = vmatpush1.msra.mxu0 0.0
        %1645 = vmatprep.subr.mxu0 0.0
        %1646 = vmatpush1.msra.mxu0 0.0
        %1647 = vmatprep.subr.mxu0 0.0
        %1648 = vmatpush1.msra.mxu0 0.0
        %1649 = vmatprep.subr.mxu0 0.0
        %1650 = vmatpush1.msra.mxu0 0.0
        %1651 = vmatprep.subr.mxu0 0.0
        %1652 = vmatpush1.msra.mxu0 0.0
        %1653 = vmatprep.subr.mxu0 0.0
        %1654 = vmatpush1.msra.mxu0 0.0
        %1655 = vmatprep.subr.mxu0 0.0
        %1656 = vmatpush1.msra.mxu0 0.0
        %1657 = vmatprep.subr.mxu0 0.0
        %1658 = vmatpush1.msra.mxu0 0.0
        %1659 = vmatprep.subr.mxu0 0.0
        %1660 = vmatpush1.msra.mxu0 0.0
        %1661 = vmatprep.subr.mxu0 0.0
        %1662 = vmatpush1.msra.mxu0 0.0
        %1663 = vmatprep.subr.mxu0 0.0
        %1664 = vmatpush1.msra.mxu0 0.0
        %1665 = vmatprep.subr.mxu0 0.0
        %1666 = vmatpush1.msra.mxu0 0.0
        %1667 = vmatprep.subr.mxu0 0.0
        %1668 = vmatpush1.msra.mxu0 0.0
        %1669 = vmatprep.subr.mxu0 0.0
        %1670 = vmatpush1.msra.mxu0 0.0
        %1671 = vmatprep.subr.mxu0 0.0
        %1672 = vmatpush1.msra.mxu0 0.0
        %1673 = vmatprep.mubr.f32.mxu0 0.0
        %1674 = vmatmul.mubr.f32.gmra.mrb[0].mxu0 %v1604
        %v1675 = vpop.f32.mrb[0].mxu0
        %v1676 = vadd.f32 0.0, %v1675
        %v1677 = vpop.f32.mrb[0].mxu0
        %1678 = vmatprep.mubr.f32.mxu0 0.0
        %1679 = vmatmul.mubr.f32.gmra.mrb[0].mxu0 %v1607
        %v1680 = vpop.f32.mrb[0].mxu0
        %v1681 = vadd.f32 0.0, %v1680
        %v1682 = vpop.f32.mrb[0].mxu0
        %1683 = vdwg.mxu0
        %v1684 = vadd.f32 %v1594, %v1676
        %v1685 = vadd.f32 %v1595, %v1681
        %v1686 = vld [vmem:[#allocation2 + $0xd] sm:$0xff]
        %v1687 = vld [vmem:[#allocation2 + $0x15] sm:$0xff]
        %v1688 = vsel %vm1128, %v1686, %v1492
        %v1689 = vsel %vm1129, %v1687, %v1493
        %v1690 = vsel %vm1504, %v1688, %v1134
        %v1691 = vsel %vm1505, %v1689, %v1135
        %s1692 = scalar_lea.vmem %s5, 256
        %v1693 = vld [vmem:[%s1692] sm:$0xff]
        %v1694 = vld [vmem:[%s1692 + $0x8] sm:$0xff]
        %v1695 = vld [vmem:[%s1692 + $0x10] sm:$0xff]
        %v1696 = vld [vmem:[%s1692 + $0x18] sm:$0xff]
        %v1698 = vsel %vm753, %v1690, 0
        %v1701 = vsel %vm753, %v1691, 0
        %1703 = vmatprep.subr.mxu0 0.0
        %1704 = vmatpush1.msra.mxu0 %v1693
        %1705 = vmatprep.subr.mxu0 0.0
        %1706 = vmatpush1.msra.mxu0 %v1694
        %1707 = vmatprep.subr.mxu0 0.0
        %1708 = vmatpush1.msra.mxu0 %v1695
        %1709 = vmatprep.subr.mxu0 0.0
        %1710 = vmatpush1.msra.mxu0 %v1696
        %1711 = vmatprep.subr.mxu0 0.0
        %1712 = vmatpush1.msra.mxu0 0.0
        %1713 = vmatprep.subr.mxu0 0.0
        %1714 = vmatpush1.msra.mxu0 0.0
        %1715 = vmatprep.subr.mxu0 0.0
        %1716 = vmatpush1.msra.mxu0 0.0
        %1717 = vmatprep.subr.mxu0 0.0
        %1718 = vmatpush1.msra.mxu0 0.0
        %1719 = vmatprep.subr.mxu0 0.0
        %1720 = vmatpush1.msra.mxu0 0.0
        %1721 = vmatprep.subr.mxu0 0.0
        %1722 = vmatpush1.msra.mxu0 0.0
        %1723 = vmatprep.subr.mxu0 0.0
        %1724 = vmatpush1.msra.mxu0 0.0
        %1725 = vmatprep.subr.mxu0 0.0
        %1726 = vmatpush1.msra.mxu0 0.0
        %1727 = vmatprep.subr.mxu0 0.0
        %1728 = vmatpush1.msra.mxu0 0.0
        %1729 = vmatprep.subr.mxu0 0.0
        %1730 = vmatpush1.msra.mxu0 0.0
        %1731 = vmatprep.subr.mxu0 0.0
        %1732 = vmatpush1.msra.mxu0 0.0
        %1733 = vmatprep.subr.mxu0 0.0
        %1734 = vmatpush1.msra.mxu0 0.0
        %1735 = vmatprep.subr.mxu0 0.0
        %1736 = vmatpush1.msra.mxu0 0.0
        %1737 = vmatprep.subr.mxu0 0.0
        %1738 = vmatpush1.msra.mxu0 0.0
        %1739 = vmatprep.subr.mxu0 0.0
        %1740 = vmatpush1.msra.mxu0 0.0
        %1741 = vmatprep.subr.mxu0 0.0
        %1742 = vmatpush1.msra.mxu0 0.0
        %1743 = vmatprep.subr.mxu0 0.0
        %1744 = vmatpush1.msra.mxu0 0.0
        %1745 = vmatprep.subr.mxu0 0.0
        %1746 = vmatpush1.msra.mxu0 0.0
        %1747 = vmatprep.subr.mxu0 0.0
        %1748 = vmatpush1.msra.mxu0 0.0
        %1749 = vmatprep.subr.mxu0 0.0
        %1750 = vmatpush1.msra.mxu0 0.0
        %1751 = vmatprep.subr.mxu0 0.0
        %1752 = vmatpush1.msra.mxu0 0.0
        %1753 = vmatprep.subr.mxu0 0.0
        %1754 = vmatpush1.msra.mxu0 0.0
        %1755 = vmatprep.subr.mxu0 0.0
        %1756 = vmatpush1.msra.mxu0 0.0
        %1757 = vmatprep.subr.mxu0 0.0
        %1758 = vmatpush1.msra.mxu0 0.0
        %1759 = vmatprep.subr.mxu0 0.0
        %1760 = vmatpush1.msra.mxu0 0.0
        %1761 = vmatprep.subr.mxu0 0.0
        %1762 = vmatpush1.msra.mxu0 0.0
        %1763 = vmatprep.subr.mxu0 0.0
        %1764 = vmatpush1.msra.mxu0 0.0
        %1765 = vmatprep.subr.mxu0 0.0
        %1766 = vmatpush1.msra.mxu0 0.0
        %1767 = vmatprep.mubr.f32.mxu0 0.0
        %1768 = vmatmul.mubr.f32.gmra.mrb[0].mxu0 %v1698
        %v1769 = vpop.f32.mrb[0].mxu0
        %v1770 = vadd.f32 0.0, %v1769
        %v1771 = vpop.f32.mrb[0].mxu0
        %1772 = vmatprep.mubr.f32.mxu0 0.0
        %1773 = vmatmul.mubr.f32.gmra.mrb[0].mxu0 %v1701
        %v1774 = vpop.f32.mrb[0].mxu0
        %v1775 = vadd.f32 0.0, %v1774
        %v1776 = vpop.f32.mrb[0].mxu0
        %1777 = vdwg.mxu0
        %v1778 = vadd.f32 %v1684, %v1770
        %v1779 = vadd.f32 %v1685, %v1775
        %v1780 = vld [vmem:[%s6] sm:$0x1]
        %v1782 = vlaneseq
        %v1783 = vshrl.u32 %v1782, 7
        %v1784 = vsub.s32 0, %v1783
        %v1785 = vrot.slane %v1780, %v1784
        %v1787 = vadd.f32 %v1778, %v1785
        %v1788 = vadd.f32 %v1779, %v1785
        %v1789 = vmul.f32 %v1787, 0.70710677
        %v1790 = vmul.f32 %v1788, 0.70710677
        %v1791 = vand.u32 2147483647, %v1789
        %v1792 = vand.u32 2147483647, %v1790
        %v1793 = vmul.f32 %v1791, 0.3275911
        %v1794 = vmul.f32 %v1792, 0.3275911
        %v1795 = vadd.f32 %v1793, 1.0
        %v1796 = vadd.f32 %v1794, 1.0
        %v1797 = vrcp.pop %v1795
        %v1798 = vmul.f32 1.0, %v1797
        %v1799 = vrcp.pop %v1796
        %v1800 = vmul.f32 1.0, %v1799
        %v1801 = vmul.f32 %v1798, 1.0614054
        %v1802 = vmul.f32 %v1800, 1.0614054
        %v1803 = vadd.f32 %v1801, -1.4531521
        %v1804 = vadd.f32 %v1802, -1.4531521
        %v1805 = vmul.f32 %v1798, %v1803
        %v1806 = vmul.f32 %v1800, %v1804
        %v1807 = vadd.f32 %v1805, 1.4214138
        %v1808 = vadd.f32 %v1806, 1.4214138
        %v1809 = vmul.f32 %v1798, %v1807
        %v1810 = vmul.f32 %v1800, %v1808
        %v1811 = vadd.f32 %v1809, -0.28449672
        %v1812 = vadd.f32 %v1810, -0.28449672
        %v1813 = vmul.f32 %v1798, %v1811
        %v1814 = vmul.f32 %v1800, %v1812
        %v1815 = vadd.f32 %v1813, 0.2548296
        %v1816 = vadd.f32 %v1814, 0.2548296
        %v1817 = vmul.f32 %v1798, %v1815
        %v1818 = vmul.f32 %v1800, %v1816
        %v1819 = vsub.f32 0.0, %v1791
        %v1820 = vsub.f32 0.0, %v1792
        %v1821 = vmul.f32 %v1819, %v1791
        %v1822 = vmul.f32 %v1820, %v1792
        %v1823 = vmul.f32 %v1821, 1.442695
        %v1824 = vpow.pop %v1823
        %v1825 = vmul.f32 %v1822, 1.442695
        %v1826 = vpow.pop %v1825
        %v1827 = vmul.f32 %v1817, %v1824
        %v1828 = vmul.f32 %v1818, %v1826
        %v1829 = vsub.f32 1.0, %v1827
        %v1830 = vsub.f32 1.0, %v1828
        %vm1831 = vcmp.lt.f32.partialorder %v1789, 0.0
        %vm1832 = vcmp.lt.f32.partialorder %v1790, 0.0
        %v1833 = vsub.f32 0.0, %v1829
        %v1834 = vsub.f32 0.0, %v1830
        %v1835 = vsel %vm1831, %v1833, %v1829
        %v1836 = vsel %vm1832, %v1834, %v1830
        %v1837 = vmul.f32 %v1787, 0.5
        %v1838 = vmul.f32 %v1788, 0.5
        %v1839 = vadd.f32 %v1835, 1.0
        %v1840 = vadd.f32 %v1836, 1.0
        %v1841 = vmul.f32 %v1837, %v1839
        %v1842 = vmul.f32 %v1838, %v1840
        %v1843 = vld [vmem:[%s7] sm:$0xff]
        %v1844 = vld [vmem:[%s7 + $0x8] sm:$0xff]
        %v1845 = vld [vmem:[%s7 + $0x10] sm:$0xff]
        %v1846 = vld [vmem:[%s7 + $0x18] sm:$0xff]
        %v1847 = vld [vmem:[%s8] sm:$0x1]
        %v1849 = vlaneseq
        %v1850 = vshrl.u32 %v1849, 7
        %v1851 = vsub.s32 0, %v1850
        %v1852 = vrot.slane %v1847, %v1851
        %v1855 = vsel %vm753, %v1841, 0
        %v1858 = vsel %vm753, %v1842, 0
        %1860 = vmatprep.subr.mxu0 0.0
        %1861 = vmatpush1.msra.mxu0 %v1843
        %1862 = vmatprep.subr.mxu0 0.0
        %1863 = vmatpush1.msra.mxu0 %v1844
        %1864 = vmatprep.subr.mxu0 0.0
        %1865 = vmatpush1.msra.mxu0 %v1845
        %1866 = vmatprep.subr.mxu0 0.0
        %1867 = vmatpush1.msra.mxu0 %v1846
        %1868 = vmatprep.subr.mxu0 0.0
        %1869 = vmatpush1.msra.mxu0 0.0
        %1870 = vmatprep.subr.mxu0 0.0
        %1871 = vmatpush1.msra.mxu0 0.0
        %1872 = vmatprep.subr.mxu0 0.0
        %1873 = vmatpush1.msra.mxu0 0.0
        %1874 = vmatprep.subr.mxu0 0.0
        %1875 = vmatpush1.msra.mxu0 0.0
        %1876 = vmatprep.subr.mxu0 0.0
        %1877 = vmatpush1.msra.mxu0 0.0
        %1878 = vmatprep.subr.mxu0 0.0
        %1879 = vmatpush1.msra.mxu0 0.0
        %1880 = vmatprep.subr.mxu0 0.0
        %1881 = vmatpush1.msra.mxu0 0.0
        %1882 = vmatprep.subr.mxu0 0.0
        %1883 = vmatpush1.msra.mxu0 0.0
        %1884 = vmatprep.subr.mxu0 0.0
        %1885 = vmatpush1.msra.mxu0 0.0
        %1886 = vmatprep.subr.mxu0 0.0
        %1887 = vmatpush1.msra.mxu0 0.0
        %1888 = vmatprep.subr.mxu0 0.0
        %1889 = vmatpush1.msra.mxu0 0.0
        %1890 = vmatprep.subr.mxu0 0.0
        %1891 = vmatpush1.msra.mxu0 0.0
        %1892 = vmatprep.subr.mxu0 0.0
        %1893 = vmatpush1.msra.mxu0 0.0
        %1894 = vmatprep.subr.mxu0 0.0
        %1895 = vmatpush1.msra.mxu0 0.0
        %1896 = vmatprep.subr.mxu0 0.0
        %1897 = vmatpush1.msra.mxu0 0.0
        %1898 = vmatprep.subr.mxu0 0.0
        %1899 = vmatpush1.msra.mxu0 0.0
        %1900 = vmatprep.subr.mxu0 0.0
        %1901 = vmatpush1.msra.mxu0 0.0
        %1902 = vmatprep.subr.mxu0 0.0
        %1903 = vmatpush1.msra.mxu0 0.0
        %1904 = vmatprep.subr.mxu0 0.0
        %1905 = vmatpush1.msra.mxu0 0.0
        %1906 = vmatprep.subr.mxu0 0.0
        %1907 = vmatpush1.msra.mxu0 0.0
        %1908 = vmatprep.subr.mxu0 0.0
        %1909 = vmatpush1.msra.mxu0 0.0
        %1910 = vmatprep.subr.mxu0 0.0
        %1911 = vmatpush1.msra.mxu0 0.0
        %1912 = vmatprep.subr.mxu0 0.0
        %1913 = vmatpush1.msra.mxu0 0.0
        %1914 = vmatprep.subr.mxu0 0.0
        %1915 = vmatpush1.msra.mxu0 0.0
        %1916 = vmatprep.subr.mxu0 0.0
        %1917 = vmatpush1.msra.mxu0 0.0
        %1918 = vmatprep.subr.mxu0 0.0
        %1919 = vmatpush1.msra.mxu0 0.0
        %1920 = vmatprep.subr.mxu0 0.0
        %1921 = vmatpush1.msra.mxu0 0.0
        %1922 = vmatprep.subr.mxu0 0.0
        %1923 = vmatpush1.msra.mxu0 0.0
        %1924 = vmatprep.mubr.f32.mxu0 0.0
        %1925 = vmatmul.mubr.f32.gmra.mrb[0].mxu0 %v1855
        %v1926 = vpop.f32.mrb[0].mxu0
        %v1927 = vadd.f32 %v1852, %v1926
        %v1928 = vpop.f32.mrb[0].mxu0
        %1929 = vmatprep.mubr.f32.mxu0 0.0
        %1930 = vmatmul.mubr.f32.gmra.mrb[0].mxu0 %v1858
        %v1931 = vpop.f32.mrb[0].mxu0
        %v1932 = vadd.f32 %v1852, %v1931
        %v1933 = vpop.f32.mrb[0].mxu0
        %1934 = vdwg.mxu0
        %v1935 = vld [vmem:[%s731] sm:$0xff]
        %v1936 = vld [vmem:[%s731 + $0x8] sm:$0xff]
        %v1937 = vadd.f32 %v1927, %v1935
        %v1938 = vadd.f32 %v1932, %v1936
        %1939 = vst.msk [vmem:[#allocation2 + $0x8] sm:$0xff] %vm753, %v1937
        %1940 = vst.msk [vmem:[#allocation2 + $0x10] sm:$0xff] %vm753, %v1938
        %v1941 = vld [vmem:[%s9] sm:$0x1]
        %v1942 = vld [vmem:[%s10] sm:$0x1]
        %v1943 = vsel %vm753, %v1937, 0.0
        %1944 = vadd.xlane.f32.xlu0 %v1943
        %v1945 = vpop.xlane.xlu0 %1944
        %v1946 = vsel %vm753, %v1938, 0.0
        %1947 = vadd.xlane.f32.xlu0 %v1946
        %v1948 = vpop.xlane.xlu0 %1947
        %v1949 = vrcp.pop 32.0
        %v1950 = vmul.f32 %v1945, %v1949
        %v1951 = vmul.f32 %v1948, %v1949
        %v1952 = vsub.f32 %v1937, %v1950
        %v1953 = vsub.f32 %v1938, %v1951
        %v1954 = vmul.f32 %v1952, %v1952
        %v1955 = vmul.f32 %v1953, %v1953
        %v1956 = vsel %vm753, %v1954, 0.0
        %1957 = vadd.xlane.f32.xlu0 %v1956
        %v1958 = vpop.xlane.xlu0 %1957
        %v1959 = vsel %vm753, %v1955, 0.0
        %1960 = vadd.xlane.f32.xlu0 %v1959
        %v1961 = vpop.xlane.xlu0 %1960
        %v1962 = vmul.f32 %v1958, %v1949
        %v1963 = vmul.f32 %v1961, %v1949
        %v1964 = vadd.f32 %v1962, 1e-05
        %v1965 = vadd.f32 %v1963, 1e-05
        %v1966 = vrsqrt.pop %v1964
        %v1967 = vrsqrt.pop %v1965
        %v1968 = vmul.f32 %v1952, %v1966
        %v1969 = vmul.f32 %v1953, %v1967
        %v1971 = vlaneseq
        %v1972 = vshrl.u32 %v1971, 7
        %v1973 = vsub.s32 0, %v1972
        %v1974 = vrot.slane %v1941, %v1973
        %v1976 = vmul.f32 %v1968, %v1974
        %v1977 = vmul.f32 %v1969, %v1974
        %v1979 = vlaneseq
        %v1980 = vshrl.u32 %v1979, 7
        %v1981 = vsub.s32 0, %v1980
        %v1982 = vrot.slane %v1942, %v1981
        %v1984 = vadd.f32 %v1976, %v1982
        %v1985 = vadd.f32 %v1977, %v1982
        %v1986 = vld [vmem:[%s737] sm:$0xff]
        %v1987 = vld [vmem:[%s737 + $0x8] sm:$0xff]
        %v1988 = vld [vmem:[%s11] sm:$0x1]
        %v1989 = vld [vmem:[%s12] sm:$0x1]
        %vm1990 = vcmask 130048
        %v1991 = vsel %vm1990, %v1986, 0.0
        %1992 = vadd.xlane.f32.xlu0 %v1991
        %v1993 = vpop.xlane.xlu0 %1992
        %v1994 = vsel %vm1990, %v1987, 0.0
        %1995 = vadd.xlane.f32.xlu0 %v1994
        %v1996 = vpop.xlane.xlu0 %1995
        %v1997 = vrcp.pop 16.0
        %v1998 = vmul.f32 %v1993, %v1997
        %v1999 = vmul.f32 %v1996, %v1997
        %v2000 = vsub.f32 %v1986, %v1998
        %v2001 = vsub.f32 %v1987, %v1999
        %v2002 = vmul.f32 %v2000, %v2000
        %v2003 = vmul.f32 %v2001, %v2001
        %v2004 = vsel %vm1990, %v2002, 0.0
        %2005 = vadd.xlane.f32.xlu0 %v2004
        %v2006 = vpop.xlane.xlu0 %2005
        %v2007 = vsel %vm1990, %v2003, 0.0
        %2008 = vadd.xlane.f32.xlu0 %v2007
        %v2009 = vpop.xlane.xlu0 %2008
        %v2010 = vmul.f32 %v2006, %v1997
        %v2011 = vmul.f32 %v2009, %v1997
        %v2012 = vadd.f32 %v2010, 1e-05
        %v2013 = vadd.f32 %v2011, 1e-05
        %v2014 = vrsqrt.pop %v2012
        %v2015 = vrsqrt.pop %v2013
        %v2016 = vmul.f32 %v2000, %v2014
        %v2017 = vmul.f32 %v2001, %v2015
        %v2019 = vlaneseq
        %v2020 = vshrl.u32 %v2019, 7
        %v2021 = vsub.s32 0, %v2020
        %v2022 = vrot.slane %v1988, %v2021
        %v2024 = vmul.f32 %v2016, %v2022
        %v2025 = vmul.f32 %v2017, %v2022
        %v2027 = vlaneseq
        %v2028 = vshrl.u32 %v2027, 7
        %v2029 = vsub.s32 0, %v2028
        %v2030 = vrot.slane %v1989, %v2029
        %v2032 = vadd.f32 %v2024, %v2030
        %v2033 = vadd.f32 %v2025, %v2030
        %v2034 = vld [vmem:[%s13] sm:$0xff]
        %v2035 = vld [vmem:[%s13 + $0x8] sm:$0xff]
        %v2036 = vld [vmem:[%s13 + $0x10] sm:$0xff]
        %v2037 = vld [vmem:[%s13 + $0x18] sm:$0xff]
        %v2038 = vld [vmem:[%s14] sm:$0x1]
        %v2040 = vlaneseq
        %v2041 = vshrl.u32 %v2040, 7
        %v2042 = vsub.s32 0, %v2041
        %v2043 = vrot.slane %v2038, %v2042
        %v2046 = vsel %vm753, %v1984, 0
        %v2049 = vsel %vm753, %v1985, 0
        %2051 = vmatprep.subr.mxu0 0.0
        %2052 = vmatpush1.msra.mxu0 %v2034
        %2053 = vmatprep.subr.mxu0 0.0
        %2054 = vmatpush1.msra.mxu0 %v2035
        %2055 = vmatprep.subr.mxu0 0.0
        %2056 = vmatpush1.msra.mxu0 %v2036
        %2057 = vmatprep.subr.mxu0 0.0
        %2058 = vmatpush1.msra.mxu0 %v2037
        %2059 = vmatprep.subr.mxu0 0.0
        %2060 = vmatpush1.msra.mxu0 0.0
        %2061 = vmatprep.subr.mxu0 0.0
        %2062 = vmatpush1.msra.mxu0 0.0
        %2063 = vmatprep.subr.mxu0 0.0
        %2064 = vmatpush1.msra.mxu0 0.0
        %2065 = vmatprep.subr.mxu0 0.0
        %2066 = vmatpush1.msra.mxu0 0.0
        %2067 = vmatprep.subr.mxu0 0.0
        %2068 = vmatpush1.msra.mxu0 0.0
        %2069 = vmatprep.subr.mxu0 0.0
        %2070 = vmatpush1.msra.mxu0 0.0
        %2071 = vmatprep.subr.mxu0 0.0
        %2072 = vmatpush1.msra.mxu0 0.0
        %2073 = vmatprep.subr.mxu0 0.0
        %2074 = vmatpush1.msra.mxu0 0.0
        %2075 = vmatprep.subr.mxu0 0.0
        %2076 = vmatpush1.msra.mxu0 0.0
        %2077 = vmatprep.subr.mxu0 0.0
        %2078 = vmatpush1.msra.mxu0 0.0
        %2079 = vmatprep.subr.mxu0 0.0
        %2080 = vmatpush1.msra.mxu0 0.0
        %2081 = vmatprep.subr.mxu0 0.0
        %2082 = vmatpush1.msra.mxu0 0.0
        %2083 = vmatprep.subr.mxu0 0.0
        %2084 = vmatpush1.msra.mxu0 0.0
        %2085 = vmatprep.subr.mxu0 0.0
        %2086 = vmatpush1.msra.mxu0 0.0
        %2087 = vmatprep.subr.mxu0 0.0
        %2088 = vmatpush1.msra.mxu0 0.0
        %2089 = vmatprep.subr.mxu0 0.0
        %2090 = vmatpush1.msra.mxu0 0.0
        %2091 = vmatprep.subr.mxu0 0.0
        %2092 = vmatpush1.msra.mxu0 0.0
        %2093 = vmatprep.subr.mxu0 0.0
        %2094 = vmatpush1.msra.mxu0 0.0
        %2095 = vmatprep.subr.mxu0 0.0
        %2096 = vmatpush1.msra.mxu0 0.0
        %2097 = vmatprep.subr.mxu0 0.0
        %2098 = vmatpush1.msra.mxu0 0.0
        %2099 = vmatprep.subr.mxu0 0.0
        %2100 = vmatpush1.msra.mxu0 0.0
        %2101 = vmatprep.subr.mxu0 0.0
        %2102 = vmatpush1.msra.mxu0 0.0
        %2103 = vmatprep.subr.mxu0 0.0
        %2104 = vmatpush1.msra.mxu0 0.0
        %2105 = vmatprep.subr.mxu0 0.0
        %2106 = vmatpush1.msra.mxu0 0.0
        %2107 = vmatprep.subr.mxu0 0.0
        %2108 = vmatpush1.msra.mxu0 0.0
        %2109 = vmatprep.subr.mxu0 0.0
        %2110 = vmatpush1.msra.mxu0 0.0
        %2111 = vmatprep.subr.mxu0 0.0
        %2112 = vmatpush1.msra.mxu0 0.0
        %2113 = vmatprep.subr.mxu0 0.0
        %2114 = vmatpush1.msra.mxu0 0.0
        %2115 = vmatprep.mubr.f32.mxu0 0.0
        %2116 = vmatmul.mubr.f32.gmra.mrb[0].mxu0 %v2046
        %v2117 = vpop.f32.mrb[0].mxu0
        %v2118 = vadd.f32 %v2043, %v2117
        %v2119 = vpop.f32.mrb[0].mxu0
        %2120 = vmatprep.mubr.f32.mxu0 0.0
        %2121 = vmatmul.mubr.f32.gmra.mrb[0].mxu0 %v2049
        %v2122 = vpop.f32.mrb[0].mxu0
        %v2123 = vadd.f32 %v2043, %v2122
        %v2124 = vpop.f32.mrb[0].mxu0
        %2125 = vdwg.mxu0
        %2126 = vst.msk [vmem:[#allocation3] sm:$0xff] %vm753, %v2118
        %2127 = vst.msk [vmem:[#allocation3 + $0x8] sm:$0xff] %vm753, %v2123
        %v2128 = vld [vmem:[%s15] sm:$0xff]
        %v2129 = vld [vmem:[%s15 + $0x8] sm:$0xff]
        %v2130 = vld [vmem:[%s16] sm:$0x1]
        %v2132 = vlaneseq
        %v2133 = vshrl.u32 %v2132, 7
        %v2134 = vsub.s32 0, %v2133
        %v2135 = vrot.slane %v2130, %v2134
        %v2138 = vsel %vm1990, %v2032, 0
        %v2141 = vsel %vm1990, %v2033, 0
        %2143 = vmatprep.subr.mxu0 0.0
        %2144 = vmatpush1.msra.mxu0 %v2128
        %2145 = vmatprep.subr.mxu0 0.0
        %2146 = vmatpush1.msra.mxu0 %v2129
        %2147 = vmatprep.subr.mxu0 0.0
        %2148 = vmatpush1.msra.mxu0 0.0
        %2149 = vmatprep.subr.mxu0 0.0
        %2150 = vmatpush1.msra.mxu0 0.0
        %2151 = vmatprep.subr.mxu0 0.0
        %2152 = vmatpush1.msra.mxu0 0.0
        %2153 = vmatprep.subr.mxu0 0.0
        %2154 = vmatpush1.msra.mxu0 0.0
        %2155 = vmatprep.subr.mxu0 0.0
        %2156 = vmatpush1.msra.mxu0 0.0
        %2157 = vmatprep.subr.mxu0 0.0
        %2158 = vmatpush1.msra.mxu0 0.0
        %2159 = vmatprep.subr.mxu0 0.0
        %2160 = vmatpush1.msra.mxu0 0.0
        %2161 = vmatprep.subr.mxu0 0.0
        %2162 = vmatpush1.msra.mxu0 0.0
        %2163 = vmatprep.subr.mxu0 0.0
        %2164 = vmatpush1.msra.mxu0 0.0
        %2165 = vmatprep.subr.mxu0 0.0
        %2166 = vmatpush1.msra.mxu0 0.0
        %2167 = vmatprep.subr.mxu0 0.0
        %2168 = vmatpush1.msra.mxu0 0.0
        %2169 = vmatprep.subr.mxu0 0.0
        %2170 = vmatpush1.msra.mxu0 0.0
        %2171 = vmatprep.subr.mxu0 0.0
        %2172 = vmatpush1.msra.mxu0 0.0
        %2173 = vmatprep.subr.mxu0 0.0
        %2174 = vmatpush1.msra.mxu0 0.0
        %2175 = vmatprep.subr.mxu0 0.0
        %2176 = vmatpush1.msra.mxu0 0.0
        %2177 = vmatprep.subr.mxu0 0.0
        %2178 = vmatpush1.msra.mxu0 0.0
        %2179 = vmatprep.subr.mxu0 0.0
        %2180 = vmatpush1.msra.mxu0 0.0
        %2181 = vmatprep.subr.mxu0 0.0
        %2182 = vmatpush1.msra.mxu0 0.0
        %2183 = vmatprep.subr.mxu0 0.0
        %2184 = vmatpush1.msra.mxu0 0.0
        %2185 = vmatprep.subr.mxu0 0.0
        %2186 = vmatpush1.msra.mxu0 0.0
        %2187 = vmatprep.subr.mxu0 0.0
        %2188 = vmatpush1.msra.mxu0 0.0
        %2189 = vmatprep.subr.mxu0 0.0
        %2190 = vmatpush1.msra.mxu0 0.0
        %2191 = vmatprep.subr.mxu0 0.0
        %2192 = vmatpush1.msra.mxu0 0.0
        %2193 = vmatprep.subr.mxu0 0.0
        %2194 = vmatpush1.msra.mxu0 0.0
        %2195 = vmatprep.subr.mxu0 0.0
        %2196 = vmatpush1.msra.mxu0 0.0
        %2197 = vmatprep.subr.mxu0 0.0
        %2198 = vmatpush1.msra.mxu0 0.0
        %2199 = vmatprep.subr.mxu0 0.0
        %2200 = vmatpush1.msra.mxu0 0.0
        %2201 = vmatprep.subr.mxu0 0.0
        %2202 = vmatpush1.msra.mxu0 0.0
        %2203 = vmatprep.subr.mxu0 0.0
        %2204 = vmatpush1.msra.mxu0 0.0
        %2205 = vmatprep.subr.mxu0 0.0
        %2206 = vmatpush1.msra.mxu0 0.0
        %2207 = vmatprep.mubr.f32.mxu0 0.0
        %2208 = vmatmul.mubr.f32.gmra.mrb[0].mxu0 %v2138
        %v2209 = vpop.f32.mrb[0].mxu0
        %v2210 = vadd.f32 %v2135, %v2209
        %v2211 = vpop.f32.mrb[0].mxu0
        %2212 = vmatprep.mubr.f32.mxu0 0.0
        %2213 = vmatmul.mubr.f32.gmra.mrb[0].mxu0 %v2141
        %v2214 = vpop.f32.mrb[0].mxu0
        %v2215 = vadd.f32 %v2135, %v2214
        %v2216 = vpop.f32.mrb[0].mxu0
        %2217 = vdwg.mxu0
        %2218 = vst.msk [vmem:[#allocation4] sm:$0xff] %vm753, %v2210
        %2219 = vst.msk [vmem:[#allocation4 + $0x8] sm:$0xff] %vm753, %v2215
        %v2220 = vld [vmem:[%s17] sm:$0xff]
        %v2221 = vld [vmem:[%s17 + $0x8] sm:$0xff]
        %v2222 = vld [vmem:[%s18] sm:$0x1]
        %v2224 = vlaneseq
        %v2225 = vshrl.u32 %v2224, 7
        %v2226 = vsub.s32 0, %v2225
        %v2227 = vrot.slane %v2222, %v2226
        %2229 = vmatprep.subr.mxu0 0.0
        %2230 = vmatpush1.msra.mxu0 %v2220
        %2231 = vmatprep.subr.mxu0 0.0
        %2232 = vmatpush1.msra.mxu0 %v2221
        %2233 = vmatprep.subr.mxu0 0.0
        %2234 = vmatpush1.msra.mxu0 0.0
        %2235 = vmatprep.subr.mxu0 0.0
        %2236 = vmatpush1.msra.mxu0 0.0
        %2237 = vmatprep.subr.mxu0 0.0
        %2238 = vmatpush1.msra.mxu0 0.0
        %2239 = vmatprep.subr.mxu0 0.0
        %2240 = vmatpush1.msra.mxu0 0.0
        %2241 = vmatprep.subr.mxu0 0.0
        %2242 = vmatpush1.msra.mxu0 0.0
        %2243 = vmatprep.subr.mxu0 0.0
        %2244 = vmatpush1.msra.mxu0 0.0
        %2245 = vmatprep.subr.mxu0 0.0
        %2246 = vmatpush1.msra.mxu0 0.0
        %2247 = vmatprep.subr.mxu0 0.0
        %2248 = vmatpush1.msra.mxu0 0.0
        %2249 = vmatprep.subr.mxu0 0.0
        %2250 = vmatpush1.msra.mxu0 0.0
        %2251 = vmatprep.subr.mxu0 0.0
        %2252 = vmatpush1.msra.mxu0 0.0
        %2253 = vmatprep.subr.mxu0 0.0
        %2254 = vmatpush1.msra.mxu0 0.0
        %2255 = vmatprep.subr.mxu0 0.0
        %2256 = vmatpush1.msra.mxu0 0.0
        %2257 = vmatprep.subr.mxu0 0.0
        %2258 = vmatpush1.msra.mxu0 0.0
        %2259 = vmatprep.subr.mxu0 0.0
        %2260 = vmatpush1.msra.mxu0 0.0
        %2261 = vmatprep.subr.mxu0 0.0
        %2262 = vmatpush1.msra.mxu0 0.0
        %2263 = vmatprep.subr.mxu0 0.0
        %2264 = vmatpush1.msra.mxu0 0.0
        %2265 = vmatprep.subr.mxu0 0.0
        %2266 = vmatpush1.msra.mxu0 0.0
        %2267 = vmatprep.subr.mxu0 0.0
        %2268 = vmatpush1.msra.mxu0 0.0
        %2269 = vmatprep.subr.mxu0 0.0
        %2270 = vmatpush1.msra.mxu0 0.0
        %2271 = vmatprep.subr.mxu0 0.0
        %2272 = vmatpush1.msra.mxu0 0.0
        %2273 = vmatprep.subr.mxu0 0.0
        %2274 = vmatpush1.msra.mxu0 0.0
        %2275 = vmatprep.subr.mxu0 0.0
        %2276 = vmatpush1.msra.mxu0 0.0
        %2277 = vmatprep.subr.mxu0 0.0
        %2278 = vmatpush1.msra.mxu0 0.0
        %2279 = vmatprep.subr.mxu0 0.0
        %2280 = vmatpush1.msra.mxu0 0.0
        %2281 = vmatprep.subr.mxu0 0.0
        %2282 = vmatpush1.msra.mxu0 0.0
        %2283 = vmatprep.subr.mxu0 0.0
        %2284 = vmatpush1.msra.mxu0 0.0
        %2285 = vmatprep.subr.mxu0 0.0
        %2286 = vmatpush1.msra.mxu0 0.0
        %2287 = vmatprep.subr.mxu0 0.0
        %2288 = vmatpush1.msra.mxu0 0.0
        %2289 = vmatprep.subr.mxu0 0.0
        %2290 = vmatpush1.msra.mxu0 0.0
        %2291 = vmatprep.subr.mxu0 0.0
        %2292 = vmatpush1.msra.mxu0 0.0
        %2293 = vmatprep.mubr.f32.mxu0 0.0
        %2294 = vmatmul.mubr.f32.gmra.mrb[0].mxu0 %v2138
        %v2295 = vpop.f32.mrb[0].mxu0
        %v2296 = vadd.f32 %v2227, %v2295
        %v2297 = vpop.f32.mrb[0].mxu0
        %2298 = vmatprep.mubr.f32.mxu0 0.0
        %2299 = vmatmul.mubr.f32.gmra.mrb[0].mxu0 %v2141
        %v2300 = vpop.f32.mrb[0].mxu0
        %v2301 = vadd.f32 %v2227, %v2300
        %v2302 = vpop.f32.mrb[0].mxu0
        %2303 = vdwg.mxu0
        %2304 = vst.msk [vmem:[#allocation5] sm:$0xff] %vm753, %v2296
        %2305 = vst.msk [vmem:[#allocation5 + $0x8] sm:$0xff] %vm753, %v2301
        %v2306 = vld [vmem:[#allocation4] sm:$0xff]
        %v2307 = vld [vmem:[#allocation4 + $0x8] sm:$0xff]
        %v2308 = vld [vmem:[#allocation3] sm:$0xff]
        %v2309 = vld [vmem:[#allocation3 + $0x8] sm:$0xff]
        %2310 = vxpose.xlu0.b32.start [1/16] %v2306, 128
        %2311 = vxpose.xlu0.b32.cont [2/16] %v2307, 128
        %2312 = vxpose.xlu0.b32.cont [3/16] 0.0, 128
        %2313 = vxpose.xlu0.b32.cont [4/16] 0.0, 128
        %2314 = vxpose.xlu0.b32.cont [5/16] 0.0, 128
        %2315 = vxpose.xlu0.b32.cont [6/16] 0.0, 128
        %2316 = vxpose.xlu0.b32.cont [7/16] 0.0, 128
        %2317 = vxpose.xlu0.b32.cont [8/16] 0.0, 128
        %2318 = vxpose.xlu0.b32.cont [9/16] 0.0, 128
        %2319 = vxpose.xlu0.b32.cont [10/16] 0.0, 128
        %2320 = vxpose.xlu0.b32.cont [11/16] 0.0, 128
        %2321 = vxpose.xlu0.b32.cont [12/16] 0.0, 128
        %2322 = vxpose.xlu0.b32.cont [13/16] 0.0, 128
        %2323 = vxpose.xlu0.b32.cont [14/16] 0.0, 128
        %2324 = vxpose.xlu0.b32.cont [15/16] 0.0, 128
        %2325 = vxpose.xlu0.b32.end [16/16] 0.0, 128
        %v2326 = vpop.trf.xlu0
        %v2327 = vpop.trf.xlu0
        %v2328 = vpop.trf.xlu0
        %v2329 = vpop.trf.xlu0
        %v2330 = vpop.trf.xlu0
        %v2331 = vpop.trf.xlu0
        %v2332 = vpop.trf.xlu0
        %v2333 = vpop.trf.xlu0
        %v2334 = vpop.trf.xlu0
        %v2335 = vpop.trf.xlu0
        %v2336 = vpop.trf.xlu0
        %v2337 = vpop.trf.xlu0
        %v2338 = vpop.trf.xlu0
        %v2339 = vpop.trf.xlu0
        %v2340 = vpop.trf.xlu0
        %v2341 = vpop.trf.xlu0
        %v2343 = vsel %vm1990, %v2326, 0
        %v2346 = vsel %vm1990, %v2327, 0
        %v2349 = vsel %vm1990, %v2328, 0
        %v2352 = vsel %vm1990, %v2329, 0
        %2354 = vmatprep.subr.mxu0 0.0
        %2355 = vmatpush1.msra.mxu0 %v2308
        %2356 = vmatprep.subr.mxu0 0.0
        %2357 = vmatpush1.msra.mxu0 %v2309
        %2358 = vmatprep.subr.mxu0 0.0
        %2359 = vmatpush1.msra.mxu0 0.0
        %2360 = vmatprep.subr.mxu0 0.0
        %2361 = vmatpush1.msra.mxu0 0.0
        %2362 = vmatprep.subr.mxu0 0.0
        %2363 = vmatpush1.msra.mxu0 0.0
        %2364 = vmatprep.subr.mxu0 0.0
        %2365 = vmatpush1.msra.mxu0 0.0
        %2366 = vmatprep.subr.mxu0 0.0
        %2367 = vmatpush1.msra.mxu0 0.0
        %2368 = vmatprep.subr.mxu0 0.0
        %2369 = vmatpush1.msra.mxu0 0.0
        %2370 = vmatprep.subr.mxu0 0.0
        %2371 = vmatpush1.msra.mxu0 0.0
        %2372 = vmatprep.subr.mxu0 0.0
        %2373 = vmatpush1.msra.mxu0 0.0
        %2374 = vmatprep.subr.mxu0 0.0
        %2375 = vmatpush1.msra.mxu0 0.0
        %2376 = vmatprep.subr.mxu0 0.0
        %2377 = vmatpush1.msra.mxu0 0.0
        %2378 = vmatprep.subr.mxu0 0.0
        %2379 = vmatpush1.msra.mxu0 0.0
        %2380 = vmatprep.subr.mxu0 0.0
        %2381 = vmatpush1.msra.mxu0 0.0
        %2382 = vmatprep.subr.mxu0 0.0
        %2383 = vmatpush1.msra.mxu0 0.0
        %2384 = vmatprep.subr.mxu0 0.0
        %2385 = vmatpush1.msra.mxu0 0.0
        %2386 = vmatprep.subr.mxu0 0.0
        %2387 = vmatpush1.msra.mxu0 0.0
        %2388 = vmatprep.subr.mxu0 0.0
        %2389 = vmatpush1.msra.mxu0 0.0
        %2390 = vmatprep.subr.mxu0 0.0
        %2391 = vmatpush1.msra.mxu0 0.0
        %2392 = vmatprep.subr.mxu0 0.0
        %2393 = vmatpush1.msra.mxu0 0.0
        %2394 = vmatprep.subr.mxu0 0.0
        %2395 = vmatpush1.msra.mxu0 0.0
        %2396 = vmatprep.subr.mxu0 0.0
        %2397 = vmatpush1.msra.mxu0 0.0
        %2398 = vmatprep.subr.mxu0 0.0
        %2399 = vmatpush1.msra.mxu0 0.0
        %2400 = vmatprep.subr.mxu0 0.0
        %2401 = vmatpush1.msra.mxu0 0.0
        %2402 = vmatprep.subr.mxu0 0.0
        %2403 = vmatpush1.msra.mxu0 0.0
        %2404 = vmatprep.subr.mxu0 0.0
        %2405 = vmatpush1.msra.mxu0 0.0
        %2406 = vmatprep.subr.mxu0 0.0
        %2407 = vmatpush1.msra.mxu0 0.0
        %2408 = vmatprep.subr.mxu0 0.0
        %2409 = vmatpush1.msra.mxu0 0.0
        %2410 = vmatprep.subr.mxu0 0.0
        %2411 = vmatpush1.msra.mxu0 0.0
        %2412 = vmatprep.subr.mxu0 0.0
        %2413 = vmatpush1.msra.mxu0 0.0
        %2414 = vmatprep.subr.mxu0 0.0
        %2415 = vmatpush1.msra.mxu0 0.0
        %2416 = vmatprep.subr.mxu0 0.0
        %2417 = vmatpush1.msra.mxu0 0.0
        %2418 = vmatprep.mubr.f32.mxu0 0.0
        %2419 = vmatmul.mubr.f32.gmra.mrb[0].mxu0 %v2343
        %v2420 = vpop.f32.mrb[0].mxu0
        %v2421 = vadd.f32 0.0, %v2420
        %v2422 = vpop.f32.mrb[0].mxu0
        %2423 = vmatprep.mubr.f32.mxu0 0.0
        %2424 = vmatmul.mubr.f32.gmra.mrb[0].mxu0 %v2346
        %v2425 = vpop.f32.mrb[0].mxu0
        %v2426 = vadd.f32 0.0, %v2425
        %v2427 = vpop.f32.mrb[0].mxu0
        %2428 = vmatprep.mubr.f32.mxu0 0.0
        %2429 = vmatmul.mubr.f32.gmra.mrb[0].mxu0 %v2349
        %v2430 = vpop.f32.mrb[0].mxu0
        %v2431 = vadd.f32 0.0, %v2430
        %v2432 = vpop.f32.mrb[0].mxu0
        %2433 = vmatprep.mubr.f32.mxu0 0.0
        %2434 = vmatmul.mubr.f32.gmra.mrb[0].mxu0 %v2352
        %v2435 = vpop.f32.mrb[0].mxu0
        %v2436 = vadd.f32 0.0, %v2435
        %v2437 = vpop.f32.mrb[0].mxu0
        %2438 = vdwg.mxu0
        %v2439 = vsel %vm753, %v2421, -inf
        %v2440 = vsel %vm753, %v2426, -inf
        %v2441 = vsel %vm753, %v2431, -inf
        %v2442 = vsel %vm753, %v2436, -inf
        %v2443 = vmax.f32 %v2439, %v2440
        %v2444 = vmax.f32 %v2441, %v2442
        %v2445 = vmax.f32 %v2443, %v2444
        %v2446 = vrot.slane %v2445, 4
        %v2447 = vmax.f32 %v2445, %v2446
        %v2448 = vrot.slane %v2447, 2
        %v2449 = vmax.f32 %v2447, %v2448
        %v2450 = vrot.slane %v2449, 1
        %v2451 = vmax.f32 %v2449, %v2450
        %v2452 = vsub.f32 %v2421, %v2451
        %v2453 = vsub.f32 %v2426, %v2451
        %v2454 = vsub.f32 %v2431, %v2451
        %v2455 = vsub.f32 %v2436, %v2451
        %v2456 = vmul.f32 %v2452, 1.442695
        %v2457 = vpow.pop %v2456
        %v2458 = vmul.f32 %v2453, 1.442695
        %v2459 = vpow.pop %v2458
        %v2460 = vmul.f32 %v2454, 1.442695
        %v2461 = vpow.pop %v2460
        %v2462 = vmul.f32 %v2455, 1.442695
        %v2463 = vpow.pop %v2462
        %v2464 = vsel %vm753, %v2457, 0.0
        %v2465 = vsel %vm753, %v2459, 0.0
        %v2466 = vadd.f32 %v2464, %v2465
        %v2467 = vsel %vm753, %v2461, 0.0
        %v2468 = vadd.f32 %v2466, %v2467
        %v2469 = vsel %vm753, %v2463, 0.0
        %v2470 = vadd.f32 %v2468, %v2469
        %v2471 = vrot.slane %v2470, 4
        %v2472 = vadd.f32 %v2470, %v2471
        %v2473 = vrot.slane %v2472, 2
        %v2474 = vadd.f32 %v2472, %v2473
        %v2475 = vrot.slane %v2474, 1
        %v2476 = vadd.f32 %v2474, %v2475
        %v2477 = vrcp.pop %v2476
        %v2478 = vmul.f32 %v2457, %v2477
        %v2479 = vmul.f32 %v2459, %v2477
        %v2480 = vmul.f32 %v2461, %v2477
        %v2481 = vmul.f32 %v2463, %v2477
        %2482 = vst.msk [vmem:[%s720] sm:$0xff] %vm753, %v2478
        %2483 = vst.msk [vmem:[%s720 + $0x8] sm:$0xff] %vm753, %v2479
        %2484 = vst.msk [vmem:[%s720 + $0x10] sm:$0xff] %vm753, %v2480
        %2485 = vst.msk [vmem:[%s720 + $0x18] sm:$0xff] %vm753, %v2481
        %v2486 = vld [vmem:[#allocation5] sm:$0xff]
        %v2487 = vld [vmem:[#allocation5 + $0x8] sm:$0xff]
        %v2489 = vsel %vm753, %v2486, 0
        %v2492 = vsel %vm753, %v2487, 0
        %2494 = vmatprep.subr.mxu0 0.0
        %2495 = vmatpush1.msra.mxu0 %v2478
        %2496 = vmatprep.subr.mxu0 0.0
        %2497 = vmatpush1.msra.mxu0 %v2479
        %2498 = vmatprep.subr.mxu0 0.0
        %2499 = vmatpush1.msra.mxu0 %v2480
        %2500 = vmatprep.subr.mxu0 0.0
        %2501 = vmatpush1.msra.mxu0 %v2481
        %2502 = vmatprep.subr.mxu0 0.0
        %2503 = vmatpush1.msra.mxu0 0.0
        %2504 = vmatprep.subr.mxu0 0.0
        %2505 = vmatpush1.msra.mxu0 0.0
        %2506 = vmatprep.subr.mxu0 0.0
        %2507 = vmatpush1.msra.mxu0 0.0
        %2508 = vmatprep.subr.mxu0 0.0
        %2509 = vmatpush1.msra.mxu0 0.0
        %2510 = vmatprep.subr.mxu0 0.0
        %2511 = vmatpush1.msra.mxu0 0.0
        %2512 = vmatprep.subr.mxu0 0.0
        %2513 = vmatpush1.msra.mxu0 0.0
        %2514 = vmatprep.subr.mxu0 0.0
        %2515 = vmatpush1.msra.mxu0 0.0
        %2516 = vmatprep.subr.mxu0 0.0
        %2517 = vmatpush1.msra.mxu0 0.0
        %2518 = vmatprep.subr.mxu0 0.0
        %2519 = vmatpush1.msra.mxu0 0.0
        %2520 = vmatprep.subr.mxu0 0.0
        %2521 = vmatpush1.msra.mxu0 0.0
        %2522 = vmatprep.subr.mxu0 0.0
        %2523 = vmatpush1.msra.mxu0 0.0
        %2524 = vmatprep.subr.mxu0 0.0
        %2525 = vmatpush1.msra.mxu0 0.0
        %2526 = vmatprep.subr.mxu0 0.0
        %2527 = vmatpush1.msra.mxu0 0.0
        %2528 = vmatprep.subr.mxu0 0.0
        %2529 = vmatpush1.msra.mxu0 0.0
        %2530 = vmatprep.subr.mxu0 0.0
        %2531 = vmatpush1.msra.mxu0 0.0
        %2532 = vmatprep.subr.mxu0 0.0
        %2533 = vmatpush1.msra.mxu0 0.0
        %2534 = vmatprep.subr.mxu0 0.0
        %2535 = vmatpush1.msra.mxu0 0.0
        %2536 = vmatprep.subr.mxu0 0.0
        %2537 = vmatpush1.msra.mxu0 0.0
        %2538 = vmatprep.subr.mxu0 0.0
        %2539 = vmatpush1.msra.mxu0 0.0
        %2540 = vmatprep.subr.mxu0 0.0
        %2541 = vmatpush1.msra.mxu0 0.0
        %2542 = vmatprep.subr.mxu0 0.0
        %2543 = vmatpush1.msra.mxu0 0.0
        %2544 = vmatprep.subr.mxu0 0.0
        %2545 = vmatpush1.msra.mxu0 0.0
        %2546 = vmatprep.subr.mxu0 0.0
        %2547 = vmatpush1.msra.mxu0 0.0
        %2548 = vmatprep.subr.mxu0 0.0
        %2549 = vmatpush1.msra.mxu0 0.0
        %2550 = vmatprep.subr.mxu0 0.0
        %2551 = vmatpush1.msra.mxu0 0.0
        %2552 = vmatprep.subr.mxu0 0.0
        %2553 = vmatpush1.msra.mxu0 0.0
        %2554 = vmatprep.subr.mxu0 0.0
        %2555 = vmatpush1.msra.mxu0 0.0
        %2556 = vmatprep.subr.mxu0 0.0
        %2557 = vmatpush1.msra.mxu0 0.0
        %2558 = vmatprep.mubr.f32.mxu0 0.0
        %2559 = vmatmul.mubr.f32.gmra.mrb[0].mxu0 %v2489
        %v2560 = vpop.f32.mrb[0].mxu0
        %v2561 = vadd.f32 0.0, %v2560
        %v2562 = vpop.f32.mrb[0].mxu0
        %2563 = vmatprep.mubr.f32.mxu0 0.0
        %2564 = vmatmul.mubr.f32.gmra.mrb[0].mxu0 %v2492
        %v2565 = vpop.f32.mrb[0].mxu0
        %v2566 = vadd.f32 0.0, %v2565
        %v2567 = vpop.f32.mrb[0].mxu0
        %2568 = vdwg.mxu0
        %2569 = vst.msk [vmem:[#allocation6] sm:$0xff] %vm753, %v2561
        %2570 = vst.msk [vmem:[#allocation6 + $0x8] sm:$0xff] %vm753, %v2566
        %v2571 = vld [vmem:[#allocation6] sm:$0xff]
        %v2572 = vld [vmem:[#allocation6 + $0x8] sm:$0xff]
        %v2573 = vld [vmem:[%s19] sm:$0xff]
        %v2574 = vld [vmem:[%s19 + $0x8] sm:$0xff]
        %v2575 = vld [vmem:[%s19 + $0x10] sm:$0xff]
        %v2576 = vld [vmem:[%s19 + $0x18] sm:$0xff]
        %v2577 = vld [vmem:[%s20] sm:$0x1]
        %v2579 = vlaneseq
        %v2580 = vshrl.u32 %v2579, 7
        %v2581 = vsub.s32 0, %v2580
        %v2582 = vrot.slane %v2577, %v2581
        %v2585 = vsel %vm753, %v2571, 0
        %v2588 = vsel %vm753, %v2572, 0
        %2590 = vmatprep.subr.mxu0 0.0
        %2591 = vmatpush1.msra.mxu0 %v2573
        %2592 = vmatprep.subr.mxu0 0.0
        %2593 = vmatpush1.msra.mxu0 %v2574
        %2594 = vmatprep.subr.mxu0 0.0
        %2595 = vmatpush1.msra.mxu0 %v2575
        %2596 = vmatprep.subr.mxu0 0.0
        %2597 = vmatpush1.msra.mxu0 %v2576
        %2598 = vmatprep.subr.mxu0 0.0
        %2599 = vmatpush1.msra.mxu0 0.0
        %2600 = vmatprep.subr.mxu0 0.0
        %2601 = vmatpush1.msra.mxu0 0.0
        %2602 = vmatprep.subr.mxu0 0.0
        %2603 = vmatpush1.msra.mxu0 0.0
        %2604 = vmatprep.subr.mxu0 0.0
        %2605 = vmatpush1.msra.mxu0 0.0
        %2606 = vmatprep.subr.mxu0 0.0
        %2607 = vmatpush1.msra.mxu0 0.0
        %2608 = vmatprep.subr.mxu0 0.0
        %2609 = vmatpush1.msra.mxu0 0.0
        %2610 = vmatprep.subr.mxu0 0.0
        %2611 = vmatpush1.msra.mxu0 0.0
        %2612 = vmatprep.subr.mxu0 0.0
        %2613 = vmatpush1.msra.mxu0 0.0
        %2614 = vmatprep.subr.mxu0 0.0
        %2615 = vmatpush1.msra.mxu0 0.0
        %2616 = vmatprep.subr.mxu0 0.0
        %2617 = vmatpush1.msra.mxu0 0.0
        %2618 = vmatprep.subr.mxu0 0.0
        %2619 = vmatpush1.msra.mxu0 0.0
        %2620 = vmatprep.subr.mxu0 0.0
        %2621 = vmatpush1.msra.mxu0 0.0
        %2622 = vmatprep.subr.mxu0 0.0
        %2623 = vmatpush1.msra.mxu0 0.0
        %2624 = vmatprep.subr.mxu0 0.0
        %2625 = vmatpush1.msra.mxu0 0.0
        %2626 = vmatprep.subr.mxu0 0.0
        %2627 = vmatpush1.msra.mxu0 0.0
        %2628 = vmatprep.subr.mxu0 0.0
        %2629 = vmatpush1.msra.mxu0 0.0
        %2630 = vmatprep.subr.mxu0 0.0
        %2631 = vmatpush1.msra.mxu0 0.0
        %2632 = vmatprep.subr.mxu0 0.0
        %2633 = vmatpush1.msra.mxu0 0.0
        %2634 = vmatprep.subr.mxu0 0.0
        %2635 = vmatpush1.msra.mxu0 0.0
        %2636 = vmatprep.subr.mxu0 0.0
        %2637 = vmatpush1.msra.mxu0 0.0
        %2638 = vmatprep.subr.mxu0 0.0
        %2639 = vmatpush1.msra.mxu0 0.0
        %2640 = vmatprep.subr.mxu0 0.0
        %2641 = vmatpush1.msra.mxu0 0.0
        %2642 = vmatprep.subr.mxu0 0.0
        %2643 = vmatpush1.msra.mxu0 0.0
        %2644 = vmatprep.subr.mxu0 0.0
        %2645 = vmatpush1.msra.mxu0 0.0
        %2646 = vmatprep.subr.mxu0 0.0
        %2647 = vmatpush1.msra.mxu0 0.0
        %2648 = vmatprep.subr.mxu0 0.0
        %2649 = vmatpush1.msra.mxu0 0.0
        %2650 = vmatprep.subr.mxu0 0.0
        %2651 = vmatpush1.msra.mxu0 0.0
        %2652 = vmatprep.subr.mxu0 0.0
        %2653 = vmatpush1.msra.mxu0 0.0
        %2654 = vmatprep.mubr.f32.mxu0 0.0
        %2655 = vmatmul.mubr.f32.gmra.mrb[0].mxu0 %v2585
        %v2656 = vpop.f32.mrb[0].mxu0
        %v2657 = vadd.f32 %v2582, %v2656
        %v2658 = vpop.f32.mrb[0].mxu0
        %2659 = vmatprep.mubr.f32.mxu0 0.0
        %2660 = vmatmul.mubr.f32.gmra.mrb[0].mxu0 %v2588
        %v2661 = vpop.f32.mrb[0].mxu0
        %v2662 = vadd.f32 %v2582, %v2661
        %v2663 = vpop.f32.mrb[0].mxu0
        %2664 = vdwg.mxu0
        %v2665 = vld [vmem:[#allocation2 + $0x8] sm:$0xff]
        %v2666 = vld [vmem:[#allocation2 + $0x10] sm:$0xff]
        %v2667 = vadd.f32 %v2657, %v2665
        %v2668 = vadd.f32 %v2662, %v2666
        %2669 = vst.msk [vmem:[%s713] sm:$0xff] %vm753, %v2667
        %2670 = vst.msk [vmem:[%s713 + $0x8] sm:$0xff] %vm753, %v2668
        %s2671 = sand.u32 %s504, 1
        %s2672 = scalar_lea.sflag [#allocation8], %s2671
        %s2673 = sand.u32 %s504, 1
        %s2674 = smul.addr %s2673, 16
        %s2675 = scalar_lea.vmem [#allocation7], %s2674
        %s2676 = sand.u32 %s530, 1
        %s2677 = scalar_lea.sflag [#allocation10], %s2676
        %s2678 = sand.u32 %s530, 1
        %s2679 = smul.addr %s2678, 32
        %s2680 = scalar_lea.vmem [#allocation9], %s2679
        // Predicated region
        $region105: #{lime_layer.1} parent=103 // pred_check
          %p2681 = pneg %p514
        $region106: #{lime_layer.1} parent=103 // pred_check_branch
          %2683 = sbr.rel (%p2681) target = $region108
        $region107: #{lime_layer.1} parent=103 // pred_region
          %s2684 = smul.u32 2, %s40
          %s2686 = ssub.s32 256, 256
          %2687 = vsyncadd %s2672, %s2686
          %s2688 = smul.addr %s2684, 128
          %s2689 = scalar_lea.hbm %s21, %s2688
          %s2690 = sshll.u32 %s2675, 4
          %s2691 = int_to_ptr.vmem [resolvable:$true] %s2690
          %2696 = dma.vmem_to_hbm [thread:$0]  %s2691, 256, %s2689, %s2672, 128, 128, 8
        $region108: #{lime_layer.1} parent=103 // pred_fallthru
          _
        // Predicated region
        $region109: #{lime_layer.1} parent=103 // pred_check
          %p2697 = pneg %p540
        $region110: #{lime_layer.1} parent=103 // pred_check_branch
          %2699 = sbr.rel (%p2697) target = $region112
        $region111: #{lime_layer.1} parent=103 // pred_region
          %s2701 = ssub.s32 512, 512
          %2702 = vsyncadd %s2677, %s2701
          %s2703 = smul.addr %s40, 4
          %s2704 = smul.addr %s2703, 128
          %s2705 = scalar_lea.hbm %s22, %s2704
          %s2706 = sshll.u32 %s2680, 4
          %s2707 = int_to_ptr.vmem [resolvable:$true] %s2706
          %2712 = dma.vmem_to_hbm [thread:$0]  %s2707, 512, %s2705, %s2677, 128, 128, 8
        $region112: #{lime_layer.1} parent=103 // pred_fallthru
          _
      $region104: #{lime_layer.1} parent=5 // pred_fallthru
        _
      %p2713 = scmp.le.s32.totalorder 2, %s35
      // Predicated region
      $region113: #{lime_layer.1} parent=5 // pred_check
        %p2714 = pneg %p2713
      $region114: #{lime_layer.1} parent=5 // pred_check_branch
        %2716 = sbr.rel (%p2714) target = $region116
      $region115: #{lime_layer.1} parent=5 // pred_region
        %s2717 = ssub.s32 %s35, 2
        // Predicated region
        $region117: #{lime_layer.1} parent=115 // pred_check
          %p2718 = pneg %p520
        $region118: #{lime_layer.1} parent=115 // pred_check_branch
          %2720 = sbr.rel (%p2718) target = $region120
        $region119: #{lime_layer.1} parent=115 // pred_region
          %s2721 = sand.u32 %s505, 1
          %s2722 = scalar_lea.sflag [#allocation8], %s2721
          %s2723 = sand.u32 %s505, 1
          %s2724 = smul.addr %s2723, 16
          %s2725 = scalar_lea.vmem [#allocation7], %s2724
          %2726 = dma.done %s2722, 256
        $region120: #{lime_layer.1} parent=115 // pred_fallthru
          _
        // Predicated region
        $region121: #{lime_layer.1} parent=115 // pred_check
          %p2727 = pneg %p546
        $region122: #{lime_layer.1} parent=115 // pred_check_branch
          %2729 = sbr.rel (%p2727) target = $region124
        $region123: #{lime_layer.1} parent=115 // pred_region
          %s2730 = sand.u32 %s531, 1
          %s2731 = scalar_lea.sflag [#allocation10], %s2730
          %s2732 = sand.u32 %s531, 1
          %s2733 = smul.addr %s2732, 32
          %s2734 = scalar_lea.vmem [#allocation9], %s2733
          %2735 = dma.done %s2731, 512
        $region124: #{lime_layer.1} parent=115 // pred_fallthru
          _
      $region116: #{lime_layer.1} parent=5 // pred_fallthru
        _
    $region6: #{lime_layer.1} parent=1 // loop_footer
      %s39 = sadd.s32 1, %s35
    $region7: #{lime_layer.1} parent=1 // loop_footer_branch
      %34 = sbr.rel target = $region3
    $region8: #{lime_layer.1} parent=1 // loop_exit
      _
    %2736 = vsyncpa [#allocation8], 1
    %s2737 = scalar_lea.sflag [#allocation8], 1
    %2738 = vsyncpa %s2737, 1
    %2739 = vsyncpa [#allocation10], 1
    %s2740 = scalar_lea.sflag [#allocation10], 1
    %2741 = vsyncpa %s2740, 1

</llo_original>
